<compile_context>
chip_gen: v7x
topology: tpu7x:2x2x1
jax: 0.10.0
libtpu: 0.0.40
codegen_flags: <defaults>
</compile_context>

<pallas_src>
import jax
import jax.numpy as jnp
from jax import lax
from jax.experimental import pallas as pl
from jax.experimental.pallas import tpu as pltpu


# ----------------------------- Pallas kernel ------------------------------ #

def _fused_lstm_kernel(x_ref, w_ih_ref, w_hh_ref, b_ref, out_ref,
                       seq_ref, gx_ref):
    """All LSTM layers over the full sequence for one batch tile.

    x_ref    : (Bt, T, H)     VMEM   embedded input sequence (batch tile)
    w_ih_ref : (L, H, 4H)     VMEM   transposed PyTorch weight_ih_l{k}
    w_hh_ref : (L, H, 4H)     VMEM   transposed PyTorch weight_hh_l{k}
    b_ref    : (L, 1, 4H)     VMEM   b_ih + b_hh per layer
    out_ref  : (Bt, T, H)     VMEM   last-layer hidden states
    seq_ref  : (Bt, T, H)     VMEM scratch: current layer's input / output seq
    gx_ref   : (Bt, T, 4H)    VMEM scratch: precomputed x-gates of current layer
    """
    Bt, T, _ = x_ref.shape
    L, H, H4 = w_hh_ref.shape

    # Layer 0 input.
    seq_ref[...] = x_ref[...]

    # Lane mask (hoisted): lanes [2H, 3H) hold the 'g' gate -> tanh, rest sigmoid.
    lane = lax.broadcasted_iota(jnp.int32, (Bt, H4), 1)
    is_g = (lane >= 2 * H) & (lane < 3 * H)

    for layer in range(L):                        # static loop over layers
        # Load this layer's weights into locals once (not per timestep).
        w_ih = w_ih_ref[layer]                    # (H, 4H)
        w_hh = w_hh_ref[layer]                    # (H, 4H)
        b = b_ref[layer]                          # (1, 4H)

        # Hoisted input matmul over ALL timesteps: M = Bt*T instead of Bt.
        x_flat = seq_ref[...].reshape(Bt * T, H)
        gx = jnp.dot(x_flat, w_ih, preferred_element_type=jnp.float32) + b
        gx_ref[...] = gx.reshape(Bt, T, H4)

        def step(t, carry):
            h, c = carry
            g_x = gx_ref[:, pl.ds(t, 1), :].reshape(Bt, H4)
            gates = g_x + jnp.dot(h, w_hh, preferred_element_type=jnp.float32)

            # Single whole-vreg activation pass (EUP), then static gate slices.
            act = jnp.where(is_g, jnp.tanh(gates), jax.nn.sigmoid(gates))
            i = act[:, 0 * H:1 * H]
            f = act[:, 1 * H:2 * H]
            g = act[:, 2 * H:3 * H]
            o = act[:, 3 * H:4 * H]

            c_new = f * c + i * g
            h_new = o * jnp.tanh(c_new)

            # Write into the VMEM sequence scratch (feeds the next layer);
            # the HBM-visible output is stored once, densely, at the end.
            seq_ref[:, pl.ds(t, 1), :] = h_new.reshape(Bt, 1, H)
            return (h_new, c_new)

        h0 = jnp.zeros((Bt, H), jnp.float32)
        c0 = jnp.zeros((Bt, H), jnp.float32)
        lax.fori_loop(0, T, step, (h0, c0), unroll=True)

    # Single dense store of the last layer's full sequence.
    out_ref[...] = seq_ref[...]


def _run_fused_lstm(x, w_ih_all, w_hh_all, b_all, *, batch_tile=None):
    """x: (B, T, H) float32; stacked weights for all layers. Returns (B, T, H)."""
    B, T, H = x.shape
    L = w_ih_all.shape[0]
    H4 = 4 * H
    if batch_tile is None:
        batch_tile = B
    assert B % batch_tile == 0, "batch must be divisible by batch_tile"
    grid = (B // batch_tile,)

    # Advisory cost hint: 2 matmuls per layer (x@W_ih hoisted + T * h@W_hh),
    # each ~2*M*K*N flops; ~5 transcendentals per gate-group element.
    cost = pl.CostEstimate(
        flops=4 * L * B * T * H * H4,
        transcendentals=5 * L * B * T * H,
        bytes_accessed=4 * (2 * B * T * H + w_ih_all.size + w_hh_all.size
                            + b_all.size),
    )

    return pl.pallas_call(
        _fused_lstm_kernel,
        out_shape=jax.ShapeDtypeStruct((B, T, H), jnp.float32),
        grid=grid,
        in_specs=[
            pl.BlockSpec((batch_tile, T, H), lambda bt: (bt, 0, 0)),
            pl.BlockSpec((L, H, H4), lambda bt: (0, 0, 0)),
            pl.BlockSpec((L, H, H4), lambda bt: (0, 0, 0)),
            pl.BlockSpec((L, 1, H4), lambda bt: (0, 0, 0)),
        ],
        out_specs=pl.BlockSpec((batch_tile, T, H), lambda bt: (bt, 0, 0)),
        scratch_shapes=[
            pltpu.VMEM((batch_tile, T, H), jnp.float32),   # seq buffer
            pltpu.VMEM((batch_tile, T, H4), jnp.float32),  # precomputed x-gates
        ],
        compiler_params=pltpu.CompilerParams(
            dimension_semantics=("parallel",),   # batch tiles shard across TCs
        ),
        cost_estimate=cost,
    )(x, w_ih_all, w_hh_all, b_all)


# --------------------------- BaseRNN (JAX side) ---------------------------- #

class BaseRNNPallas:
    """JAX/Pallas mirror of PointerNet BaseRNN with a multi-layer LSTM forward."""

    SYM_MASK = 'MASK'
    SYM_EOS = 'EOS'

    def __init__(self, vocab_size, max_len, hidden_size, input_dropout_p,
                 output_dropout_p, n_layers, rnn_cell, key):
        if rnn_cell.lower() not in ('lstm', 'gru'):
            raise ValueError('Unsupported RNN Cell: {}'.format(rnn_cell))
        self.rnn_cell = rnn_cell.lower()
        self.vocab_size = vocab_size
        self.max_len = max_len
        self.hidden_size = hidden_size
        self.input_dropout_p = input_dropout_p
        self.output_dropout_p = output_dropout_p
        self.n_layers = n_layers

        # Deterministic PyTorch-style init: U(-1/sqrt(H), 1/sqrt(H)).
        # TODO(synk): layer 0 assumes embedding dim == hidden_size (as in the
        #             PointerNet subclasses); arbitrary input dims would need a
        #             separate layer-0 W_ih shape.
        H = hidden_size
        bound = 1.0 / jnp.sqrt(jnp.float32(H))
        w_ih_list, w_hh_list, b_list = [], [], []
        for _ in range(n_layers):
            key, k1, k2, k3, k4 = jax.random.split(key, 5)
            w_ih = jax.random.uniform(k1, (4 * H, H), jnp.float32, -bound, bound)
            w_hh = jax.random.uniform(k2, (4 * H, H), jnp.float32, -bound, bound)
            b_ih = jax.random.uniform(k3, (4 * H,), jnp.float32, -bound, bound)
            b_hh = jax.random.uniform(k4, (4 * H,), jnp.float32, -bound, bound)
            w_ih_list.append(jnp.transpose(w_ih))              # (H, 4H)
            w_hh_list.append(jnp.transpose(w_hh))              # (H, 4H)
            b_list.append((b_ih + b_hh).reshape(1, 4 * H))     # (1, 4H)

        self.w_ih_all = jnp.stack(w_ih_list)   # (L, H, 4H)
        self.w_hh_all = jnp.stack(w_hh_list)   # (L, H, 4H)
        self.b_all = jnp.stack(b_list)         # (L, 1, 4H)

    def forward(self, x):
        """x: (B, T, H) float32 embedded input sequence -> (B, T, H)."""
        if self.rnn_cell != 'lstm':
            # TODO(synk): GRU cell path not implemented in the Pallas kernel;
            #             refusing to silently return LSTM results.
            raise NotImplementedError('GRU forward not implemented in Pallas kernel')
        # Input/output dropout: identity in eval mode (p applied only in training).
        # TODO(synk): training-mode dropout mask (pltpu.prng_random_bits) not wired in.
        return _run_fused_lstm(x, self.w_ih_all, self.w_hh_all, self.b_all)


# --------------------------------- main ------------------------------------ #

if __name__ == "__main__":
    key = jax.random.PRNGKey(0)
    key, k_in, k_mod = jax.random.split(key, 3)

    vocab_size = 10
    max_len = 8        # sequence length T
    hidden_size = 32   # 4*H = 128 -> lane-aligned gate matmuls
    n_layers = 2
    batch = 2

    model = BaseRNNPallas(
        vocab_size=vocab_size,
        max_len=max_len,
        hidden_size=hidden_size,
        input_dropout_p=0.0,
        output_dropout_p=0.0,
        n_layers=n_layers,
        rnn_cell='lstm',
        key=k_mod,
    )

    # Pre-embedded input sequence (the subclass would produce this via nn.Embedding).
    x = jax.random.normal(k_in, (batch, max_len, hidden_size), dtype=jnp.float32)

    out = model.forward(x)
    out = jax.block_until_ready(out)
    assert out.shape == (batch, max_len, hidden_size)
    assert jnp.all(jnp.isfinite(out))
    print("KERNEL_OK")
</pallas_src>

<mosaic_0001>
module attributes {stable_mosaic.version = 11 : i64} {
  func.func @_fused_lstm_kernel(%arg0: i32, %arg1: memref<2x8x32xf32, #tpu.memory_space<vmem>>, %arg2: memref<2x32x128xf32, #tpu.memory_space<vmem>>, %arg3: memref<2x32x128xf32, #tpu.memory_space<vmem>>, %arg4: memref<2x1x128xf32, #tpu.memory_space<vmem>>, %arg5: memref<2x8x32xf32, #tpu.memory_space<vmem>>, %arg6: memref<2x8x32xf32, #tpu.memory_space<vmem>>, %arg7: memref<2x8x128xf32, #tpu.memory_space<vmem>>) attributes {dimension_semantics = [#tpu.dimension_semantics<parallel>], iteration_bounds = array<i64: 1>, scalar_prefetch = 0 : i64, scratch_operands = 2 : i64, tpu.core_type = #tpu.core_type<tc>, window_params = [{transform_indices = @transform_0, window_bounds = array<i64: 2, 8, 32>}, {pipeline_mode = #tpu.pipeline_mode<synchronous>, transform_indices = @transform_1, window_bounds = array<i64: 2, 32, 128>}, {pipeline_mode = #tpu.pipeline_mode<synchronous>, transform_indices = @transform_2, window_bounds = array<i64: 2, 32, 128>}, {pipeline_mode = #tpu.pipeline_mode<synchronous>, transform_indices = @transform_3, window_bounds = array<i64: 2, 1, 128>}, {transform_indices = @transform_4, window_bounds = array<i64: 2, 8, 32>}]} {
    %c0 = arith.constant 0 : index
    %c0_0 = arith.constant 0 : index
    %c0_1 = arith.constant 0 : index
    %0 = vector.load %arg1[%c0, %c0_0, %c0_1] : memref<2x8x32xf32, #tpu.memory_space<vmem>>, vector<2x8x32xf32>
    %c0_2 = arith.constant 0 : index
    %c0_3 = arith.constant 0 : index
    %c0_4 = arith.constant 0 : index
    %1 = vector.load %arg6[%c0_2, %c0_3, %c0_4] : memref<2x8x32xf32, #tpu.memory_space<vmem>>, vector<2x8x32xf32>
    tpu.vector_store %arg6[%c0_2, %c0_3, %c0_4], %0 {strides = array<i32>} : memref<2x8x32xf32, #tpu.memory_space<vmem>>, vector<2x8x32xf32>,
    %2 = tpu.iota {dimensions = array<i32: 1>} : vector<2x128xi32>
    %c64_i32 = arith.constant 64 : i32
    %3 = vector.broadcast %c64_i32 : i32 to vector<2x128xi32>
    %4 = arith.cmpi sge, %2, %3 : vector<2x128xi32>
    %c96_i32 = arith.constant 96 : i32
    %5 = vector.broadcast %c96_i32 : i32 to vector<2x128xi32>
    %6 = arith.cmpi slt, %2, %5 : vector<2x128xi32>
    %7 = arith.andi %4, %6 : vector<2x128xi1>
    %c0_5 = arith.constant 0 : index
    %c0_6 = arith.constant 0 : index
    %c0_7 = arith.constant 0 : index
    %8 = vector.load %arg2[%c0_5, %c0_6, %c0_7] : memref<2x32x128xf32, #tpu.memory_space<vmem>>, vector<1x32x128xf32>
    %9 = vector.shape_cast %8 : vector<1x32x128xf32> to vector<32x128xf32>
    %c0_8 = arith.constant 0 : index
    %c0_9 = arith.constant 0 : index
    %c0_10 = arith.constant 0 : index
    %10 = vector.load %arg3[%c0_8, %c0_9, %c0_10] : memref<2x32x128xf32, #tpu.memory_space<vmem>>, vector<1x32x128xf32>
    %11 = vector.shape_cast %10 : vector<1x32x128xf32> to vector<32x128xf32>
    %c0_11 = arith.constant 0 : index
    %c0_12 = arith.constant 0 : index
    %c0_13 = arith.constant 0 : index
    %12 = vector.load %arg4[%c0_11, %c0_12, %c0_13] : memref<2x1x128xf32, #tpu.memory_space<vmem>>, vector<1x1x128xf32>
    %13 = vector.shape_cast %12 : vector<1x1x128xf32> to vector<1x128xf32>
    %c0_14 = arith.constant 0 : index
    %c0_15 = arith.constant 0 : index
    %c0_16 = arith.constant 0 : index
    %14 = vector.load %arg6[%c0_14, %c0_15, %c0_16] : memref<2x8x32xf32, #tpu.memory_space<vmem>>, vector<2x8x32xf32>
    %15 = vector.shape_cast %14 : vector<2x8x32xf32> to vector<16x32xf32>
    %cst = arith.constant dense<0.000000e+00> : vector<16x128xf32>
    %16 = tpu.matmul %15, %9, %cst {dimension_numbers = #tpu.dot_dimension_numbers<[1], [0], [0], [1], [0, 0, 1, 1], [], []>} : vector<16x32xf32>, vector<32x128xf32>, vector<16x128xf32> -> vector<16x128xf32>
    %17 = vector.broadcast %13 : vector<1x128xf32> to vector<16x128xf32>
    %18 = arith.addf %16, %17 : vector<16x128xf32>
    %19 = vector.shape_cast %18 : vector<16x128xf32> to vector<2x8x128xf32>
    %c0_17 = arith.constant 0 : index
    %c0_18 = arith.constant 0 : index
    %c0_19 = arith.constant 0 : index
    %20 = vector.load %arg7[%c0_17, %c0_18, %c0_19] : memref<2x8x128xf32, #tpu.memory_space<vmem>>, vector<2x8x128xf32>
    tpu.vector_store %arg7[%c0_17, %c0_18, %c0_19], %19 {strides = array<i32>} : memref<2x8x128xf32, #tpu.memory_space<vmem>>, vector<2x8x128xf32>,
    %cst_20 = arith.constant 0.000000e+00 : f32
    %21 = vector.broadcast %cst_20 : f32 to vector<2x32xf32>
    %cst_21 = arith.constant 0.000000e+00 : f32
    %22 = vector.broadcast %cst_21 : f32 to vector<2x32xf32>
    %c0_i32 = arith.constant 0 : i32
    %c0_22 = arith.constant 0 : index
    %23 = arith.index_cast %c0_i32 : i32 to index
    %c0_23 = arith.constant 0 : index
    %24 = vector.load %arg7[%c0_22, %23, %c0_23] : memref<2x8x128xf32, #tpu.memory_space<vmem>>, vector<2x1x128xf32>
    %25 = vector.shape_cast %24 : vector<2x1x128xf32> to vector<2x128xf32>
    %cst_24 = arith.constant dense<0.000000e+00> : vector<2x128xf32>
    %26 = tpu.matmul %21, %11, %cst_24 {dimension_numbers = #tpu.dot_dimension_numbers<[1], [0], [0], [1], [0, 0, 1, 1], [], []>} : vector<2x32xf32>, vector<32x128xf32>, vector<2x128xf32> -> vector<2x128xf32>
    %27 = arith.addf %25, %26 : vector<2x128xf32>
    %28 = math.tanh %27 : vector<2x128xf32>
    %29 = arith.negf %27 : vector<2x128xf32>
    %30 = math.exp %29 : vector<2x128xf32>
    %cst_25 = arith.constant 1.000000e+00 : f32
    %31 = vector.broadcast %cst_25 : f32 to vector<2x128xf32>
    %32 = arith.addf %31, %30 : vector<2x128xf32>
    %33 = arith.divf %31, %32 : vector<2x128xf32>
    %34 = arith.select %7, %28, %33 : vector<2x128xi1>, vector<2x128xf32>
    %35 = vector.extract_strided_slice %34 {offsets = [0, 0], sizes = [2, 32], strides = [1, 1]} : vector<2x128xf32> to vector<2x32xf32>
    %36 = vector.extract_strided_slice %34 {offsets = [0, 32], sizes = [2, 32], strides = [1, 1]} : vector<2x128xf32> to vector<2x32xf32>
    %37 = vector.extract_strided_slice %34 {offsets = [0, 64], sizes = [2, 32], strides = [1, 1]} : vector<2x128xf32> to vector<2x32xf32>
    %38 = vector.extract_strided_slice %34 {offsets = [0, 96], sizes = [2, 32], strides = [1, 1]} : vector<2x128xf32> to vector<2x32xf32>
    %39 = arith.mulf %36, %22 : vector<2x32xf32>
    %40 = arith.mulf %35, %37 : vector<2x32xf32>
    %41 = arith.addf %39, %40 : vector<2x32xf32>
    %42 = math.tanh %41 : vector<2x32xf32>
    %43 = arith.mulf %38, %42 : vector<2x32xf32>
    %44 = vector.shape_cast %43 : vector<2x32xf32> to vector<2x1x32xf32>
    %c0_26 = arith.constant 0 : index
    %45 = arith.index_cast %c0_i32 : i32 to index
    %c0_27 = arith.constant 0 : index
    %46 = vector.load %arg6[%c0_26, %45, %c0_27] : memref<2x8x32xf32, #tpu.memory_space<vmem>>, vector<2x1x32xf32>
    tpu.vector_store %arg6[%c0_26, %45, %c0_27], %44 {strides = array<i32>} : memref<2x8x32xf32, #tpu.memory_space<vmem>>, vector<2x1x32xf32>,
    %c1_i32 = arith.constant 1 : i32
    %c0_28 = arith.constant 0 : index
    %47 = arith.index_cast %c1_i32 : i32 to index
    %c0_29 = arith.constant 0 : index
    %48 = vector.load %arg7[%c0_28, %47, %c0_29] : memref<2x8x128xf32, #tpu.memory_space<vmem>>, vector<2x1x128xf32>
    %49 = vector.shape_cast %48 : vector<2x1x128xf32> to vector<2x128xf32>
    %cst_30 = arith.constant dense<0.000000e+00> : vector<2x128xf32>
    %50 = tpu.matmul %43, %11, %cst_30 {dimension_numbers = #tpu.dot_dimension_numbers<[1], [0], [0], [1], [0, 0, 1, 1], [], []>} : vector<2x32xf32>, vector<32x128xf32>, vector<2x128xf32> -> vector<2x128xf32>
    %51 = arith.addf %49, %50 : vector<2x128xf32>
    %52 = math.tanh %51 : vector<2x128xf32>
    %53 = arith.negf %51 : vector<2x128xf32>
    %54 = math.exp %53 : vector<2x128xf32>
    %cst_31 = arith.constant 1.000000e+00 : f32
    %55 = vector.broadcast %cst_31 : f32 to vector<2x128xf32>
    %56 = arith.addf %55, %54 : vector<2x128xf32>
    %57 = arith.divf %55, %56 : vector<2x128xf32>
    %58 = arith.select %7, %52, %57 : vector<2x128xi1>, vector<2x128xf32>
    %59 = vector.extract_strided_slice %58 {offsets = [0, 0], sizes = [2, 32], strides = [1, 1]} : vector<2x128xf32> to vector<2x32xf32>
    %60 = vector.extract_strided_slice %58 {offsets = [0, 32], sizes = [2, 32], strides = [1, 1]} : vector<2x128xf32> to vector<2x32xf32>
    %61 = vector.extract_strided_slice %58 {offsets = [0, 64], sizes = [2, 32], strides = [1, 1]} : vector<2x128xf32> to vector<2x32xf32>
    %62 = vector.extract_strided_slice %58 {offsets = [0, 96], sizes = [2, 32], strides = [1, 1]} : vector<2x128xf32> to vector<2x32xf32>
    %63 = arith.mulf %60, %41 : vector<2x32xf32>
    %64 = arith.mulf %59, %61 : vector<2x32xf32>
    %65 = arith.addf %63, %64 : vector<2x32xf32>
    %66 = math.tanh %65 : vector<2x32xf32>
    %67 = arith.mulf %62, %66 : vector<2x32xf32>
    %68 = vector.shape_cast %67 : vector<2x32xf32> to vector<2x1x32xf32>
    %c0_32 = arith.constant 0 : index
    %69 = arith.index_cast %c1_i32 : i32 to index
    %c0_33 = arith.constant 0 : index
    %70 = vector.load %arg6[%c0_32, %69, %c0_33] : memref<2x8x32xf32, #tpu.memory_space<vmem>>, vector<2x1x32xf32>
    tpu.vector_store %arg6[%c0_32, %69, %c0_33], %68 {strides = array<i32>} : memref<2x8x32xf32, #tpu.memory_space<vmem>>, vector<2x1x32xf32>,
    %c2_i32 = arith.constant 2 : i32
    %c0_34 = arith.constant 0 : index
    %71 = arith.index_cast %c2_i32 : i32 to index
    %c0_35 = arith.constant 0 : index
    %72 = vector.load %arg7[%c0_34, %71, %c0_35] : memref<2x8x128xf32, #tpu.memory_space<vmem>>, vector<2x1x128xf32>
    %73 = vector.shape_cast %72 : vector<2x1x128xf32> to vector<2x128xf32>
    %cst_36 = arith.constant dense<0.000000e+00> : vector<2x128xf32>
    %74 = tpu.matmul %67, %11, %cst_36 {dimension_numbers = #tpu.dot_dimension_numbers<[1], [0], [0], [1], [0, 0, 1, 1], [], []>} : vector<2x32xf32>, vector<32x128xf32>, vector<2x128xf32> -> vector<2x128xf32>
    %75 = arith.addf %73, %74 : vector<2x128xf32>
    %76 = math.tanh %75 : vector<2x128xf32>
    %77 = arith.negf %75 : vector<2x128xf32>
    %78 = math.exp %77 : vector<2x128xf32>
    %cst_37 = arith.constant 1.000000e+00 : f32
    %79 = vector.broadcast %cst_37 : f32 to vector<2x128xf32>
    %80 = arith.addf %79, %78 : vector<2x128xf32>
    %81 = arith.divf %79, %80 : vector<2x128xf32>
    %82 = arith.select %7, %76, %81 : vector<2x128xi1>, vector<2x128xf32>
    %83 = vector.extract_strided_slice %82 {offsets = [0, 0], sizes = [2, 32], strides = [1, 1]} : vector<2x128xf32> to vector<2x32xf32>
    %84 = vector.extract_strided_slice %82 {offsets = [0, 32], sizes = [2, 32], strides = [1, 1]} : vector<2x128xf32> to vector<2x32xf32>
    %85 = vector.extract_strided_slice %82 {offsets = [0, 64], sizes = [2, 32], strides = [1, 1]} : vector<2x128xf32> to vector<2x32xf32>
    %86 = vector.extract_strided_slice %82 {offsets = [0, 96], sizes = [2, 32], strides = [1, 1]} : vector<2x128xf32> to vector<2x32xf32>
    %87 = arith.mulf %84, %65 : vector<2x32xf32>
    %88 = arith.mulf %83, %85 : vector<2x32xf32>
    %89 = arith.addf %87, %88 : vector<2x32xf32>
    %90 = math.tanh %89 : vector<2x32xf32>
    %91 = arith.mulf %86, %90 : vector<2x32xf32>
    %92 = vector.shape_cast %91 : vector<2x32xf32> to vector<2x1x32xf32>
    %c0_38 = arith.constant 0 : index
    %93 = arith.index_cast %c2_i32 : i32 to index
    %c0_39 = arith.constant 0 : index
    %94 = vector.load %arg6[%c0_38, %93, %c0_39] : memref<2x8x32xf32, #tpu.memory_space<vmem>>, vector<2x1x32xf32>
    tpu.vector_store %arg6[%c0_38, %93, %c0_39], %92 {strides = array<i32>} : memref<2x8x32xf32, #tpu.memory_space<vmem>>, vector<2x1x32xf32>,
    %c3_i32 = arith.constant 3 : i32
    %c0_40 = arith.constant 0 : index
    %95 = arith.index_cast %c3_i32 : i32 to index
    %c0_41 = arith.constant 0 : index
    %96 = vector.load %arg7[%c0_40, %95, %c0_41] : memref<2x8x128xf32, #tpu.memory_space<vmem>>, vector<2x1x128xf32>
    %97 = vector.shape_cast %96 : vector<2x1x128xf32> to vector<2x128xf32>
    %cst_42 = arith.constant dense<0.000000e+00> : vector<2x128xf32>
    %98 = tpu.matmul %91, %11, %cst_42 {dimension_numbers = #tpu.dot_dimension_numbers<[1], [0], [0], [1], [0, 0, 1, 1], [], []>} : vector<2x32xf32>, vector<32x128xf32>, vector<2x128xf32> -> vector<2x128xf32>
    %99 = arith.addf %97, %98 : vector<2x128xf32>
    %100 = math.tanh %99 : vector<2x128xf32>
    %101 = arith.negf %99 : vector<2x128xf32>
    %102 = math.exp %101 : vector<2x128xf32>
    %cst_43 = arith.constant 1.000000e+00 : f32
    %103 = vector.broadcast %cst_43 : f32 to vector<2x128xf32>
    %104 = arith.addf %103, %102 : vector<2x128xf32>
    %105 = arith.divf %103, %104 : vector<2x128xf32>
    %106 = arith.select %7, %100, %105 : vector<2x128xi1>, vector<2x128xf32>
    %107 = vector.extract_strided_slice %106 {offsets = [0, 0], sizes = [2, 32], strides = [1, 1]} : vector<2x128xf32> to vector<2x32xf32>
    %108 = vector.extract_strided_slice %106 {offsets = [0, 32], sizes = [2, 32], strides = [1, 1]} : vector<2x128xf32> to vector<2x32xf32>
    %109 = vector.extract_strided_slice %106 {offsets = [0, 64], sizes = [2, 32], strides = [1, 1]} : vector<2x128xf32> to vector<2x32xf32>
    %110 = vector.extract_strided_slice %106 {offsets = [0, 96], sizes = [2, 32], strides = [1, 1]} : vector<2x128xf32> to vector<2x32xf32>
    %111 = arith.mulf %108, %89 : vector<2x32xf32>
    %112 = arith.mulf %107, %109 : vector<2x32xf32>
    %113 = arith.addf %111, %112 : vector<2x32xf32>
    %114 = math.tanh %113 : vector<2x32xf32>
    %115 = arith.mulf %110, %114 : vector<2x32xf32>
    %116 = vector.shape_cast %115 : vector<2x32xf32> to vector<2x1x32xf32>
    %c0_44 = arith.constant 0 : index
    %117 = arith.index_cast %c3_i32 : i32 to index
    %c0_45 = arith.constant 0 : index
    %118 = vector.load %arg6[%c0_44, %117, %c0_45] : memref<2x8x32xf32, #tpu.memory_space<vmem>>, vector<2x1x32xf32>
    tpu.vector_store %arg6[%c0_44, %117, %c0_45], %116 {strides = array<i32>} : memref<2x8x32xf32, #tpu.memory_space<vmem>>, vector<2x1x32xf32>,
    %c4_i32 = arith.constant 4 : i32
    %c0_46 = arith.constant 0 : index
    %119 = arith.index_cast %c4_i32 : i32 to index
    %c0_47 = arith.constant 0 : index
    %120 = vector.load %arg7[%c0_46, %119, %c0_47] : memref<2x8x128xf32, #tpu.memory_space<vmem>>, vector<2x1x128xf32>
    %121 = vector.shape_cast %120 : vector<2x1x128xf32> to vector<2x128xf32>
    %cst_48 = arith.constant dense<0.000000e+00> : vector<2x128xf32>
    %122 = tpu.matmul %115, %11, %cst_48 {dimension_numbers = #tpu.dot_dimension_numbers<[1], [0], [0], [1], [0, 0, 1, 1], [], []>} : vector<2x32xf32>, vector<32x128xf32>, vector<2x128xf32> -> vector<2x128xf32>
    %123 = arith.addf %121, %122 : vector<2x128xf32>
    %124 = math.tanh %123 : vector<2x128xf32>
    %125 = arith.negf %123 : vector<2x128xf32>
    %126 = math.exp %125 : vector<2x128xf32>
    %cst_49 = arith.constant 1.000000e+00 : f32
    %127 = vector.broadcast %cst_49 : f32 to vector<2x128xf32>
    %128 = arith.addf %127, %126 : vector<2x128xf32>
    %129 = arith.divf %127, %128 : vector<2x128xf32>
    %130 = arith.select %7, %124, %129 : vector<2x128xi1>, vector<2x128xf32>
    %131 = vector.extract_strided_slice %130 {offsets = [0, 0], sizes = [2, 32], strides = [1, 1]} : vector<2x128xf32> to vector<2x32xf32>
    %132 = vector.extract_strided_slice %130 {offsets = [0, 32], sizes = [2, 32], strides = [1, 1]} : vector<2x128xf32> to vector<2x32xf32>
    %133 = vector.extract_strided_slice %130 {offsets = [0, 64], sizes = [2, 32], strides = [1, 1]} : vector<2x128xf32> to vector<2x32xf32>
    %134 = vector.extract_strided_slice %130 {offsets = [0, 96], sizes = [2, 32], strides = [1, 1]} : vector<2x128xf32> to vector<2x32xf32>
    %135 = arith.mulf %132, %113 : vector<2x32xf32>
    %136 = arith.mulf %131, %133 : vector<2x32xf32>
    %137 = arith.addf %135, %136 : vector<2x32xf32>
    %138 = math.tanh %137 : vector<2x32xf32>
    %139 = arith.mulf %134, %138 : vector<2x32xf32>
    %140 = vector.shape_cast %139 : vector<2x32xf32> to vector<2x1x32xf32>
    %c0_50 = arith.constant 0 : index
    %141 = arith.index_cast %c4_i32 : i32 to index
    %c0_51 = arith.constant 0 : index
    %142 = vector.load %arg6[%c0_50, %141, %c0_51] : memref<2x8x32xf32, #tpu.memory_space<vmem>>, vector<2x1x32xf32>
    tpu.vector_store %arg6[%c0_50, %141, %c0_51], %140 {strides = array<i32>} : memref<2x8x32xf32, #tpu.memory_space<vmem>>, vector<2x1x32xf32>,
    %c5_i32 = arith.constant 5 : i32
    %c0_52 = arith.constant 0 : index
    %143 = arith.index_cast %c5_i32 : i32 to index
    %c0_53 = arith.constant 0 : index
    %144 = vector.load %arg7[%c0_52, %143, %c0_53] : memref<2x8x128xf32, #tpu.memory_space<vmem>>, vector<2x1x128xf32>
    %145 = vector.shape_cast %144 : vector<2x1x128xf32> to vector<2x128xf32>
    %cst_54 = arith.constant dense<0.000000e+00> : vector<2x128xf32>
    %146 = tpu.matmul %139, %11, %cst_54 {dimension_numbers = #tpu.dot_dimension_numbers<[1], [0], [0], [1], [0, 0, 1, 1], [], []>} : vector<2x32xf32>, vector<32x128xf32>, vector<2x128xf32> -> vector<2x128xf32>
    %147 = arith.addf %145, %146 : vector<2x128xf32>
    %148 = math.tanh %147 : vector<2x128xf32>
    %149 = arith.negf %147 : vector<2x128xf32>
    %150 = math.exp %149 : vector<2x128xf32>
    %cst_55 = arith.constant 1.000000e+00 : f32
    %151 = vector.broadcast %cst_55 : f32 to vector<2x128xf32>
    %152 = arith.addf %151, %150 : vector<2x128xf32>
    %153 = arith.divf %151, %152 : vector<2x128xf32>
    %154 = arith.select %7, %148, %153 : vector<2x128xi1>, vector<2x128xf32>
    %155 = vector.extract_strided_slice %154 {offsets = [0, 0], sizes = [2, 32], strides = [1, 1]} : vector<2x128xf32> to vector<2x32xf32>
    %156 = vector.extract_strided_slice %154 {offsets = [0, 32], sizes = [2, 32], strides = [1, 1]} : vector<2x128xf32> to vector<2x32xf32>
    %157 = vector.extract_strided_slice %154 {offsets = [0, 64], sizes = [2, 32], strides = [1, 1]} : vector<2x128xf32> to vector<2x32xf32>
    %158 = vector.extract_strided_slice %154 {offsets = [0, 96], sizes = [2, 32], strides = [1, 1]} : vector<2x128xf32> to vector<2x32xf32>
    %159 = arith.mulf %156, %137 : vector<2x32xf32>
    %160 = arith.mulf %155, %157 : vector<2x32xf32>
    %161 = arith.addf %159, %160 : vector<2x32xf32>
    %162 = math.tanh %161 : vector<2x32xf32>
    %163 = arith.mulf %158, %162 : vector<2x32xf32>
    %164 = vector.shape_cast %163 : vector<2x32xf32> to vector<2x1x32xf32>
    %c0_56 = arith.constant 0 : index
    %165 = arith.index_cast %c5_i32 : i32 to index
    %c0_57 = arith.constant 0 : index
    %166 = vector.load %arg6[%c0_56, %165, %c0_57] : memref<2x8x32xf32, #tpu.memory_space<vmem>>, vector<2x1x32xf32>
    tpu.vector_store %arg6[%c0_56, %165, %c0_57], %164 {strides = array<i32>} : memref<2x8x32xf32, #tpu.memory_space<vmem>>, vector<2x1x32xf32>,
    %c6_i32 = arith.constant 6 : i32
    %c0_58 = arith.constant 0 : index
    %167 = arith.index_cast %c6_i32 : i32 to index
    %c0_59 = arith.constant 0 : index
    %168 = vector.load %arg7[%c0_58, %167, %c0_59] : memref<2x8x128xf32, #tpu.memory_space<vmem>>, vector<2x1x128xf32>
    %169 = vector.shape_cast %168 : vector<2x1x128xf32> to vector<2x128xf32>
    %cst_60 = arith.constant dense<0.000000e+00> : vector<2x128xf32>
    %170 = tpu.matmul %163, %11, %cst_60 {dimension_numbers = #tpu.dot_dimension_numbers<[1], [0], [0], [1], [0, 0, 1, 1], [], []>} : vector<2x32xf32>, vector<32x128xf32>, vector<2x128xf32> -> vector<2x128xf32>
    %171 = arith.addf %169, %170 : vector<2x128xf32>
    %172 = math.tanh %171 : vector<2x128xf32>
    %173 = arith.negf %171 : vector<2x128xf32>
    %174 = math.exp %173 : vector<2x128xf32>
    %cst_61 = arith.constant 1.000000e+00 : f32
    %175 = vector.broadcast %cst_61 : f32 to vector<2x128xf32>
    %176 = arith.addf %175, %174 : vector<2x128xf32>
    %177 = arith.divf %175, %176 : vector<2x128xf32>
    %178 = arith.select %7, %172, %177 : vector<2x128xi1>, vector<2x128xf32>
    %179 = vector.extract_strided_slice %178 {offsets = [0, 0], sizes = [2, 32], strides = [1, 1]} : vector<2x128xf32> to vector<2x32xf32>
    %180 = vector.extract_strided_slice %178 {offsets = [0, 32], sizes = [2, 32], strides = [1, 1]} : vector<2x128xf32> to vector<2x32xf32>
    %181 = vector.extract_strided_slice %178 {offsets = [0, 64], sizes = [2, 32], strides = [1, 1]} : vector<2x128xf32> to vector<2x32xf32>
    %182 = vector.extract_strided_slice %178 {offsets = [0, 96], sizes = [2, 32], strides = [1, 1]} : vector<2x128xf32> to vector<2x32xf32>
    %183 = arith.mulf %180, %161 : vector<2x32xf32>
    %184 = arith.mulf %179, %181 : vector<2x32xf32>
    %185 = arith.addf %183, %184 : vector<2x32xf32>
    %186 = math.tanh %185 : vector<2x32xf32>
    %187 = arith.mulf %182, %186 : vector<2x32xf32>
    %188 = vector.shape_cast %187 : vector<2x32xf32> to vector<2x1x32xf32>
    %c0_62 = arith.constant 0 : index
    %189 = arith.index_cast %c6_i32 : i32 to index
    %c0_63 = arith.constant 0 : index
    %190 = vector.load %arg6[%c0_62, %189, %c0_63] : memref<2x8x32xf32, #tpu.memory_space<vmem>>, vector<2x1x32xf32>
    tpu.vector_store %arg6[%c0_62, %189, %c0_63], %188 {strides = array<i32>} : memref<2x8x32xf32, #tpu.memory_space<vmem>>, vector<2x1x32xf32>,
    %c7_i32 = arith.constant 7 : i32
    %c0_64 = arith.constant 0 : index
    %191 = arith.index_cast %c7_i32 : i32 to index
    %c0_65 = arith.constant 0 : index
    %192 = vector.load %arg7[%c0_64, %191, %c0_65] : memref<2x8x128xf32, #tpu.memory_space<vmem>>, vector<2x1x128xf32>
    %193 = vector.shape_cast %192 : vector<2x1x128xf32> to vector<2x128xf32>
    %cst_66 = arith.constant dense<0.000000e+00> : vector<2x128xf32>
    %194 = tpu.matmul %187, %11, %cst_66 {dimension_numbers = #tpu.dot_dimension_numbers<[1], [0], [0], [1], [0, 0, 1, 1], [], []>} : vector<2x32xf32>, vector<32x128xf32>, vector<2x128xf32> -> vector<2x128xf32>
    %195 = arith.addf %193, %194 : vector<2x128xf32>
    %196 = math.tanh %195 : vector<2x128xf32>
    %197 = arith.negf %195 : vector<2x128xf32>
    %198 = math.exp %197 : vector<2x128xf32>
    %cst_67 = arith.constant 1.000000e+00 : f32
    %199 = vector.broadcast %cst_67 : f32 to vector<2x128xf32>
    %200 = arith.addf %199, %198 : vector<2x128xf32>
    %201 = arith.divf %199, %200 : vector<2x128xf32>
    %202 = arith.select %7, %196, %201 : vector<2x128xi1>, vector<2x128xf32>
    %203 = vector.extract_strided_slice %202 {offsets = [0, 0], sizes = [2, 32], strides = [1, 1]} : vector<2x128xf32> to vector<2x32xf32>
    %204 = vector.extract_strided_slice %202 {offsets = [0, 32], sizes = [2, 32], strides = [1, 1]} : vector<2x128xf32> to vector<2x32xf32>
    %205 = vector.extract_strided_slice %202 {offsets = [0, 64], sizes = [2, 32], strides = [1, 1]} : vector<2x128xf32> to vector<2x32xf32>
    %206 = vector.extract_strided_slice %202 {offsets = [0, 96], sizes = [2, 32], strides = [1, 1]} : vector<2x128xf32> to vector<2x32xf32>
    %207 = arith.mulf %204, %185 : vector<2x32xf32>
    %208 = arith.mulf %203, %205 : vector<2x32xf32>
    %209 = arith.addf %207, %208 : vector<2x32xf32>
    %210 = math.tanh %209 : vector<2x32xf32>
    %211 = arith.mulf %206, %210 : vector<2x32xf32>
    %212 = vector.shape_cast %211 : vector<2x32xf32> to vector<2x1x32xf32>
    %c0_68 = arith.constant 0 : index
    %213 = arith.index_cast %c7_i32 : i32 to index
    %c0_69 = arith.constant 0 : index
    %214 = vector.load %arg6[%c0_68, %213, %c0_69] : memref<2x8x32xf32, #tpu.memory_space<vmem>>, vector<2x1x32xf32>
    tpu.vector_store %arg6[%c0_68, %213, %c0_69], %212 {strides = array<i32>} : memref<2x8x32xf32, #tpu.memory_space<vmem>>, vector<2x1x32xf32>,
    %c8_i32 = arith.constant 8 : i32
    %c1 = arith.constant 1 : index
    %c0_70 = arith.constant 0 : index
    %c0_71 = arith.constant 0 : index
    %215 = vector.load %arg2[%c1, %c0_70, %c0_71] : memref<2x32x128xf32, #tpu.memory_space<vmem>>, vector<1x32x128xf32>
    %216 = vector.shape_cast %215 : vector<1x32x128xf32> to vector<32x128xf32>
    %c1_72 = arith.constant 1 : index
    %c0_73 = arith.constant 0 : index
    %c0_74 = arith.constant 0 : index
    %217 = vector.load %arg3[%c1_72, %c0_73, %c0_74] : memref<2x32x128xf32, #tpu.memory_space<vmem>>, vector<1x32x128xf32>
    %218 = vector.shape_cast %217 : vector<1x32x128xf32> to vector<32x128xf32>
    %c1_75 = arith.constant 1 : index
    %c0_76 = arith.constant 0 : index
    %c0_77 = arith.constant 0 : index
    %219 = vector.load %arg4[%c1_75, %c0_76, %c0_77] : memref<2x1x128xf32, #tpu.memory_space<vmem>>, vector<1x1x128xf32>
    %220 = vector.shape_cast %219 : vector<1x1x128xf32> to vector<1x128xf32>
    %c0_78 = arith.constant 0 : index
    %c0_79 = arith.constant 0 : index
    %c0_80 = arith.constant 0 : index
    %221 = vector.load %arg6[%c0_78, %c0_79, %c0_80] : memref<2x8x32xf32, #tpu.memory_space<vmem>>, vector<2x8x32xf32>
    %222 = vector.shape_cast %221 : vector<2x8x32xf32> to vector<16x32xf32>
    %cst_81 = arith.constant dense<0.000000e+00> : vector<16x128xf32>
    %223 = tpu.matmul %222, %216, %cst_81 {dimension_numbers = #tpu.dot_dimension_numbers<[1], [0], [0], [1], [0, 0, 1, 1], [], []>} : vector<16x32xf32>, vector<32x128xf32>, vector<16x128xf32> -> vector<16x128xf32>
    %224 = vector.broadcast %220 : vector<1x128xf32> to vector<16x128xf32>
    %225 = arith.addf %223, %224 : vector<16x128xf32>
    %226 = vector.shape_cast %225 : vector<16x128xf32> to vector<2x8x128xf32>
    %c0_82 = arith.constant 0 : index
    %c0_83 = arith.constant 0 : index
    %c0_84 = arith.constant 0 : index
    %227 = vector.load %arg7[%c0_82, %c0_83, %c0_84] : memref<2x8x128xf32, #tpu.memory_space<vmem>>, vector<2x8x128xf32>
    tpu.vector_store %arg7[%c0_82, %c0_83, %c0_84], %226 {strides = array<i32>} : memref<2x8x128xf32, #tpu.memory_space<vmem>>, vector<2x8x128xf32>,
    %cst_85 = arith.constant 0.000000e+00 : f32
    %228 = vector.broadcast %cst_85 : f32 to vector<2x32xf32>
    %cst_86 = arith.constant 0.000000e+00 : f32
    %229 = vector.broadcast %cst_86 : f32 to vector<2x32xf32>
    %c0_i32_87 = arith.constant 0 : i32
    %c0_88 = arith.constant 0 : index
    %230 = arith.index_cast %c0_i32_87 : i32 to index
    %c0_89 = arith.constant 0 : index
    %231 = vector.load %arg7[%c0_88, %230, %c0_89] : memref<2x8x128xf32, #tpu.memory_space<vmem>>, vector<2x1x128xf32>
    %232 = vector.shape_cast %231 : vector<2x1x128xf32> to vector<2x128xf32>
    %cst_90 = arith.constant dense<0.000000e+00> : vector<2x128xf32>
    %233 = tpu.matmul %228, %218, %cst_90 {dimension_numbers = #tpu.dot_dimension_numbers<[1], [0], [0], [1], [0, 0, 1, 1], [], []>} : vector<2x32xf32>, vector<32x128xf32>, vector<2x128xf32> -> vector<2x128xf32>
    %234 = arith.addf %232, %233 : vector<2x128xf32>
    %235 = math.tanh %234 : vector<2x128xf32>
    %236 = arith.negf %234 : vector<2x128xf32>
    %237 = math.exp %236 : vector<2x128xf32>
    %cst_91 = arith.constant 1.000000e+00 : f32
    %238 = vector.broadcast %cst_91 : f32 to vector<2x128xf32>
    %239 = arith.addf %238, %237 : vector<2x128xf32>
    %240 = arith.divf %238, %239 : vector<2x128xf32>
    %241 = arith.select %7, %235, %240 : vector<2x128xi1>, vector<2x128xf32>
    %242 = vector.extract_strided_slice %241 {offsets = [0, 0], sizes = [2, 32], strides = [1, 1]} : vector<2x128xf32> to vector<2x32xf32>
    %243 = vector.extract_strided_slice %241 {offsets = [0, 32], sizes = [2, 32], strides = [1, 1]} : vector<2x128xf32> to vector<2x32xf32>
    %244 = vector.extract_strided_slice %241 {offsets = [0, 64], sizes = [2, 32], strides = [1, 1]} : vector<2x128xf32> to vector<2x32xf32>
    %245 = vector.extract_strided_slice %241 {offsets = [0, 96], sizes = [2, 32], strides = [1, 1]} : vector<2x128xf32> to vector<2x32xf32>
    %246 = arith.mulf %243, %229 : vector<2x32xf32>
    %247 = arith.mulf %242, %244 : vector<2x32xf32>
    %248 = arith.addf %246, %247 : vector<2x32xf32>
    %249 = math.tanh %248 : vector<2x32xf32>
    %250 = arith.mulf %245, %249 : vector<2x32xf32>
    %251 = vector.shape_cast %250 : vector<2x32xf32> to vector<2x1x32xf32>
    %c0_92 = arith.constant 0 : index
    %252 = arith.index_cast %c0_i32_87 : i32 to index
    %c0_93 = arith.constant 0 : index
    %253 = vector.load %arg6[%c0_92, %252, %c0_93] : memref<2x8x32xf32, #tpu.memory_space<vmem>>, vector<2x1x32xf32>
    tpu.vector_store %arg6[%c0_92, %252, %c0_93], %251 {strides = array<i32>} : memref<2x8x32xf32, #tpu.memory_space<vmem>>, vector<2x1x32xf32>,
    %c1_i32_94 = arith.constant 1 : i32
    %c0_95 = arith.constant 0 : index
    %254 = arith.index_cast %c1_i32_94 : i32 to index
    %c0_96 = arith.constant 0 : index
    %255 = vector.load %arg7[%c0_95, %254, %c0_96] : memref<2x8x128xf32, #tpu.memory_space<vmem>>, vector<2x1x128xf32>
    %256 = vector.shape_cast %255 : vector<2x1x128xf32> to vector<2x128xf32>
    %cst_97 = arith.constant dense<0.000000e+00> : vector<2x128xf32>
    %257 = tpu.matmul %250, %218, %cst_97 {dimension_numbers = #tpu.dot_dimension_numbers<[1], [0], [0], [1], [0, 0, 1, 1], [], []>} : vector<2x32xf32>, vector<32x128xf32>, vector<2x128xf32> -> vector<2x128xf32>
    %258 = arith.addf %256, %257 : vector<2x128xf32>
    %259 = math.tanh %258 : vector<2x128xf32>
    %260 = arith.negf %258 : vector<2x128xf32>
    %261 = math.exp %260 : vector<2x128xf32>
    %cst_98 = arith.constant 1.000000e+00 : f32
    %262 = vector.broadcast %cst_98 : f32 to vector<2x128xf32>
    %263 = arith.addf %262, %261 : vector<2x128xf32>
    %264 = arith.divf %262, %263 : vector<2x128xf32>
    %265 = arith.select %7, %259, %264 : vector<2x128xi1>, vector<2x128xf32>
    %266 = vector.extract_strided_slice %265 {offsets = [0, 0], sizes = [2, 32], strides = [1, 1]} : vector<2x128xf32> to vector<2x32xf32>
    %267 = vector.extract_strided_slice %265 {offsets = [0, 32], sizes = [2, 32], strides = [1, 1]} : vector<2x128xf32> to vector<2x32xf32>
    %268 = vector.extract_strided_slice %265 {offsets = [0, 64], sizes = [2, 32], strides = [1, 1]} : vector<2x128xf32> to vector<2x32xf32>
    %269 = vector.extract_strided_slice %265 {offsets = [0, 96], sizes = [2, 32], strides = [1, 1]} : vector<2x128xf32> to vector<2x32xf32>
    %270 = arith.mulf %267, %248 : vector<2x32xf32>
    %271 = arith.mulf %266, %268 : vector<2x32xf32>
    %272 = arith.addf %270, %271 : vector<2x32xf32>
    %273 = math.tanh %272 : vector<2x32xf32>
    %274 = arith.mulf %269, %273 : vector<2x32xf32>
    %275 = vector.shape_cast %274 : vector<2x32xf32> to vector<2x1x32xf32>
    %c0_99 = arith.constant 0 : index
    %276 = arith.index_cast %c1_i32_94 : i32 to index
    %c0_100 = arith.constant 0 : index
    %277 = vector.load %arg6[%c0_99, %276, %c0_100] : memref<2x8x32xf32, #tpu.memory_space<vmem>>, vector<2x1x32xf32>
    tpu.vector_store %arg6[%c0_99, %276, %c0_100], %275 {strides = array<i32>} : memref<2x8x32xf32, #tpu.memory_space<vmem>>, vector<2x1x32xf32>,
    %c2_i32_101 = arith.constant 2 : i32
    %c0_102 = arith.constant 0 : index
    %278 = arith.index_cast %c2_i32_101 : i32 to index
    %c0_103 = arith.constant 0 : index
    %279 = vector.load %arg7[%c0_102, %278, %c0_103] : memref<2x8x128xf32, #tpu.memory_space<vmem>>, vector<2x1x128xf32>
    %280 = vector.shape_cast %279 : vector<2x1x128xf32> to vector<2x128xf32>
    %cst_104 = arith.constant dense<0.000000e+00> : vector<2x128xf32>
    %281 = tpu.matmul %274, %218, %cst_104 {dimension_numbers = #tpu.dot_dimension_numbers<[1], [0], [0], [1], [0, 0, 1, 1], [], []>} : vector<2x32xf32>, vector<32x128xf32>, vector<2x128xf32> -> vector<2x128xf32>
    %282 = arith.addf %280, %281 : vector<2x128xf32>
    %283 = math.tanh %282 : vector<2x128xf32>
    %284 = arith.negf %282 : vector<2x128xf32>
    %285 = math.exp %284 : vector<2x128xf32>
    %cst_105 = arith.constant 1.000000e+00 : f32
    %286 = vector.broadcast %cst_105 : f32 to vector<2x128xf32>
    %287 = arith.addf %286, %285 : vector<2x128xf32>
    %288 = arith.divf %286, %287 : vector<2x128xf32>
    %289 = arith.select %7, %283, %288 : vector<2x128xi1>, vector<2x128xf32>
    %290 = vector.extract_strided_slice %289 {offsets = [0, 0], sizes = [2, 32], strides = [1, 1]} : vector<2x128xf32> to vector<2x32xf32>
    %291 = vector.extract_strided_slice %289 {offsets = [0, 32], sizes = [2, 32], strides = [1, 1]} : vector<2x128xf32> to vector<2x32xf32>
    %292 = vector.extract_strided_slice %289 {offsets = [0, 64], sizes = [2, 32], strides = [1, 1]} : vector<2x128xf32> to vector<2x32xf32>
    %293 = vector.extract_strided_slice %289 {offsets = [0, 96], sizes = [2, 32], strides = [1, 1]} : vector<2x128xf32> to vector<2x32xf32>
    %294 = arith.mulf %291, %272 : vector<2x32xf32>
    %295 = arith.mulf %290, %292 : vector<2x32xf32>
    %296 = arith.addf %294, %295 : vector<2x32xf32>
    %297 = math.tanh %296 : vector<2x32xf32>
    %298 = arith.mulf %293, %297 : vector<2x32xf32>
    %299 = vector.shape_cast %298 : vector<2x32xf32> to vector<2x1x32xf32>
    %c0_106 = arith.constant 0 : index
    %300 = arith.index_cast %c2_i32_101 : i32 to index
    %c0_107 = arith.constant 0 : index
    %301 = vector.load %arg6[%c0_106, %300, %c0_107] : memref<2x8x32xf32, #tpu.memory_space<vmem>>, vector<2x1x32xf32>
    tpu.vector_store %arg6[%c0_106, %300, %c0_107], %299 {strides = array<i32>} : memref<2x8x32xf32, #tpu.memory_space<vmem>>, vector<2x1x32xf32>,
    %c3_i32_108 = arith.constant 3 : i32
    %c0_109 = arith.constant 0 : index
    %302 = arith.index_cast %c3_i32_108 : i32 to index
    %c0_110 = arith.constant 0 : index
    %303 = vector.load %arg7[%c0_109, %302, %c0_110] : memref<2x8x128xf32, #tpu.memory_space<vmem>>, vector<2x1x128xf32>
    %304 = vector.shape_cast %303 : vector<2x1x128xf32> to vector<2x128xf32>
    %cst_111 = arith.constant dense<0.000000e+00> : vector<2x128xf32>
    %305 = tpu.matmul %298, %218, %cst_111 {dimension_numbers = #tpu.dot_dimension_numbers<[1], [0], [0], [1], [0, 0, 1, 1], [], []>} : vector<2x32xf32>, vector<32x128xf32>, vector<2x128xf32> -> vector<2x128xf32>
    %306 = arith.addf %304, %305 : vector<2x128xf32>
    %307 = math.tanh %306 : vector<2x128xf32>
    %308 = arith.negf %306 : vector<2x128xf32>
    %309 = math.exp %308 : vector<2x128xf32>
    %cst_112 = arith.constant 1.000000e+00 : f32
    %310 = vector.broadcast %cst_112 : f32 to vector<2x128xf32>
    %311 = arith.addf %310, %309 : vector<2x128xf32>
    %312 = arith.divf %310, %311 : vector<2x128xf32>
    %313 = arith.select %7, %307, %312 : vector<2x128xi1>, vector<2x128xf32>
    %314 = vector.extract_strided_slice %313 {offsets = [0, 0], sizes = [2, 32], strides = [1, 1]} : vector<2x128xf32> to vector<2x32xf32>
    %315 = vector.extract_strided_slice %313 {offsets = [0, 32], sizes = [2, 32], strides = [1, 1]} : vector<2x128xf32> to vector<2x32xf32>
    %316 = vector.extract_strided_slice %313 {offsets = [0, 64], sizes = [2, 32], strides = [1, 1]} : vector<2x128xf32> to vector<2x32xf32>
    %317 = vector.extract_strided_slice %313 {offsets = [0, 96], sizes = [2, 32], strides = [1, 1]} : vector<2x128xf32> to vector<2x32xf32>
    %318 = arith.mulf %315, %296 : vector<2x32xf32>
    %319 = arith.mulf %314, %316 : vector<2x32xf32>
    %320 = arith.addf %318, %319 : vector<2x32xf32>
    %321 = math.tanh %320 : vector<2x32xf32>
    %322 = arith.mulf %317, %321 : vector<2x32xf32>
    %323 = vector.shape_cast %322 : vector<2x32xf32> to vector<2x1x32xf32>
    %c0_113 = arith.constant 0 : index
    %324 = arith.index_cast %c3_i32_108 : i32 to index
    %c0_114 = arith.constant 0 : index
    %325 = vector.load %arg6[%c0_113, %324, %c0_114] : memref<2x8x32xf32, #tpu.memory_space<vmem>>, vector<2x1x32xf32>
    tpu.vector_store %arg6[%c0_113, %324, %c0_114], %323 {strides = array<i32>} : memref<2x8x32xf32, #tpu.memory_space<vmem>>, vector<2x1x32xf32>,
    %c4_i32_115 = arith.constant 4 : i32
    %c0_116 = arith.constant 0 : index
    %326 = arith.index_cast %c4_i32_115 : i32 to index
    %c0_117 = arith.constant 0 : index
    %327 = vector.load %arg7[%c0_116, %326, %c0_117] : memref<2x8x128xf32, #tpu.memory_space<vmem>>, vector<2x1x128xf32>
    %328 = vector.shape_cast %327 : vector<2x1x128xf32> to vector<2x128xf32>
    %cst_118 = arith.constant dense<0.000000e+00> : vector<2x128xf32>
    %329 = tpu.matmul %322, %218, %cst_118 {dimension_numbers = #tpu.dot_dimension_numbers<[1], [0], [0], [1], [0, 0, 1, 1], [], []>} : vector<2x32xf32>, vector<32x128xf32>, vector<2x128xf32> -> vector<2x128xf32>
    %330 = arith.addf %328, %329 : vector<2x128xf32>
    %331 = math.tanh %330 : vector<2x128xf32>
    %332 = arith.negf %330 : vector<2x128xf32>
    %333 = math.exp %332 : vector<2x128xf32>
    %cst_119 = arith.constant 1.000000e+00 : f32
    %334 = vector.broadcast %cst_119 : f32 to vector<2x128xf32>
    %335 = arith.addf %334, %333 : vector<2x128xf32>
    %336 = arith.divf %334, %335 : vector<2x128xf32>
    %337 = arith.select %7, %331, %336 : vector<2x128xi1>, vector<2x128xf32>
    %338 = vector.extract_strided_slice %337 {offsets = [0, 0], sizes = [2, 32], strides = [1, 1]} : vector<2x128xf32> to vector<2x32xf32>
    %339 = vector.extract_strided_slice %337 {offsets = [0, 32], sizes = [2, 32], strides = [1, 1]} : vector<2x128xf32> to vector<2x32xf32>
    %340 = vector.extract_strided_slice %337 {offsets = [0, 64], sizes = [2, 32], strides = [1, 1]} : vector<2x128xf32> to vector<2x32xf32>
    %341 = vector.extract_strided_slice %337 {offsets = [0, 96], sizes = [2, 32], strides = [1, 1]} : vector<2x128xf32> to vector<2x32xf32>
    %342 = arith.mulf %339, %320 : vector<2x32xf32>
    %343 = arith.mulf %338, %340 : vector<2x32xf32>
    %344 = arith.addf %342, %343 : vector<2x32xf32>
    %345 = math.tanh %344 : vector<2x32xf32>
    %346 = arith.mulf %341, %345 : vector<2x32xf32>
    %347 = vector.shape_cast %346 : vector<2x32xf32> to vector<2x1x32xf32>
    %c0_120 = arith.constant 0 : index
    %348 = arith.index_cast %c4_i32_115 : i32 to index
    %c0_121 = arith.constant 0 : index
    %349 = vector.load %arg6[%c0_120, %348, %c0_121] : memref<2x8x32xf32, #tpu.memory_space<vmem>>, vector<2x1x32xf32>
    tpu.vector_store %arg6[%c0_120, %348, %c0_121], %347 {strides = array<i32>} : memref<2x8x32xf32, #tpu.memory_space<vmem>>, vector<2x1x32xf32>,
    %c5_i32_122 = arith.constant 5 : i32
    %c0_123 = arith.constant 0 : index
    %350 = arith.index_cast %c5_i32_122 : i32 to index
    %c0_124 = arith.constant 0 : index
    %351 = vector.load %arg7[%c0_123, %350, %c0_124] : memref<2x8x128xf32, #tpu.memory_space<vmem>>, vector<2x1x128xf32>
    %352 = vector.shape_cast %351 : vector<2x1x128xf32> to vector<2x128xf32>
    %cst_125 = arith.constant dense<0.000000e+00> : vector<2x128xf32>
    %353 = tpu.matmul %346, %218, %cst_125 {dimension_numbers = #tpu.dot_dimension_numbers<[1], [0], [0], [1], [0, 0, 1, 1], [], []>} : vector<2x32xf32>, vector<32x128xf32>, vector<2x128xf32> -> vector<2x128xf32>
    %354 = arith.addf %352, %353 : vector<2x128xf32>
    %355 = math.tanh %354 : vector<2x128xf32>
    %356 = arith.negf %354 : vector<2x128xf32>
    %357 = math.exp %356 : vector<2x128xf32>
    %cst_126 = arith.constant 1.000000e+00 : f32
    %358 = vector.broadcast %cst_126 : f32 to vector<2x128xf32>
    %359 = arith.addf %358, %357 : vector<2x128xf32>
    %360 = arith.divf %358, %359 : vector<2x128xf32>
    %361 = arith.select %7, %355, %360 : vector<2x128xi1>, vector<2x128xf32>
    %362 = vector.extract_strided_slice %361 {offsets = [0, 0], sizes = [2, 32], strides = [1, 1]} : vector<2x128xf32> to vector<2x32xf32>
    %363 = vector.extract_strided_slice %361 {offsets = [0, 32], sizes = [2, 32], strides = [1, 1]} : vector<2x128xf32> to vector<2x32xf32>
    %364 = vector.extract_strided_slice %361 {offsets = [0, 64], sizes = [2, 32], strides = [1, 1]} : vector<2x128xf32> to vector<2x32xf32>
    %365 = vector.extract_strided_slice %361 {offsets = [0, 96], sizes = [2, 32], strides = [1, 1]} : vector<2x128xf32> to vector<2x32xf32>
    %366 = arith.mulf %363, %344 : vector<2x32xf32>
    %367 = arith.mulf %362, %364 : vector<2x32xf32>
    %368 = arith.addf %366, %367 : vector<2x32xf32>
    %369 = math.tanh %368 : vector<2x32xf32>
    %370 = arith.mulf %365, %369 : vector<2x32xf32>
    %371 = vector.shape_cast %370 : vector<2x32xf32> to vector<2x1x32xf32>
    %c0_127 = arith.constant 0 : index
    %372 = arith.index_cast %c5_i32_122 : i32 to index
    %c0_128 = arith.constant 0 : index
    %373 = vector.load %arg6[%c0_127, %372, %c0_128] : memref<2x8x32xf32, #tpu.memory_space<vmem>>, vector<2x1x32xf32>
    tpu.vector_store %arg6[%c0_127, %372, %c0_128], %371 {strides = array<i32>} : memref<2x8x32xf32, #tpu.memory_space<vmem>>, vector<2x1x32xf32>,
    %c6_i32_129 = arith.constant 6 : i32
    %c0_130 = arith.constant 0 : index
    %374 = arith.index_cast %c6_i32_129 : i32 to index
    %c0_131 = arith.constant 0 : index
    %375 = vector.load %arg7[%c0_130, %374, %c0_131] : memref<2x8x128xf32, #tpu.memory_space<vmem>>, vector<2x1x128xf32>
    %376 = vector.shape_cast %375 : vector<2x1x128xf32> to vector<2x128xf32>
    %cst_132 = arith.constant dense<0.000000e+00> : vector<2x128xf32>
    %377 = tpu.matmul %370, %218, %cst_132 {dimension_numbers = #tpu.dot_dimension_numbers<[1], [0], [0], [1], [0, 0, 1, 1], [], []>} : vector<2x32xf32>, vector<32x128xf32>, vector<2x128xf32> -> vector<2x128xf32>
    %378 = arith.addf %376, %377 : vector<2x128xf32>
    %379 = math.tanh %378 : vector<2x128xf32>
    %380 = arith.negf %378 : vector<2x128xf32>
    %381 = math.exp %380 : vector<2x128xf32>
    %cst_133 = arith.constant 1.000000e+00 : f32
    %382 = vector.broadcast %cst_133 : f32 to vector<2x128xf32>
    %383 = arith.addf %382, %381 : vector<2x128xf32>
    %384 = arith.divf %382, %383 : vector<2x128xf32>
    %385 = arith.select %7, %379, %384 : vector<2x128xi1>, vector<2x128xf32>
    %386 = vector.extract_strided_slice %385 {offsets = [0, 0], sizes = [2, 32], strides = [1, 1]} : vector<2x128xf32> to vector<2x32xf32>
    %387 = vector.extract_strided_slice %385 {offsets = [0, 32], sizes = [2, 32], strides = [1, 1]} : vector<2x128xf32> to vector<2x32xf32>
    %388 = vector.extract_strided_slice %385 {offsets = [0, 64], sizes = [2, 32], strides = [1, 1]} : vector<2x128xf32> to vector<2x32xf32>
    %389 = vector.extract_strided_slice %385 {offsets = [0, 96], sizes = [2, 32], strides = [1, 1]} : vector<2x128xf32> to vector<2x32xf32>
    %390 = arith.mulf %387, %368 : vector<2x32xf32>
    %391 = arith.mulf %386, %388 : vector<2x32xf32>
    %392 = arith.addf %390, %391 : vector<2x32xf32>
    %393 = math.tanh %392 : vector<2x32xf32>
    %394 = arith.mulf %389, %393 : vector<2x32xf32>
    %395 = vector.shape_cast %394 : vector<2x32xf32> to vector<2x1x32xf32>
    %c0_134 = arith.constant 0 : index
    %396 = arith.index_cast %c6_i32_129 : i32 to index
    %c0_135 = arith.constant 0 : index
    %397 = vector.load %arg6[%c0_134, %396, %c0_135] : memref<2x8x32xf32, #tpu.memory_space<vmem>>, vector<2x1x32xf32>
    tpu.vector_store %arg6[%c0_134, %396, %c0_135], %395 {strides = array<i32>} : memref<2x8x32xf32, #tpu.memory_space<vmem>>, vector<2x1x32xf32>,
    %c7_i32_136 = arith.constant 7 : i32
    %c0_137 = arith.constant 0 : index
    %398 = arith.index_cast %c7_i32_136 : i32 to index
    %c0_138 = arith.constant 0 : index
    %399 = vector.load %arg7[%c0_137, %398, %c0_138] : memref<2x8x128xf32, #tpu.memory_space<vmem>>, vector<2x1x128xf32>
    %400 = vector.shape_cast %399 : vector<2x1x128xf32> to vector<2x128xf32>
    %cst_139 = arith.constant dense<0.000000e+00> : vector<2x128xf32>
    %401 = tpu.matmul %394, %218, %cst_139 {dimension_numbers = #tpu.dot_dimension_numbers<[1], [0], [0], [1], [0, 0, 1, 1], [], []>} : vector<2x32xf32>, vector<32x128xf32>, vector<2x128xf32> -> vector<2x128xf32>
    %402 = arith.addf %400, %401 : vector<2x128xf32>
    %403 = math.tanh %402 : vector<2x128xf32>
    %404 = arith.negf %402 : vector<2x128xf32>
    %405 = math.exp %404 : vector<2x128xf32>
    %cst_140 = arith.constant 1.000000e+00 : f32
    %406 = vector.broadcast %cst_140 : f32 to vector<2x128xf32>
    %407 = arith.addf %406, %405 : vector<2x128xf32>
    %408 = arith.divf %406, %407 : vector<2x128xf32>
    %409 = arith.select %7, %403, %408 : vector<2x128xi1>, vector<2x128xf32>
    %410 = vector.extract_strided_slice %409 {offsets = [0, 0], sizes = [2, 32], strides = [1, 1]} : vector<2x128xf32> to vector<2x32xf32>
    %411 = vector.extract_strided_slice %409 {offsets = [0, 32], sizes = [2, 32], strides = [1, 1]} : vector<2x128xf32> to vector<2x32xf32>
    %412 = vector.extract_strided_slice %409 {offsets = [0, 64], sizes = [2, 32], strides = [1, 1]} : vector<2x128xf32> to vector<2x32xf32>
    %413 = vector.extract_strided_slice %409 {offsets = [0, 96], sizes = [2, 32], strides = [1, 1]} : vector<2x128xf32> to vector<2x32xf32>
    %414 = arith.mulf %411, %392 : vector<2x32xf32>
    %415 = arith.mulf %410, %412 : vector<2x32xf32>
    %416 = arith.addf %414, %415 : vector<2x32xf32>
    %417 = math.tanh %416 : vector<2x32xf32>
    %418 = arith.mulf %413, %417 : vector<2x32xf32>
    %419 = vector.shape_cast %418 : vector<2x32xf32> to vector<2x1x32xf32>
    %c0_141 = arith.constant 0 : index
    %420 = arith.index_cast %c7_i32_136 : i32 to index
    %c0_142 = arith.constant 0 : index
    %421 = vector.load %arg6[%c0_141, %420, %c0_142] : memref<2x8x32xf32, #tpu.memory_space<vmem>>, vector<2x1x32xf32>
    tpu.vector_store %arg6[%c0_141, %420, %c0_142], %419 {strides = array<i32>} : memref<2x8x32xf32, #tpu.memory_space<vmem>>, vector<2x1x32xf32>,
    %c8_i32_143 = arith.constant 8 : i32
    %c0_144 = arith.constant 0 : index
    %c0_145 = arith.constant 0 : index
    %c0_146 = arith.constant 0 : index
    %422 = vector.load %arg6[%c0_144, %c0_145, %c0_146] : memref<2x8x32xf32, #tpu.memory_space<vmem>>, vector<2x8x32xf32>
    %c0_147 = arith.constant 0 : index
    %c0_148 = arith.constant 0 : index
    %c0_149 = arith.constant 0 : index
    %423 = vector.load %arg5[%c0_147, %c0_148, %c0_149] : memref<2x8x32xf32, #tpu.memory_space<vmem>>, vector<2x8x32xf32>
    tpu.vector_store %arg5[%c0_147, %c0_148, %c0_149], %422 {strides = array<i32>} : memref<2x8x32xf32, #tpu.memory_space<vmem>>, vector<2x8x32xf32>,
    return
  }
  func.func @transform_0(%arg0: i32) -> (i32, i32, i32) {
    %c0_i32 = arith.constant 0 : i32
    %c0_i32_0 = arith.constant 0 : i32
    %c0_i32_1 = arith.constant 0 : i32
    return %arg0, %c0_i32, %c0_i32_0 : i32, i32, i32
  }
  func.func @transform_1(%arg0: i32) -> (i32, i32, i32) {
    %c0_i32 = arith.constant 0 : i32
    %c0_i32_0 = arith.constant 0 : i32
    %c0_i32_1 = arith.constant 0 : i32
    %c0_i32_2 = arith.constant 0 : i32
    return %c0_i32, %c0_i32_0, %c0_i32_1 : i32, i32, i32
  }
  func.func @transform_2(%arg0: i32) -> (i32, i32, i32) {
    %c0_i32 = arith.constant 0 : i32
    %c0_i32_0 = arith.constant 0 : i32
    %c0_i32_1 = arith.constant 0 : i32
    %c0_i32_2 = arith.constant 0 : i32
    return %c0_i32, %c0_i32_0, %c0_i32_1 : i32, i32, i32
  }
  func.func @transform_3(%arg0: i32) -> (i32, i32, i32) {
    %c0_i32 = arith.constant 0 : i32
    %c0_i32_0 = arith.constant 0 : i32
    %c0_i32_1 = arith.constant 0 : i32
    %c0_i32_2 = arith.constant 0 : i32
    return %c0_i32, %c0_i32_0, %c0_i32_1 : i32, i32, i32
  }
  func.func @transform_4(%arg0: i32) -> (i32, i32, i32) {
    %c0_i32 = arith.constant 0 : i32
    %c0_i32_0 = arith.constant 0 : i32
    %c0_i32_1 = arith.constant 0 : i32
    return %arg0, %c0_i32, %c0_i32_0 : i32, i32, i32
  }
}

</mosaic_0001>

<llo_original>
// kernel: tpu_custom_call.1
$region0: #{tpu_custom_call.1}
  #allocation0 [shape = 'u32[]', space=smem, size = 0x4, offset = 0x4, fixed_abs, tag = 'smem constant byte address 0x4 - core index']
  #allocation1 [shape = 'u32[144,128]{1,0:T(1,128)}', space=vmem, size = 0x12000, scoped, tag = 'internal scratch']
  #allocation2 [shape = 'f32[2,8,32]{2,1,0:T(8,128)}', space=vmem, size = 0x2000, scoped, tag = 'scratch operand']
  #allocation3 [shape = 'f32[2,8,128]{2,1,0:T(8,128)}', space=vmem, size = 0x2000, scoped, tag = 'scratch operand']
  %s0 = inlined_call_operand.hbm [shape: f32[2,8,32], index: 0, kind: input, shape index: {}]
  %s1 = inlined_call_operand.hbm [shape: f32[2,32,128], index: 1, kind: input, shape index: {}]
  %s2 = inlined_call_operand.hbm [shape: f32[2,32,128], index: 2, kind: input, shape index: {}]
  %s3 = inlined_call_operand.vmem [shape: f32[2,1,128], index: 3, kind: input, shape index: {}]
  %s4 = inlined_call_operand.hbm [shape: f32[2,8,32], index: 4, kind: output, shape index: {}]
  %s5 = sld [smem:[#allocation0]]
  $region38: #{tpu_custom_call.1} parent=0
    _
  %s7 = ssub.s32 1, %s5
  %s8 = scalar_select 0, %s7, %s5
  $region1: #{tpu_custom_call.1} parent=0
    #allocation4 [shape = 'u8[8192]{0}', space=vmem, size = 0x2000, scoped, tag = 'input window, operand 0, single buffered']
    #allocation5 [shape = 's32[1]{0}', space=sflag, size = 0x4, scoped, tag = 'scoped memory for tpu_custom_call.1']
    #allocation6 [shape = 's32[1]{0}', space=sflag, size = 0x4, scoped, tag = 'scoped memory for tpu_custom_call.1']
    #allocation7 [shape = 'u8[32768]{0}', space=vmem, size = 0x8000, scoped, tag = 'input window, operand 1, single buffered']
    #allocation8 [shape = 's32[1]{0}', space=sflag, size = 0x4, scoped, tag = 'scoped memory for tpu_custom_call.1']
    #allocation9 [shape = 'u8[32768]{0}', space=vmem, size = 0x8000, scoped, tag = 'input window, operand 2, single buffered']
    #allocation10 [shape = 'u8[8192]{0}', space=vmem, size = 0x2000, scoped, tag = 'output window, operand 0, single buffered']
    %9 = vsyncpa [#allocation5], 0
    %10 = vsyncpa [#allocation8], 0
    %11 = vsyncpa [#allocation6], 0
    // Predicated region
    $region2: #{tpu_custom_call.1} parent=1 // pred_check
      _
    $region3: #{tpu_custom_call.1} parent=1 // pred_check_branch
      %13 = sbr.rel (0) target = $region5
    $region4: #{tpu_custom_call.1} parent=1 // pred_region
      %s15 = ssub.s32 256, 256
      %16 = vsyncadd [#allocation5], %s15
      %s17 = sshll.u32 [#allocation4], 4
      %s18 = int_to_ptr.vmem [resolvable:$true] %s17
      %23 = dma.hbm_to_vmem [thread:$0]  %s0, 256, %s18, [#allocation5], 128, 128, 8
    $region5: #{tpu_custom_call.1} parent=1 // pred_fallthru
      _
    // Predicated region
    $region6: #{tpu_custom_call.1} parent=1 // pred_check
      _
    $region7: #{tpu_custom_call.1} parent=1 // pred_check_branch
      %25 = sbr.rel (0) target = $region9
    $region8: #{tpu_custom_call.1} parent=1 // pred_region
      %s27 = ssub.s32 1024, 1024
      %28 = vsyncadd [#allocation8], %s27
      %s29 = sshll.u32 [#allocation7], 4
      %s30 = int_to_ptr.vmem [resolvable:$true] %s29
      %35 = dma.hbm_to_vmem [thread:$0]  %s1, 1024, %s30, [#allocation8], 128, 128, 8
    $region9: #{tpu_custom_call.1} parent=1 // pred_fallthru
      _
    // Predicated region
    $region10: #{tpu_custom_call.1} parent=1 // pred_check
      _
    $region11: #{tpu_custom_call.1} parent=1 // pred_check_branch
      %37 = sbr.rel (0) target = $region13
    $region12: #{tpu_custom_call.1} parent=1 // pred_region
      %s39 = ssub.s32 1024, 1024
      %40 = vsyncadd [#allocation8], %s39
      %s41 = sshll.u32 [#allocation9], 4
      %s42 = int_to_ptr.vmem [resolvable:$true] %s41
      %47 = dma.hbm_to_vmem [thread:$0]  %s2, 1024, %s42, [#allocation8], 128, 128, 8
    $region13: #{tpu_custom_call.1} parent=1 // pred_fallthru
      _
    // Predicated region
    $region14: #{tpu_custom_call.1} parent=1 // pred_check
      _
    $region15: #{tpu_custom_call.1} parent=1 // pred_check_branch
      %49 = sbr.rel (0) target = $region17
    $region16: #{tpu_custom_call.1} parent=1 // pred_region
      _
    $region17: #{tpu_custom_call.1} parent=1 // pred_fallthru
      _
    // Predicated region
    $region18: #{tpu_custom_call.1} parent=1 // pred_check
      _
    $region19: #{tpu_custom_call.1} parent=1 // pred_check_branch
      %51 = sbr.rel (0) target = $region21
    $region20: #{tpu_custom_call.1} parent=1 // pred_region
      %52 = dma.done [#allocation5], 256
    $region21: #{tpu_custom_call.1} parent=1 // pred_fallthru
      _
    // Predicated region
    $region22: #{tpu_custom_call.1} parent=1 // pred_check
      _
    $region23: #{tpu_custom_call.1} parent=1 // pred_check_branch
      %54 = sbr.rel (0) target = $region25
    $region24: #{tpu_custom_call.1} parent=1 // pred_region
      %55 = dma.done [#allocation8], 1024
    $region25: #{tpu_custom_call.1} parent=1 // pred_fallthru
      _
    // Predicated region
    $region26: #{tpu_custom_call.1} parent=1 // pred_check
      _
    $region27: #{tpu_custom_call.1} parent=1 // pred_check_branch
      %57 = sbr.rel (0) target = $region29
    $region28: #{tpu_custom_call.1} parent=1 // pred_region
      %58 = dma.done [#allocation8], 1024
    $region29: #{tpu_custom_call.1} parent=1 // pred_fallthru
      _
    %v59 = vld [vmem:[#allocation4] sm:$0xff]
    %v60 = vld [vmem:[#allocation4 + $0x8] sm:$0xff]
    %vm61 = vcmask 261120
    %62 = vst.msk [vmem:[#allocation2] sm:$0xff] %vm61, %v59
    %63 = vst.msk [vmem:[#allocation2 + $0x8] sm:$0xff] %vm61, %v60
    %v64 = vlaneseq
    %v65 = vand.u32 %v64, 127
    %vm66 = vcmp.ge.s32.totalorder %v65, 64
    %vm67 = vcmp.lt.s32.totalorder %v65, 96
    %vm68 = vmand %vm66, %vm67
    %v69 = vld [vmem:[#allocation7] sm:$0xff]
    %v70 = vld [vmem:[#allocation7 + $0x8] sm:$0xff]
    %v71 = vld [vmem:[#allocation7 + $0x10] sm:$0xff]
    %v72 = vld [vmem:[#allocation7 + $0x18] sm:$0xff]
    %v73 = vld [vmem:[#allocation9] sm:$0xff]
    %v74 = vld [vmem:[#allocation9 + $0x8] sm:$0xff]
    %v75 = vld [vmem:[#allocation9 + $0x10] sm:$0xff]
    %v76 = vld [vmem:[#allocation9 + $0x18] sm:$0xff]
    %v77 = vld [vmem:[%s3] sm:$0x1]
    %v78 = vld [vmem:[#allocation2] sm:$0xff]
    %v79 = vld [vmem:[#allocation2 + $0x8] sm:$0xff]
    %v81 = vlaneseq
    %v82 = vshrl.u32 %v81, 7
    %v83 = vsub.s32 0, %v82
    %v84 = vrot.slane %v77, %v83
    %v87 = vsel %vm61, %v78, 0
    %v90 = vsel %vm61, %v79, 0
    %92 = vmatprep.subr.mxu0 0.0
    %93 = vmatpush1.msra.mxu0 %v69
    %94 = vmatprep.subr.mxu0 0.0
    %95 = vmatpush1.msra.mxu0 %v70
    %96 = vmatprep.subr.mxu0 0.0
    %97 = vmatpush1.msra.mxu0 %v71
    %98 = vmatprep.subr.mxu0 0.0
    %99 = vmatpush1.msra.mxu0 %v72
    %100 = vmatprep.subr.mxu0 0.0
    %101 = vmatpush1.msra.mxu0 0.0
    %102 = vmatprep.subr.mxu0 0.0
    %103 = vmatpush1.msra.mxu0 0.0
    %104 = vmatprep.subr.mxu0 0.0
    %105 = vmatpush1.msra.mxu0 0.0
    %106 = vmatprep.subr.mxu0 0.0
    %107 = vmatpush1.msra.mxu0 0.0
    %108 = vmatprep.subr.mxu0 0.0
    %109 = vmatpush1.msra.mxu0 0.0
    %110 = vmatprep.subr.mxu0 0.0
    %111 = vmatpush1.msra.mxu0 0.0
    %112 = vmatprep.subr.mxu0 0.0
    %113 = vmatpush1.msra.mxu0 0.0
    %114 = vmatprep.subr.mxu0 0.0
    %115 = vmatpush1.msra.mxu0 0.0
    %116 = vmatprep.subr.mxu0 0.0
    %117 = vmatpush1.msra.mxu0 0.0
    %118 = vmatprep.subr.mxu0 0.0
    %119 = vmatpush1.msra.mxu0 0.0
    %120 = vmatprep.subr.mxu0 0.0
    %121 = vmatpush1.msra.mxu0 0.0
    %122 = vmatprep.subr.mxu0 0.0
    %123 = vmatpush1.msra.mxu0 0.0
    %124 = vmatprep.subr.mxu0 0.0
    %125 = vmatpush1.msra.mxu0 0.0
    %126 = vmatprep.subr.mxu0 0.0
    %127 = vmatpush1.msra.mxu0 0.0
    %128 = vmatprep.subr.mxu0 0.0
    %129 = vmatpush1.msra.mxu0 0.0
    %130 = vmatprep.subr.mxu0 0.0
    %131 = vmatpush1.msra.mxu0 0.0
    %132 = vmatprep.subr.mxu0 0.0
    %133 = vmatpush1.msra.mxu0 0.0
    %134 = vmatprep.subr.mxu0 0.0
    %135 = vmatpush1.msra.mxu0 0.0
    %136 = vmatprep.subr.mxu0 0.0
    %137 = vmatpush1.msra.mxu0 0.0
    %138 = vmatprep.subr.mxu0 0.0
    %139 = vmatpush1.msra.mxu0 0.0
    %140 = vmatprep.subr.mxu0 0.0
    %141 = vmatpush1.msra.mxu0 0.0
    %142 = vmatprep.subr.mxu0 0.0
    %143 = vmatpush1.msra.mxu0 0.0
    %144 = vmatprep.subr.mxu0 0.0
    %145 = vmatpush1.msra.mxu0 0.0
    %146 = vmatprep.subr.mxu0 0.0
    %147 = vmatpush1.msra.mxu0 0.0
    %148 = vmatprep.subr.mxu0 0.0
    %149 = vmatpush1.msra.mxu0 0.0
    %150 = vmatprep.subr.mxu0 0.0
    %151 = vmatpush1.msra.mxu0 0.0
    %152 = vmatprep.subr.mxu0 0.0
    %153 = vmatpush1.msra.mxu0 0.0
    %154 = vmatprep.subr.mxu0 0.0
    %155 = vmatpush1.msra.mxu0 0.0
    %156 = vmatprep.mubr.f32.mxu0 0.0
    %157 = vmatmul.mubr.f32.gmra.mrb[0].mxu0 %v87
    %v158 = vpop.f32.mrb[0].mxu0
    %v159 = vadd.f32 %v84, %v158
    %v160 = vpop.f32.mrb[0].mxu0
    %161 = vmatprep.mubr.f32.mxu0 0.0
    %162 = vmatmul.mubr.f32.gmra.mrb[0].mxu0 %v90
    %v163 = vpop.f32.mrb[0].mxu0
    %v164 = vadd.f32 %v84, %v163
    %v165 = vpop.f32.mrb[0].mxu0
    %166 = vdwg.mxu0
    %167 = vst [vmem:[#allocation3] sm:$0xff] %v159
    %168 = vst [vmem:[#allocation3 + $0x8] sm:$0xff] %v164
    %v169 = vld [vmem:[#allocation3] sm:$0x1]
    %v170 = vld [vmem:[#allocation3 + $0x8] sm:$0x1]
    %v172 = vsel %vm61, 0.0, 0
    %174 = vmatprep.subr.mxu0 0.0
    %175 = vmatpush1.msra.mxu0 %v73
    %176 = vmatprep.subr.mxu0 0.0
    %177 = vmatpush1.msra.mxu0 %v74
    %178 = vmatprep.subr.mxu0 0.0
    %179 = vmatpush1.msra.mxu0 %v75
    %180 = vmatprep.subr.mxu0 0.0
    %181 = vmatpush1.msra.mxu0 %v76
    %182 = vmatprep.subr.mxu0 0.0
    %183 = vmatpush1.msra.mxu0 0.0
    %184 = vmatprep.subr.mxu0 0.0
    %185 = vmatpush1.msra.mxu0 0.0
    %186 = vmatprep.subr.mxu0 0.0
    %187 = vmatpush1.msra.mxu0 0.0
    %188 = vmatprep.subr.mxu0 0.0
    %189 = vmatpush1.msra.mxu0 0.0
    %190 = vmatprep.subr.mxu0 0.0
    %191 = vmatpush1.msra.mxu0 0.0
    %192 = vmatprep.subr.mxu0 0.0
    %193 = vmatpush1.msra.mxu0 0.0
    %194 = vmatprep.subr.mxu0 0.0
    %195 = vmatpush1.msra.mxu0 0.0
    %196 = vmatprep.subr.mxu0 0.0
    %197 = vmatpush1.msra.mxu0 0.0
    %198 = vmatprep.subr.mxu0 0.0
    %199 = vmatpush1.msra.mxu0 0.0
    %200 = vmatprep.subr.mxu0 0.0
    %201 = vmatpush1.msra.mxu0 0.0
    %202 = vmatprep.subr.mxu0 0.0
    %203 = vmatpush1.msra.mxu0 0.0
    %204 = vmatprep.subr.mxu0 0.0
    %205 = vmatpush1.msra.mxu0 0.0
    %206 = vmatprep.subr.mxu0 0.0
    %207 = vmatpush1.msra.mxu0 0.0
    %208 = vmatprep.subr.mxu0 0.0
    %209 = vmatpush1.msra.mxu0 0.0
    %210 = vmatprep.subr.mxu0 0.0
    %211 = vmatpush1.msra.mxu0 0.0
    %212 = vmatprep.subr.mxu0 0.0
    %213 = vmatpush1.msra.mxu0 0.0
    %214 = vmatprep.subr.mxu0 0.0
    %215 = vmatpush1.msra.mxu0 0.0
    %216 = vmatprep.subr.mxu0 0.0
    %217 = vmatpush1.msra.mxu0 0.0
    %218 = vmatprep.subr.mxu0 0.0
    %219 = vmatpush1.msra.mxu0 0.0
    %220 = vmatprep.subr.mxu0 0.0
    %221 = vmatpush1.msra.mxu0 0.0
    %222 = vmatprep.subr.mxu0 0.0
    %223 = vmatpush1.msra.mxu0 0.0
    %224 = vmatprep.subr.mxu0 0.0
    %225 = vmatpush1.msra.mxu0 0.0
    %226 = vmatprep.subr.mxu0 0.0
    %227 = vmatpush1.msra.mxu0 0.0
    %228 = vmatprep.subr.mxu0 0.0
    %229 = vmatpush1.msra.mxu0 0.0
    %230 = vmatprep.subr.mxu0 0.0
    %231 = vmatpush1.msra.mxu0 0.0
    %232 = vmatprep.subr.mxu0 0.0
    %233 = vmatpush1.msra.mxu0 0.0
    %234 = vmatprep.subr.mxu0 0.0
    %235 = vmatpush1.msra.mxu0 0.0
    %236 = vmatprep.subr.mxu0 0.0
    %237 = vmatpush1.msra.mxu0 0.0
    %238 = vmatprep.mubr.f32.mxu0 0.0
    %239 = vmatmul.mubr.f32.gmra.mrb[0].mxu0 %v172
    %v240 = vpop.f32.mrb[0].mxu0
    %v241 = vadd.f32 0.0, %v240
    %v242 = vpop.f32.mrb[0].mxu0
    %243 = vdwg.mxu0
    %v245 = vrot.slane %v241, 1
    %v248 = vadd.f32 %v169, %v241
    %v249 = vadd.f32 %v170, %v245
    %v250 = vtanh.pop %v248
    %v251 = vtanh.pop %v249
    %v252 = vxor.u32 %v248, 2147483648
    %v253 = vxor.u32 %v249, 2147483648
    %v254 = vmul.f32 %v252, 1.442695
    %v255 = vpow.pop %v254
    %v256 = vmul.f32 %v253, 1.442695
    %v257 = vpow.pop %v256
    %v258 = vadd.f32 %v255, 1.0
    %v259 = vadd.f32 %v257, 1.0
    %v260 = vrcp.pop %v258
    %v261 = vmul.f32 1.0, %v260
    %v262 = vrcp.pop %v259
    %v263 = vmul.f32 1.0, %v262
    %v266 = vrot.slane %v251, 7
    %vm267 = vcmask 1041409
    %v268 = vsel %vm267, %v266, %v250
    %v272 = vrot.slane %v263, 7
    %v273 = vsel %vm267, %v272, %v261
    %v275 = vsel %vm68, %v268, %v273
    %v276 = vmul.f32 %v275, 0.0
    %278 = vrot.lane.b32.xlu0 %v275, 64
    %v279 = vpop.permute.xlu0 %278
    %v281 = vmul.f32 %v275, %v279
    %283 = vrot.lane.b32.xlu0 %v281, 32
    %v284 = vpop.permute.xlu0 %283
    %v286 = vadd.f32 %v276, %v284
    %v287 = vtanh.pop %v286
    %289 = vrot.lane.b32.xlu0 %v287, 64
    %v290 = vpop.permute.xlu0 %289
    %v292 = vmul.f32 %v275, %v290
    %v295 = vunpack.c.l.s4 1966171168
    %v296 = vunpack.c.0.s8 %v295
    %v297 = vlaneseq
    %v298 = vshrl.u32 %v297, 7
    %v299 = vsub.s32 %v296, %v298
    %v300 = vrot.slane %v292, %v299
    %v301 = vcombine.high %v300, %v300
    %v303 = vunpack.c.l.s4 1966171168
    %v304 = vunpack.c.0.s8 %v303
    %v305 = vlaneseq
    %v306 = vshrl.u32 %v305, 7
    %v307 = vsub.s32 %v304, %v306
    %v308 = vrot.slane %v300, %v307
    %v310 = vunpack.c.l.s4 1966171168
    %v311 = vunpack.c.0.s8 %v310
    %v312 = vlaneseq
    %v313 = vshrl.u32 %v312, 7
    %v314 = vsub.s32 %v311, %v313
    %v315 = vrot.slane %v301, %v314
    %v316 = vlaneseq
    %v317 = vshrl.u32 %v316, 7
    %v318 = vsub.s32 0, %v317
    %v319 = vrot.slane %v308, %v318
    %v320 = vlaneseq
    %v321 = vshrl.u32 %v320, 7
    %v322 = vsub.s32 0, %v321
    %v323 = vrot.slane %v315, %v322
    %324 = vrot.lane.b32.xlu0 %v319, 32
    %v325 = vpop.permute.xlu0 %324
    %326 = vrot.lane.b32.xlu0 %v323, 32
    %v327 = vpop.permute.xlu0 %326
    %vm330 = vcmask 253952
    %331 = vst.msk [vmem:[#allocation2] sm:$0x1] %vm330, %v325
    %332 = vst.msk [vmem:[#allocation2 + $0x8] sm:$0x1] %vm330, %v327
    %v333 = vld [vmem:[#allocation3 + $0x1] sm:$0x1]
    %v334 = vld [vmem:[#allocation3 + $0x9] sm:$0x1]
    %335 = vrot.lane.b32.xlu0 %v292, 32
    %v336 = vpop.permute.xlu0 %335
    %v337 = vsel %vm61, %v336, 0
    %339 = vmatprep.subr.mxu0 0.0
    %340 = vmatpush1.msra.mxu0 %v73
    %341 = vmatprep.subr.mxu0 0.0
    %342 = vmatpush1.msra.mxu0 %v74
    %343 = vmatprep.subr.mxu0 0.0
    %344 = vmatpush1.msra.mxu0 %v75
    %345 = vmatprep.subr.mxu0 0.0
    %346 = vmatpush1.msra.mxu0 %v76
    %347 = vmatprep.subr.mxu0 0.0
    %348 = vmatpush1.msra.mxu0 0.0
    %349 = vmatprep.subr.mxu0 0.0
    %350 = vmatpush1.msra.mxu0 0.0
    %351 = vmatprep.subr.mxu0 0.0
    %352 = vmatpush1.msra.mxu0 0.0
    %353 = vmatprep.subr.mxu0 0.0
    %354 = vmatpush1.msra.mxu0 0.0
    %355 = vmatprep.subr.mxu0 0.0
    %356 = vmatpush1.msra.mxu0 0.0
    %357 = vmatprep.subr.mxu0 0.0
    %358 = vmatpush1.msra.mxu0 0.0
    %359 = vmatprep.subr.mxu0 0.0
    %360 = vmatpush1.msra.mxu0 0.0
    %361 = vmatprep.subr.mxu0 0.0
    %362 = vmatpush1.msra.mxu0 0.0
    %363 = vmatprep.subr.mxu0 0.0
    %364 = vmatpush1.msra.mxu0 0.0
    %365 = vmatprep.subr.mxu0 0.0
    %366 = vmatpush1.msra.mxu0 0.0
    %367 = vmatprep.subr.mxu0 0.0
    %368 = vmatpush1.msra.mxu0 0.0
    %369 = vmatprep.subr.mxu0 0.0
    %370 = vmatpush1.msra.mxu0 0.0
    %371 = vmatprep.subr.mxu0 0.0
    %372 = vmatpush1.msra.mxu0 0.0
    %373 = vmatprep.subr.mxu0 0.0
    %374 = vmatpush1.msra.mxu0 0.0
    %375 = vmatprep.subr.mxu0 0.0
    %376 = vmatpush1.msra.mxu0 0.0
    %377 = vmatprep.subr.mxu0 0.0
    %378 = vmatpush1.msra.mxu0 0.0
    %379 = vmatprep.subr.mxu0 0.0
    %380 = vmatpush1.msra.mxu0 0.0
    %381 = vmatprep.subr.mxu0 0.0
    %382 = vmatpush1.msra.mxu0 0.0
    %383 = vmatprep.subr.mxu0 0.0
    %384 = vmatpush1.msra.mxu0 0.0
    %385 = vmatprep.subr.mxu0 0.0
    %386 = vmatpush1.msra.mxu0 0.0
    %387 = vmatprep.subr.mxu0 0.0
    %388 = vmatpush1.msra.mxu0 0.0
    %389 = vmatprep.subr.mxu0 0.0
    %390 = vmatpush1.msra.mxu0 0.0
    %391 = vmatprep.subr.mxu0 0.0
    %392 = vmatpush1.msra.mxu0 0.0
    %393 = vmatprep.subr.mxu0 0.0
    %394 = vmatpush1.msra.mxu0 0.0
    %395 = vmatprep.subr.mxu0 0.0
    %396 = vmatpush1.msra.mxu0 0.0
    %397 = vmatprep.subr.mxu0 0.0
    %398 = vmatpush1.msra.mxu0 0.0
    %399 = vmatprep.subr.mxu0 0.0
    %400 = vmatpush1.msra.mxu0 0.0
    %401 = vmatprep.subr.mxu0 0.0
    %402 = vmatpush1.msra.mxu0 0.0
    %403 = vmatprep.mubr.f32.mxu0 0.0
    %404 = vmatmul.mubr.f32.gmra.mrb[0].mxu0 %v337
    %v405 = vpop.f32.mrb[0].mxu0
    %v406 = vadd.f32 0.0, %v405
    %v407 = vpop.f32.mrb[0].mxu0
    %408 = vdwg.mxu0
    %v410 = vrot.slane %v406, 1
    %v413 = vadd.f32 %v333, %v406
    %v414 = vadd.f32 %v334, %v410
    %v415 = vtanh.pop %v413
    %v416 = vtanh.pop %v414
    %v417 = vxor.u32 %v413, 2147483648
    %v418 = vxor.u32 %v414, 2147483648
    %v419 = vmul.f32 %v417, 1.442695
    %v420 = vpow.pop %v419
    %v421 = vmul.f32 %v418, 1.442695
    %v422 = vpow.pop %v421
    %v423 = vadd.f32 %v420, 1.0
    %v424 = vadd.f32 %v422, 1.0
    %v425 = vrcp.pop %v423
    %v426 = vmul.f32 1.0, %v425
    %v427 = vrcp.pop %v424
    %v428 = vmul.f32 1.0, %v427
    %v431 = vrot.slane %v416, 7
    %v432 = vsel %vm267, %v431, %v415
    %v436 = vrot.slane %v428, 7
    %v437 = vsel %vm267, %v436, %v426
    %v439 = vsel %vm68, %v432, %v437
    %v440 = vmul.f32 %v439, %v286
    %442 = vrot.lane.b32.xlu0 %v439, 64
    %v443 = vpop.permute.xlu0 %442
    %v445 = vmul.f32 %v439, %v443
    %447 = vrot.lane.b32.xlu0 %v445, 32
    %v448 = vpop.permute.xlu0 %447
    %v450 = vadd.f32 %v440, %v448
    %v451 = vtanh.pop %v450
    %453 = vrot.lane.b32.xlu0 %v451, 64
    %v454 = vpop.permute.xlu0 %453
    %v456 = vmul.f32 %v439, %v454
    %v459 = vunpack.c.l.s4 1966171168
    %v460 = vunpack.c.0.s8 %v459
    %v461 = vlaneseq
    %v462 = vshrl.u32 %v461, 7
    %v463 = vsub.s32 %v460, %v462
    %v464 = vrot.slane %v456, %v463
    %v465 = vcombine.high %v464, %v464
    %v467 = vunpack.c.l.s4 1966171168
    %v468 = vunpack.c.0.s8 %v467
    %v469 = vlaneseq
    %v470 = vshrl.u32 %v469, 7
    %v471 = vsub.s32 %v468, %v470
    %v472 = vrot.slane %v464, %v471
    %v474 = vunpack.c.l.s4 1966171168
    %v475 = vunpack.c.0.s8 %v474
    %v476 = vlaneseq
    %v477 = vshrl.u32 %v476, 7
    %v478 = vsub.s32 %v475, %v477
    %v479 = vrot.slane %v465, %v478
    %v480 = vlaneseq
    %v481 = vshrl.u32 %v480, 7
    %v482 = vsub.s32 0, %v481
    %v483 = vrot.slane %v472, %v482
    %v484 = vlaneseq
    %v485 = vshrl.u32 %v484, 7
    %v486 = vsub.s32 0, %v485
    %v487 = vrot.slane %v479, %v486
    %488 = vrot.lane.b32.xlu0 %v483, 32
    %v489 = vpop.permute.xlu0 %488
    %490 = vrot.lane.b32.xlu0 %v487, 32
    %v491 = vpop.permute.xlu0 %490
    %494 = vst.msk [vmem:[#allocation2 + $0x1] sm:$0x1] %vm330, %v489
    %495 = vst.msk [vmem:[#allocation2 + $0x9] sm:$0x1] %vm330, %v491
    %v496 = vld [vmem:[#allocation3 + $0x2] sm:$0x1]
    %v497 = vld [vmem:[#allocation3 + $0xa] sm:$0x1]
    %498 = vrot.lane.b32.xlu0 %v456, 32
    %v499 = vpop.permute.xlu0 %498
    %v500 = vsel %vm61, %v499, 0
    %502 = vmatprep.subr.mxu0 0.0
    %503 = vmatpush1.msra.mxu0 %v73
    %504 = vmatprep.subr.mxu0 0.0
    %505 = vmatpush1.msra.mxu0 %v74
    %506 = vmatprep.subr.mxu0 0.0
    %507 = vmatpush1.msra.mxu0 %v75
    %508 = vmatprep.subr.mxu0 0.0
    %509 = vmatpush1.msra.mxu0 %v76
    %510 = vmatprep.subr.mxu0 0.0
    %511 = vmatpush1.msra.mxu0 0.0
    %512 = vmatprep.subr.mxu0 0.0
    %513 = vmatpush1.msra.mxu0 0.0
    %514 = vmatprep.subr.mxu0 0.0
    %515 = vmatpush1.msra.mxu0 0.0
    %516 = vmatprep.subr.mxu0 0.0
    %517 = vmatpush1.msra.mxu0 0.0
    %518 = vmatprep.subr.mxu0 0.0
    %519 = vmatpush1.msra.mxu0 0.0
    %520 = vmatprep.subr.mxu0 0.0
    %521 = vmatpush1.msra.mxu0 0.0
    %522 = vmatprep.subr.mxu0 0.0
    %523 = vmatpush1.msra.mxu0 0.0
    %524 = vmatprep.subr.mxu0 0.0
    %525 = vmatpush1.msra.mxu0 0.0
    %526 = vmatprep.subr.mxu0 0.0
    %527 = vmatpush1.msra.mxu0 0.0
    %528 = vmatprep.subr.mxu0 0.0
    %529 = vmatpush1.msra.mxu0 0.0
    %530 = vmatprep.subr.mxu0 0.0
    %531 = vmatpush1.msra.mxu0 0.0
    %532 = vmatprep.subr.mxu0 0.0
    %533 = vmatpush1.msra.mxu0 0.0
    %534 = vmatprep.subr.mxu0 0.0
    %535 = vmatpush1.msra.mxu0 0.0
    %536 = vmatprep.subr.mxu0 0.0
    %537 = vmatpush1.msra.mxu0 0.0
    %538 = vmatprep.subr.mxu0 0.0
    %539 = vmatpush1.msra.mxu0 0.0
    %540 = vmatprep.subr.mxu0 0.0
    %541 = vmatpush1.msra.mxu0 0.0
    %542 = vmatprep.subr.mxu0 0.0
    %543 = vmatpush1.msra.mxu0 0.0
    %544 = vmatprep.subr.mxu0 0.0
    %545 = vmatpush1.msra.mxu0 0.0
    %546 = vmatprep.subr.mxu0 0.0
    %547 = vmatpush1.msra.mxu0 0.0
    %548 = vmatprep.subr.mxu0 0.0
    %549 = vmatpush1.msra.mxu0 0.0
    %550 = vmatprep.subr.mxu0 0.0
    %551 = vmatpush1.msra.mxu0 0.0
    %552 = vmatprep.subr.mxu0 0.0
    %553 = vmatpush1.msra.mxu0 0.0
    %554 = vmatprep.subr.mxu0 0.0
    %555 = vmatpush1.msra.mxu0 0.0
    %556 = vmatprep.subr.mxu0 0.0
    %557 = vmatpush1.msra.mxu0 0.0
    %558 = vmatprep.subr.mxu0 0.0
    %559 = vmatpush1.msra.mxu0 0.0
    %560 = vmatprep.subr.mxu0 0.0
    %561 = vmatpush1.msra.mxu0 0.0
    %562 = vmatprep.subr.mxu0 0.0
    %563 = vmatpush1.msra.mxu0 0.0
    %564 = vmatprep.subr.mxu0 0.0
    %565 = vmatpush1.msra.mxu0 0.0
    %566 = vmatprep.mubr.f32.mxu0 0.0
    %567 = vmatmul.mubr.f32.gmra.mrb[0].mxu0 %v500
    %v568 = vpop.f32.mrb[0].mxu0
    %v569 = vadd.f32 0.0, %v568
    %v570 = vpop.f32.mrb[0].mxu0
    %571 = vdwg.mxu0
    %v573 = vrot.slane %v569, 1
    %v576 = vadd.f32 %v496, %v569
    %v577 = vadd.f32 %v497, %v573
    %v578 = vtanh.pop %v576
    %v579 = vtanh.pop %v577
    %v580 = vxor.u32 %v576, 2147483648
    %v581 = vxor.u32 %v577, 2147483648
    %v582 = vmul.f32 %v580, 1.442695
    %v583 = vpow.pop %v582
    %v584 = vmul.f32 %v581, 1.442695
    %v585 = vpow.pop %v584
    %v586 = vadd.f32 %v583, 1.0
    %v587 = vadd.f32 %v585, 1.0
    %v588 = vrcp.pop %v586
    %v589 = vmul.f32 1.0, %v588
    %v590 = vrcp.pop %v587
    %v591 = vmul.f32 1.0, %v590
    %v594 = vrot.slane %v579, 7
    %v595 = vsel %vm267, %v594, %v578
    %v599 = vrot.slane %v591, 7
    %v600 = vsel %vm267, %v599, %v589
    %v602 = vsel %vm68, %v595, %v600
    %v603 = vmul.f32 %v602, %v450
    %605 = vrot.lane.b32.xlu0 %v602, 64
    %v606 = vpop.permute.xlu0 %605
    %v608 = vmul.f32 %v602, %v606
    %610 = vrot.lane.b32.xlu0 %v608, 32
    %v611 = vpop.permute.xlu0 %610
    %v613 = vadd.f32 %v603, %v611
    %v614 = vtanh.pop %v613
    %616 = vrot.lane.b32.xlu0 %v614, 64
    %v617 = vpop.permute.xlu0 %616
    %v619 = vmul.f32 %v602, %v617
    %v622 = vunpack.c.l.s4 1966171168
    %v623 = vunpack.c.0.s8 %v622
    %v624 = vlaneseq
    %v625 = vshrl.u32 %v624, 7
    %v626 = vsub.s32 %v623, %v625
    %v627 = vrot.slane %v619, %v626
    %v628 = vcombine.high %v627, %v627
    %v630 = vunpack.c.l.s4 1966171168
    %v631 = vunpack.c.0.s8 %v630
    %v632 = vlaneseq
    %v633 = vshrl.u32 %v632, 7
    %v634 = vsub.s32 %v631, %v633
    %v635 = vrot.slane %v627, %v634
    %v637 = vunpack.c.l.s4 1966171168
    %v638 = vunpack.c.0.s8 %v637
    %v639 = vlaneseq
    %v640 = vshrl.u32 %v639, 7
    %v641 = vsub.s32 %v638, %v640
    %v642 = vrot.slane %v628, %v641
    %v643 = vlaneseq
    %v644 = vshrl.u32 %v643, 7
    %v645 = vsub.s32 0, %v644
    %v646 = vrot.slane %v635, %v645
    %v647 = vlaneseq
    %v648 = vshrl.u32 %v647, 7
    %v649 = vsub.s32 0, %v648
    %v650 = vrot.slane %v642, %v649
    %651 = vrot.lane.b32.xlu0 %v646, 32
    %v652 = vpop.permute.xlu0 %651
    %653 = vrot.lane.b32.xlu0 %v650, 32
    %v654 = vpop.permute.xlu0 %653
    %657 = vst.msk [vmem:[#allocation2 + $0x2] sm:$0x1] %vm330, %v652
    %658 = vst.msk [vmem:[#allocation2 + $0xa] sm:$0x1] %vm330, %v654
    %v659 = vld [vmem:[#allocation3 + $0x3] sm:$0x1]
    %v660 = vld [vmem:[#allocation3 + $0xb] sm:$0x1]
    %661 = vrot.lane.b32.xlu0 %v619, 32
    %v662 = vpop.permute.xlu0 %661
    %v663 = vsel %vm61, %v662, 0
    %665 = vmatprep.subr.mxu0 0.0
    %666 = vmatpush1.msra.mxu0 %v73
    %667 = vmatprep.subr.mxu0 0.0
    %668 = vmatpush1.msra.mxu0 %v74
    %669 = vmatprep.subr.mxu0 0.0
    %670 = vmatpush1.msra.mxu0 %v75
    %671 = vmatprep.subr.mxu0 0.0
    %672 = vmatpush1.msra.mxu0 %v76
    %673 = vmatprep.subr.mxu0 0.0
    %674 = vmatpush1.msra.mxu0 0.0
    %675 = vmatprep.subr.mxu0 0.0
    %676 = vmatpush1.msra.mxu0 0.0
    %677 = vmatprep.subr.mxu0 0.0
    %678 = vmatpush1.msra.mxu0 0.0
    %679 = vmatprep.subr.mxu0 0.0
    %680 = vmatpush1.msra.mxu0 0.0
    %681 = vmatprep.subr.mxu0 0.0
    %682 = vmatpush1.msra.mxu0 0.0
    %683 = vmatprep.subr.mxu0 0.0
    %684 = vmatpush1.msra.mxu0 0.0
    %685 = vmatprep.subr.mxu0 0.0
    %686 = vmatpush1.msra.mxu0 0.0
    %687 = vmatprep.subr.mxu0 0.0
    %688 = vmatpush1.msra.mxu0 0.0
    %689 = vmatprep.subr.mxu0 0.0
    %690 = vmatpush1.msra.mxu0 0.0
    %691 = vmatprep.subr.mxu0 0.0
    %692 = vmatpush1.msra.mxu0 0.0
    %693 = vmatprep.subr.mxu0 0.0
    %694 = vmatpush1.msra.mxu0 0.0
    %695 = vmatprep.subr.mxu0 0.0
    %696 = vmatpush1.msra.mxu0 0.0
    %697 = vmatprep.subr.mxu0 0.0
    %698 = vmatpush1.msra.mxu0 0.0
    %699 = vmatprep.subr.mxu0 0.0
    %700 = vmatpush1.msra.mxu0 0.0
    %701 = vmatprep.subr.mxu0 0.0
    %702 = vmatpush1.msra.mxu0 0.0
    %703 = vmatprep.subr.mxu0 0.0
    %704 = vmatpush1.msra.mxu0 0.0
    %705 = vmatprep.subr.mxu0 0.0
    %706 = vmatpush1.msra.mxu0 0.0
    %707 = vmatprep.subr.mxu0 0.0
    %708 = vmatpush1.msra.mxu0 0.0
    %709 = vmatprep.subr.mxu0 0.0
    %710 = vmatpush1.msra.mxu0 0.0
    %711 = vmatprep.subr.mxu0 0.0
    %712 = vmatpush1.msra.mxu0 0.0
    %713 = vmatprep.subr.mxu0 0.0
    %714 = vmatpush1.msra.mxu0 0.0
    %715 = vmatprep.subr.mxu0 0.0
    %716 = vmatpush1.msra.mxu0 0.0
    %717 = vmatprep.subr.mxu0 0.0
    %718 = vmatpush1.msra.mxu0 0.0
    %719 = vmatprep.subr.mxu0 0.0
    %720 = vmatpush1.msra.mxu0 0.0
    %721 = vmatprep.subr.mxu0 0.0
    %722 = vmatpush1.msra.mxu0 0.0
    %723 = vmatprep.subr.mxu0 0.0
    %724 = vmatpush1.msra.mxu0 0.0
    %725 = vmatprep.subr.mxu0 0.0
    %726 = vmatpush1.msra.mxu0 0.0
    %727 = vmatprep.subr.mxu0 0.0
    %728 = vmatpush1.msra.mxu0 0.0
    %729 = vmatprep.mubr.f32.mxu0 0.0
    %730 = vmatmul.mubr.f32.gmra.mrb[0].mxu0 %v663
    %v731 = vpop.f32.mrb[0].mxu0
    %v732 = vadd.f32 0.0, %v731
    %v733 = vpop.f32.mrb[0].mxu0
    %734 = vdwg.mxu0
    %v736 = vrot.slane %v732, 1
    %v739 = vadd.f32 %v659, %v732
    %v740 = vadd.f32 %v660, %v736
    %v741 = vtanh.pop %v739
    %v742 = vtanh.pop %v740
    %v743 = vxor.u32 %v739, 2147483648
    %v744 = vxor.u32 %v740, 2147483648
    %v745 = vmul.f32 %v743, 1.442695
    %v746 = vpow.pop %v745
    %v747 = vmul.f32 %v744, 1.442695
    %v748 = vpow.pop %v747
    %v749 = vadd.f32 %v746, 1.0
    %v750 = vadd.f32 %v748, 1.0
    %v751 = vrcp.pop %v749
    %v752 = vmul.f32 1.0, %v751
    %v753 = vrcp.pop %v750
    %v754 = vmul.f32 1.0, %v753
    %v757 = vrot.slane %v742, 7
    %v758 = vsel %vm267, %v757, %v741
    %v762 = vrot.slane %v754, 7
    %v763 = vsel %vm267, %v762, %v752
    %v765 = vsel %vm68, %v758, %v763
    %v766 = vmul.f32 %v765, %v613
    %768 = vrot.lane.b32.xlu0 %v765, 64
    %v769 = vpop.permute.xlu0 %768
    %v771 = vmul.f32 %v765, %v769
    %773 = vrot.lane.b32.xlu0 %v771, 32
    %v774 = vpop.permute.xlu0 %773
    %v776 = vadd.f32 %v766, %v774
    %v777 = vtanh.pop %v776
    %779 = vrot.lane.b32.xlu0 %v777, 64
    %v780 = vpop.permute.xlu0 %779
    %v782 = vmul.f32 %v765, %v780
    %v785 = vunpack.c.l.s4 1966171168
    %v786 = vunpack.c.0.s8 %v785
    %v787 = vlaneseq
    %v788 = vshrl.u32 %v787, 7
    %v789 = vsub.s32 %v786, %v788
    %v790 = vrot.slane %v782, %v789
    %v791 = vcombine.high %v790, %v790
    %v793 = vunpack.c.l.s4 1966171168
    %v794 = vunpack.c.0.s8 %v793
    %v795 = vlaneseq
    %v796 = vshrl.u32 %v795, 7
    %v797 = vsub.s32 %v794, %v796
    %v798 = vrot.slane %v790, %v797
    %v800 = vunpack.c.l.s4 1966171168
    %v801 = vunpack.c.0.s8 %v800
    %v802 = vlaneseq
    %v803 = vshrl.u32 %v802, 7
    %v804 = vsub.s32 %v801, %v803
    %v805 = vrot.slane %v791, %v804
    %v806 = vlaneseq
    %v807 = vshrl.u32 %v806, 7
    %v808 = vsub.s32 0, %v807
    %v809 = vrot.slane %v798, %v808
    %v810 = vlaneseq
    %v811 = vshrl.u32 %v810, 7
    %v812 = vsub.s32 0, %v811
    %v813 = vrot.slane %v805, %v812
    %814 = vrot.lane.b32.xlu0 %v809, 32
    %v815 = vpop.permute.xlu0 %814
    %816 = vrot.lane.b32.xlu0 %v813, 32
    %v817 = vpop.permute.xlu0 %816
    %820 = vst.msk [vmem:[#allocation2 + $0x3] sm:$0x1] %vm330, %v815
    %821 = vst.msk [vmem:[#allocation2 + $0xb] sm:$0x1] %vm330, %v817
    %v822 = vld [vmem:[#allocation3 + $0x4] sm:$0x1]
    %v823 = vld [vmem:[#allocation3 + $0xc] sm:$0x1]
    %824 = vrot.lane.b32.xlu0 %v782, 32
    %v825 = vpop.permute.xlu0 %824
    %v826 = vsel %vm61, %v825, 0
    %828 = vmatprep.subr.mxu0 0.0
    %829 = vmatpush1.msra.mxu0 %v73
    %830 = vmatprep.subr.mxu0 0.0
    %831 = vmatpush1.msra.mxu0 %v74
    %832 = vmatprep.subr.mxu0 0.0
    %833 = vmatpush1.msra.mxu0 %v75
    %834 = vmatprep.subr.mxu0 0.0
    %835 = vmatpush1.msra.mxu0 %v76
    %836 = vmatprep.subr.mxu0 0.0
    %837 = vmatpush1.msra.mxu0 0.0
    %838 = vmatprep.subr.mxu0 0.0
    %839 = vmatpush1.msra.mxu0 0.0
    %840 = vmatprep.subr.mxu0 0.0
    %841 = vmatpush1.msra.mxu0 0.0
    %842 = vmatprep.subr.mxu0 0.0
    %843 = vmatpush1.msra.mxu0 0.0
    %844 = vmatprep.subr.mxu0 0.0
    %845 = vmatpush1.msra.mxu0 0.0
    %846 = vmatprep.subr.mxu0 0.0
    %847 = vmatpush1.msra.mxu0 0.0
    %848 = vmatprep.subr.mxu0 0.0
    %849 = vmatpush1.msra.mxu0 0.0
    %850 = vmatprep.subr.mxu0 0.0
    %851 = vmatpush1.msra.mxu0 0.0
    %852 = vmatprep.subr.mxu0 0.0
    %853 = vmatpush1.msra.mxu0 0.0
    %854 = vmatprep.subr.mxu0 0.0
    %855 = vmatpush1.msra.mxu0 0.0
    %856 = vmatprep.subr.mxu0 0.0
    %857 = vmatpush1.msra.mxu0 0.0
    %858 = vmatprep.subr.mxu0 0.0
    %859 = vmatpush1.msra.mxu0 0.0
    %860 = vmatprep.subr.mxu0 0.0
    %861 = vmatpush1.msra.mxu0 0.0
    %862 = vmatprep.subr.mxu0 0.0
    %863 = vmatpush1.msra.mxu0 0.0
    %864 = vmatprep.subr.mxu0 0.0
    %865 = vmatpush1.msra.mxu0 0.0
    %866 = vmatprep.subr.mxu0 0.0
    %867 = vmatpush1.msra.mxu0 0.0
    %868 = vmatprep.subr.mxu0 0.0
    %869 = vmatpush1.msra.mxu0 0.0
    %870 = vmatprep.subr.mxu0 0.0
    %871 = vmatpush1.msra.mxu0 0.0
    %872 = vmatprep.subr.mxu0 0.0
    %873 = vmatpush1.msra.mxu0 0.0
    %874 = vmatprep.subr.mxu0 0.0
    %875 = vmatpush1.msra.mxu0 0.0
    %876 = vmatprep.subr.mxu0 0.0
    %877 = vmatpush1.msra.mxu0 0.0
    %878 = vmatprep.subr.mxu0 0.0
    %879 = vmatpush1.msra.mxu0 0.0
    %880 = vmatprep.subr.mxu0 0.0
    %881 = vmatpush1.msra.mxu0 0.0
    %882 = vmatprep.subr.mxu0 0.0
    %883 = vmatpush1.msra.mxu0 0.0
    %884 = vmatprep.subr.mxu0 0.0
    %885 = vmatpush1.msra.mxu0 0.0
    %886 = vmatprep.subr.mxu0 0.0
    %887 = vmatpush1.msra.mxu0 0.0
    %888 = vmatprep.subr.mxu0 0.0
    %889 = vmatpush1.msra.mxu0 0.0
    %890 = vmatprep.subr.mxu0 0.0
    %891 = vmatpush1.msra.mxu0 0.0
    %892 = vmatprep.mubr.f32.mxu0 0.0
    %893 = vmatmul.mubr.f32.gmra.mrb[0].mxu0 %v826
    %v894 = vpop.f32.mrb[0].mxu0
    %v895 = vadd.f32 0.0, %v894
    %v896 = vpop.f32.mrb[0].mxu0
    %897 = vdwg.mxu0
    %v899 = vrot.slane %v895, 1
    %v902 = vadd.f32 %v822, %v895
    %v903 = vadd.f32 %v823, %v899
    %v904 = vtanh.pop %v902
    %v905 = vtanh.pop %v903
    %v906 = vxor.u32 %v902, 2147483648
    %v907 = vxor.u32 %v903, 2147483648
    %v908 = vmul.f32 %v906, 1.442695
    %v909 = vpow.pop %v908
    %v910 = vmul.f32 %v907, 1.442695
    %v911 = vpow.pop %v910
    %v912 = vadd.f32 %v909, 1.0
    %v913 = vadd.f32 %v911, 1.0
    %v914 = vrcp.pop %v912
    %v915 = vmul.f32 1.0, %v914
    %v916 = vrcp.pop %v913
    %v917 = vmul.f32 1.0, %v916
    %v920 = vrot.slane %v905, 7
    %v921 = vsel %vm267, %v920, %v904
    %v925 = vrot.slane %v917, 7
    %v926 = vsel %vm267, %v925, %v915
    %v928 = vsel %vm68, %v921, %v926
    %v929 = vmul.f32 %v928, %v776
    %931 = vrot.lane.b32.xlu0 %v928, 64
    %v932 = vpop.permute.xlu0 %931
    %v934 = vmul.f32 %v928, %v932
    %936 = vrot.lane.b32.xlu0 %v934, 32
    %v937 = vpop.permute.xlu0 %936
    %v939 = vadd.f32 %v929, %v937
    %v940 = vtanh.pop %v939
    %942 = vrot.lane.b32.xlu0 %v940, 64
    %v943 = vpop.permute.xlu0 %942
    %v945 = vmul.f32 %v928, %v943
    %v948 = vunpack.c.l.s4 1966171168
    %v949 = vunpack.c.0.s8 %v948
    %v950 = vlaneseq
    %v951 = vshrl.u32 %v950, 7
    %v952 = vsub.s32 %v949, %v951
    %v953 = vrot.slane %v945, %v952
    %v954 = vcombine.high %v953, %v953
    %v956 = vunpack.c.l.s4 1966171168
    %v957 = vunpack.c.0.s8 %v956
    %v958 = vlaneseq
    %v959 = vshrl.u32 %v958, 7
    %v960 = vsub.s32 %v957, %v959
    %v961 = vrot.slane %v953, %v960
    %v963 = vunpack.c.l.s4 1966171168
    %v964 = vunpack.c.0.s8 %v963
    %v965 = vlaneseq
    %v966 = vshrl.u32 %v965, 7
    %v967 = vsub.s32 %v964, %v966
    %v968 = vrot.slane %v954, %v967
    %v969 = vlaneseq
    %v970 = vshrl.u32 %v969, 7
    %v971 = vsub.s32 0, %v970
    %v972 = vrot.slane %v961, %v971
    %v973 = vlaneseq
    %v974 = vshrl.u32 %v973, 7
    %v975 = vsub.s32 0, %v974
    %v976 = vrot.slane %v968, %v975
    %977 = vrot.lane.b32.xlu0 %v972, 32
    %v978 = vpop.permute.xlu0 %977
    %979 = vrot.lane.b32.xlu0 %v976, 32
    %v980 = vpop.permute.xlu0 %979
    %983 = vst.msk [vmem:[#allocation2 + $0x4] sm:$0x1] %vm330, %v978
    %984 = vst.msk [vmem:[#allocation2 + $0xc] sm:$0x1] %vm330, %v980
    %v985 = vld [vmem:[#allocation3 + $0x5] sm:$0x1]
    %v986 = vld [vmem:[#allocation3 + $0xd] sm:$0x1]
    %987 = vrot.lane.b32.xlu0 %v945, 32
    %v988 = vpop.permute.xlu0 %987
    %v989 = vsel %vm61, %v988, 0
    %991 = vmatprep.subr.mxu0 0.0
    %992 = vmatpush1.msra.mxu0 %v73
    %993 = vmatprep.subr.mxu0 0.0
    %994 = vmatpush1.msra.mxu0 %v74
    %995 = vmatprep.subr.mxu0 0.0
    %996 = vmatpush1.msra.mxu0 %v75
    %997 = vmatprep.subr.mxu0 0.0
    %998 = vmatpush1.msra.mxu0 %v76
    %999 = vmatprep.subr.mxu0 0.0
    %1000 = vmatpush1.msra.mxu0 0.0
    %1001 = vmatprep.subr.mxu0 0.0
    %1002 = vmatpush1.msra.mxu0 0.0
    %1003 = vmatprep.subr.mxu0 0.0
    %1004 = vmatpush1.msra.mxu0 0.0
    %1005 = vmatprep.subr.mxu0 0.0
    %1006 = vmatpush1.msra.mxu0 0.0
    %1007 = vmatprep.subr.mxu0 0.0
    %1008 = vmatpush1.msra.mxu0 0.0
    %1009 = vmatprep.subr.mxu0 0.0
    %1010 = vmatpush1.msra.mxu0 0.0
    %1011 = vmatprep.subr.mxu0 0.0
    %1012 = vmatpush1.msra.mxu0 0.0
    %1013 = vmatprep.subr.mxu0 0.0
    %1014 = vmatpush1.msra.mxu0 0.0
    %1015 = vmatprep.subr.mxu0 0.0
    %1016 = vmatpush1.msra.mxu0 0.0
    %1017 = vmatprep.subr.mxu0 0.0
    %1018 = vmatpush1.msra.mxu0 0.0
    %1019 = vmatprep.subr.mxu0 0.0
    %1020 = vmatpush1.msra.mxu0 0.0
    %1021 = vmatprep.subr.mxu0 0.0
    %1022 = vmatpush1.msra.mxu0 0.0
    %1023 = vmatprep.subr.mxu0 0.0
    %1024 = vmatpush1.msra.mxu0 0.0
    %1025 = vmatprep.subr.mxu0 0.0
    %1026 = vmatpush1.msra.mxu0 0.0
    %1027 = vmatprep.subr.mxu0 0.0
    %1028 = vmatpush1.msra.mxu0 0.0
    %1029 = vmatprep.subr.mxu0 0.0
    %1030 = vmatpush1.msra.mxu0 0.0
    %1031 = vmatprep.subr.mxu0 0.0
    %1032 = vmatpush1.msra.mxu0 0.0
    %1033 = vmatprep.subr.mxu0 0.0
    %1034 = vmatpush1.msra.mxu0 0.0
    %1035 = vmatprep.subr.mxu0 0.0
    %1036 = vmatpush1.msra.mxu0 0.0
    %1037 = vmatprep.subr.mxu0 0.0
    %1038 = vmatpush1.msra.mxu0 0.0
    %1039 = vmatprep.subr.mxu0 0.0
    %1040 = vmatpush1.msra.mxu0 0.0
    %1041 = vmatprep.subr.mxu0 0.0
    %1042 = vmatpush1.msra.mxu0 0.0
    %1043 = vmatprep.subr.mxu0 0.0
    %1044 = vmatpush1.msra.mxu0 0.0
    %1045 = vmatprep.subr.mxu0 0.0
    %1046 = vmatpush1.msra.mxu0 0.0
    %1047 = vmatprep.subr.mxu0 0.0
    %1048 = vmatpush1.msra.mxu0 0.0
    %1049 = vmatprep.subr.mxu0 0.0
    %1050 = vmatpush1.msra.mxu0 0.0
    %1051 = vmatprep.subr.mxu0 0.0
    %1052 = vmatpush1.msra.mxu0 0.0
    %1053 = vmatprep.subr.mxu0 0.0
    %1054 = vmatpush1.msra.mxu0 0.0
    %1055 = vmatprep.mubr.f32.mxu0 0.0
    %1056 = vmatmul.mubr.f32.gmra.mrb[0].mxu0 %v989
    %v1057 = vpop.f32.mrb[0].mxu0
    %v1058 = vadd.f32 0.0, %v1057
    %v1059 = vpop.f32.mrb[0].mxu0
    %1060 = vdwg.mxu0
    %v1062 = vrot.slane %v1058, 1
    %v1065 = vadd.f32 %v985, %v1058
    %v1066 = vadd.f32 %v986, %v1062
    %v1067 = vtanh.pop %v1065
    %v1068 = vtanh.pop %v1066
    %v1069 = vxor.u32 %v1065, 2147483648
    %v1070 = vxor.u32 %v1066, 2147483648
    %v1071 = vmul.f32 %v1069, 1.442695
    %v1072 = vpow.pop %v1071
    %v1073 = vmul.f32 %v1070, 1.442695
    %v1074 = vpow.pop %v1073
    %v1075 = vadd.f32 %v1072, 1.0
    %v1076 = vadd.f32 %v1074, 1.0
    %v1077 = vrcp.pop %v1075
    %v1078 = vmul.f32 1.0, %v1077
    %v1079 = vrcp.pop %v1076
    %v1080 = vmul.f32 1.0, %v1079
    %v1083 = vrot.slane %v1068, 7
    %v1084 = vsel %vm267, %v1083, %v1067
    %v1088 = vrot.slane %v1080, 7
    %v1089 = vsel %vm267, %v1088, %v1078
    %v1091 = vsel %vm68, %v1084, %v1089
    %v1092 = vmul.f32 %v1091, %v939
    %1094 = vrot.lane.b32.xlu0 %v1091, 64
    %v1095 = vpop.permute.xlu0 %1094
    %v1097 = vmul.f32 %v1091, %v1095
    %1099 = vrot.lane.b32.xlu0 %v1097, 32
    %v1100 = vpop.permute.xlu0 %1099
    %v1102 = vadd.f32 %v1092, %v1100
    %v1103 = vtanh.pop %v1102
    %1105 = vrot.lane.b32.xlu0 %v1103, 64
    %v1106 = vpop.permute.xlu0 %1105
    %v1108 = vmul.f32 %v1091, %v1106
    %v1111 = vunpack.c.l.s4 1966171168
    %v1112 = vunpack.c.0.s8 %v1111
    %v1113 = vlaneseq
    %v1114 = vshrl.u32 %v1113, 7
    %v1115 = vsub.s32 %v1112, %v1114
    %v1116 = vrot.slane %v1108, %v1115
    %v1117 = vcombine.high %v1116, %v1116
    %v1119 = vunpack.c.l.s4 1966171168
    %v1120 = vunpack.c.0.s8 %v1119
    %v1121 = vlaneseq
    %v1122 = vshrl.u32 %v1121, 7
    %v1123 = vsub.s32 %v1120, %v1122
    %v1124 = vrot.slane %v1116, %v1123
    %v1126 = vunpack.c.l.s4 1966171168
    %v1127 = vunpack.c.0.s8 %v1126
    %v1128 = vlaneseq
    %v1129 = vshrl.u32 %v1128, 7
    %v1130 = vsub.s32 %v1127, %v1129
    %v1131 = vrot.slane %v1117, %v1130
    %v1132 = vlaneseq
    %v1133 = vshrl.u32 %v1132, 7
    %v1134 = vsub.s32 0, %v1133
    %v1135 = vrot.slane %v1124, %v1134
    %v1136 = vlaneseq
    %v1137 = vshrl.u32 %v1136, 7
    %v1138 = vsub.s32 0, %v1137
    %v1139 = vrot.slane %v1131, %v1138
    %1140 = vrot.lane.b32.xlu0 %v1135, 32
    %v1141 = vpop.permute.xlu0 %1140
    %1142 = vrot.lane.b32.xlu0 %v1139, 32
    %v1143 = vpop.permute.xlu0 %1142
    %1146 = vst.msk [vmem:[#allocation2 + $0x5] sm:$0x1] %vm330, %v1141
    %1147 = vst.msk [vmem:[#allocation2 + $0xd] sm:$0x1] %vm330, %v1143
    %v1148 = vld [vmem:[#allocation3 + $0x6] sm:$0x1]
    %v1149 = vld [vmem:[#allocation3 + $0xe] sm:$0x1]
    %1150 = vrot.lane.b32.xlu0 %v1108, 32
    %v1151 = vpop.permute.xlu0 %1150
    %v1152 = vsel %vm61, %v1151, 0
    %1154 = vmatprep.subr.mxu0 0.0
    %1155 = vmatpush1.msra.mxu0 %v73
    %1156 = vmatprep.subr.mxu0 0.0
    %1157 = vmatpush1.msra.mxu0 %v74
    %1158 = vmatprep.subr.mxu0 0.0
    %1159 = vmatpush1.msra.mxu0 %v75
    %1160 = vmatprep.subr.mxu0 0.0
    %1161 = vmatpush1.msra.mxu0 %v76
    %1162 = vmatprep.subr.mxu0 0.0
    %1163 = vmatpush1.msra.mxu0 0.0
    %1164 = vmatprep.subr.mxu0 0.0
    %1165 = vmatpush1.msra.mxu0 0.0
    %1166 = vmatprep.subr.mxu0 0.0
    %1167 = vmatpush1.msra.mxu0 0.0
    %1168 = vmatprep.subr.mxu0 0.0
    %1169 = vmatpush1.msra.mxu0 0.0
    %1170 = vmatprep.subr.mxu0 0.0
    %1171 = vmatpush1.msra.mxu0 0.0
    %1172 = vmatprep.subr.mxu0 0.0
    %1173 = vmatpush1.msra.mxu0 0.0
    %1174 = vmatprep.subr.mxu0 0.0
    %1175 = vmatpush1.msra.mxu0 0.0
    %1176 = vmatprep.subr.mxu0 0.0
    %1177 = vmatpush1.msra.mxu0 0.0
    %1178 = vmatprep.subr.mxu0 0.0
    %1179 = vmatpush1.msra.mxu0 0.0
    %1180 = vmatprep.subr.mxu0 0.0
    %1181 = vmatpush1.msra.mxu0 0.0
    %1182 = vmatprep.subr.mxu0 0.0
    %1183 = vmatpush1.msra.mxu0 0.0
    %1184 = vmatprep.subr.mxu0 0.0
    %1185 = vmatpush1.msra.mxu0 0.0
    %1186 = vmatprep.subr.mxu0 0.0
    %1187 = vmatpush1.msra.mxu0 0.0
    %1188 = vmatprep.subr.mxu0 0.0
    %1189 = vmatpush1.msra.mxu0 0.0
    %1190 = vmatprep.subr.mxu0 0.0
    %1191 = vmatpush1.msra.mxu0 0.0
    %1192 = vmatprep.subr.mxu0 0.0
    %1193 = vmatpush1.msra.mxu0 0.0
    %1194 = vmatprep.subr.mxu0 0.0
    %1195 = vmatpush1.msra.mxu0 0.0
    %1196 = vmatprep.subr.mxu0 0.0
    %1197 = vmatpush1.msra.mxu0 0.0
    %1198 = vmatprep.subr.mxu0 0.0
    %1199 = vmatpush1.msra.mxu0 0.0
    %1200 = vmatprep.subr.mxu0 0.0
    %1201 = vmatpush1.msra.mxu0 0.0
    %1202 = vmatprep.subr.mxu0 0.0
    %1203 = vmatpush1.msra.mxu0 0.0
    %1204 = vmatprep.subr.mxu0 0.0
    %1205 = vmatpush1.msra.mxu0 0.0
    %1206 = vmatprep.subr.mxu0 0.0
    %1207 = vmatpush1.msra.mxu0 0.0
    %1208 = vmatprep.subr.mxu0 0.0
    %1209 = vmatpush1.msra.mxu0 0.0
    %1210 = vmatprep.subr.mxu0 0.0
    %1211 = vmatpush1.msra.mxu0 0.0
    %1212 = vmatprep.subr.mxu0 0.0
    %1213 = vmatpush1.msra.mxu0 0.0
    %1214 = vmatprep.subr.mxu0 0.0
    %1215 = vmatpush1.msra.mxu0 0.0
    %1216 = vmatprep.subr.mxu0 0.0
    %1217 = vmatpush1.msra.mxu0 0.0
    %1218 = vmatprep.mubr.f32.mxu0 0.0
    %1219 = vmatmul.mubr.f32.gmra.mrb[0].mxu0 %v1152
    %v1220 = vpop.f32.mrb[0].mxu0
    %v1221 = vadd.f32 0.0, %v1220
    %v1222 = vpop.f32.mrb[0].mxu0
    %1223 = vdwg.mxu0
    %v1225 = vrot.slane %v1221, 1
    %v1228 = vadd.f32 %v1148, %v1221
    %v1229 = vadd.f32 %v1149, %v1225
    %v1230 = vtanh.pop %v1228
    %v1231 = vtanh.pop %v1229
    %v1232 = vxor.u32 %v1228, 2147483648
    %v1233 = vxor.u32 %v1229, 2147483648
    %v1234 = vmul.f32 %v1232, 1.442695
    %v1235 = vpow.pop %v1234
    %v1236 = vmul.f32 %v1233, 1.442695
    %v1237 = vpow.pop %v1236
    %v1238 = vadd.f32 %v1235, 1.0
    %v1239 = vadd.f32 %v1237, 1.0
    %v1240 = vrcp.pop %v1238
    %v1241 = vmul.f32 1.0, %v1240
    %v1242 = vrcp.pop %v1239
    %v1243 = vmul.f32 1.0, %v1242
    %v1246 = vrot.slane %v1231, 7
    %v1247 = vsel %vm267, %v1246, %v1230
    %v1251 = vrot.slane %v1243, 7
    %v1252 = vsel %vm267, %v1251, %v1241
    %v1254 = vsel %vm68, %v1247, %v1252
    %v1255 = vmul.f32 %v1254, %v1102
    %1257 = vrot.lane.b32.xlu0 %v1254, 64
    %v1258 = vpop.permute.xlu0 %1257
    %v1260 = vmul.f32 %v1254, %v1258
    %1262 = vrot.lane.b32.xlu0 %v1260, 32
    %v1263 = vpop.permute.xlu0 %1262
    %v1265 = vadd.f32 %v1255, %v1263
    %v1266 = vtanh.pop %v1265
    %1268 = vrot.lane.b32.xlu0 %v1266, 64
    %v1269 = vpop.permute.xlu0 %1268
    %v1271 = vmul.f32 %v1254, %v1269
    %v1274 = vunpack.c.l.s4 1966171168
    %v1275 = vunpack.c.0.s8 %v1274
    %v1276 = vlaneseq
    %v1277 = vshrl.u32 %v1276, 7
    %v1278 = vsub.s32 %v1275, %v1277
    %v1279 = vrot.slane %v1271, %v1278
    %v1280 = vcombine.high %v1279, %v1279
    %v1282 = vunpack.c.l.s4 1966171168
    %v1283 = vunpack.c.0.s8 %v1282
    %v1284 = vlaneseq
    %v1285 = vshrl.u32 %v1284, 7
    %v1286 = vsub.s32 %v1283, %v1285
    %v1287 = vrot.slane %v1279, %v1286
    %v1289 = vunpack.c.l.s4 1966171168
    %v1290 = vunpack.c.0.s8 %v1289
    %v1291 = vlaneseq
    %v1292 = vshrl.u32 %v1291, 7
    %v1293 = vsub.s32 %v1290, %v1292
    %v1294 = vrot.slane %v1280, %v1293
    %v1295 = vlaneseq
    %v1296 = vshrl.u32 %v1295, 7
    %v1297 = vsub.s32 0, %v1296
    %v1298 = vrot.slane %v1287, %v1297
    %v1299 = vlaneseq
    %v1300 = vshrl.u32 %v1299, 7
    %v1301 = vsub.s32 0, %v1300
    %v1302 = vrot.slane %v1294, %v1301
    %1303 = vrot.lane.b32.xlu0 %v1298, 32
    %v1304 = vpop.permute.xlu0 %1303
    %1305 = vrot.lane.b32.xlu0 %v1302, 32
    %v1306 = vpop.permute.xlu0 %1305
    %1309 = vst.msk [vmem:[#allocation2 + $0x6] sm:$0x1] %vm330, %v1304
    %1310 = vst.msk [vmem:[#allocation2 + $0xe] sm:$0x1] %vm330, %v1306
    %v1311 = vld [vmem:[#allocation3 + $0x7] sm:$0x1]
    %v1312 = vld [vmem:[#allocation3 + $0xf] sm:$0x1]
    %1313 = vrot.lane.b32.xlu0 %v1271, 32
    %v1314 = vpop.permute.xlu0 %1313
    %v1315 = vsel %vm61, %v1314, 0
    %1317 = vmatprep.subr.mxu0 0.0
    %1318 = vmatpush1.msra.mxu0 %v73
    %1319 = vmatprep.subr.mxu0 0.0
    %1320 = vmatpush1.msra.mxu0 %v74
    %1321 = vmatprep.subr.mxu0 0.0
    %1322 = vmatpush1.msra.mxu0 %v75
    %1323 = vmatprep.subr.mxu0 0.0
    %1324 = vmatpush1.msra.mxu0 %v76
    %1325 = vmatprep.subr.mxu0 0.0
    %1326 = vmatpush1.msra.mxu0 0.0
    %1327 = vmatprep.subr.mxu0 0.0
    %1328 = vmatpush1.msra.mxu0 0.0
    %1329 = vmatprep.subr.mxu0 0.0
    %1330 = vmatpush1.msra.mxu0 0.0
    %1331 = vmatprep.subr.mxu0 0.0
    %1332 = vmatpush1.msra.mxu0 0.0
    %1333 = vmatprep.subr.mxu0 0.0
    %1334 = vmatpush1.msra.mxu0 0.0
    %1335 = vmatprep.subr.mxu0 0.0
    %1336 = vmatpush1.msra.mxu0 0.0
    %1337 = vmatprep.subr.mxu0 0.0
    %1338 = vmatpush1.msra.mxu0 0.0
    %1339 = vmatprep.subr.mxu0 0.0
    %1340 = vmatpush1.msra.mxu0 0.0
    %1341 = vmatprep.subr.mxu0 0.0
    %1342 = vmatpush1.msra.mxu0 0.0
    %1343 = vmatprep.subr.mxu0 0.0
    %1344 = vmatpush1.msra.mxu0 0.0
    %1345 = vmatprep.subr.mxu0 0.0
    %1346 = vmatpush1.msra.mxu0 0.0
    %1347 = vmatprep.subr.mxu0 0.0
    %1348 = vmatpush1.msra.mxu0 0.0
    %1349 = vmatprep.subr.mxu0 0.0
    %1350 = vmatpush1.msra.mxu0 0.0
    %1351 = vmatprep.subr.mxu0 0.0
    %1352 = vmatpush1.msra.mxu0 0.0
    %1353 = vmatprep.subr.mxu0 0.0
    %1354 = vmatpush1.msra.mxu0 0.0
    %1355 = vmatprep.subr.mxu0 0.0
    %1356 = vmatpush1.msra.mxu0 0.0
    %1357 = vmatprep.subr.mxu0 0.0
    %1358 = vmatpush1.msra.mxu0 0.0
    %1359 = vmatprep.subr.mxu0 0.0
    %1360 = vmatpush1.msra.mxu0 0.0
    %1361 = vmatprep.subr.mxu0 0.0
    %1362 = vmatpush1.msra.mxu0 0.0
    %1363 = vmatprep.subr.mxu0 0.0
    %1364 = vmatpush1.msra.mxu0 0.0
    %1365 = vmatprep.subr.mxu0 0.0
    %1366 = vmatpush1.msra.mxu0 0.0
    %1367 = vmatprep.subr.mxu0 0.0
    %1368 = vmatpush1.msra.mxu0 0.0
    %1369 = vmatprep.subr.mxu0 0.0
    %1370 = vmatpush1.msra.mxu0 0.0
    %1371 = vmatprep.subr.mxu0 0.0
    %1372 = vmatpush1.msra.mxu0 0.0
    %1373 = vmatprep.subr.mxu0 0.0
    %1374 = vmatpush1.msra.mxu0 0.0
    %1375 = vmatprep.subr.mxu0 0.0
    %1376 = vmatpush1.msra.mxu0 0.0
    %1377 = vmatprep.subr.mxu0 0.0
    %1378 = vmatpush1.msra.mxu0 0.0
    %1379 = vmatprep.subr.mxu0 0.0
    %1380 = vmatpush1.msra.mxu0 0.0
    %1381 = vmatprep.mubr.f32.mxu0 0.0
    %1382 = vmatmul.mubr.f32.gmra.mrb[0].mxu0 %v1315
    %v1383 = vpop.f32.mrb[0].mxu0
    %v1384 = vadd.f32 0.0, %v1383
    %v1385 = vpop.f32.mrb[0].mxu0
    %1386 = vdwg.mxu0
    %v1388 = vrot.slane %v1384, 1
    %v1391 = vadd.f32 %v1311, %v1384
    %v1392 = vadd.f32 %v1312, %v1388
    %v1393 = vtanh.pop %v1391
    %v1394 = vtanh.pop %v1392
    %v1395 = vxor.u32 %v1391, 2147483648
    %v1396 = vxor.u32 %v1392, 2147483648
    %v1397 = vmul.f32 %v1395, 1.442695
    %v1398 = vpow.pop %v1397
    %v1399 = vmul.f32 %v1396, 1.442695
    %v1400 = vpow.pop %v1399
    %v1401 = vadd.f32 %v1398, 1.0
    %v1402 = vadd.f32 %v1400, 1.0
    %v1403 = vrcp.pop %v1401
    %v1404 = vmul.f32 1.0, %v1403
    %v1405 = vrcp.pop %v1402
    %v1406 = vmul.f32 1.0, %v1405
    %v1409 = vrot.slane %v1394, 7
    %v1410 = vsel %vm267, %v1409, %v1393
    %v1414 = vrot.slane %v1406, 7
    %v1415 = vsel %vm267, %v1414, %v1404
    %v1417 = vsel %vm68, %v1410, %v1415
    %v1418 = vmul.f32 %v1417, %v1265
    %1420 = vrot.lane.b32.xlu0 %v1417, 64
    %v1421 = vpop.permute.xlu0 %1420
    %v1423 = vmul.f32 %v1417, %v1421
    %1425 = vrot.lane.b32.xlu0 %v1423, 32
    %v1426 = vpop.permute.xlu0 %1425
    %v1428 = vadd.f32 %v1418, %v1426
    %v1429 = vtanh.pop %v1428
    %1431 = vrot.lane.b32.xlu0 %v1429, 64
    %v1432 = vpop.permute.xlu0 %1431
    %v1434 = vmul.f32 %v1417, %v1432
    %v1437 = vunpack.c.l.s4 1966171168
    %v1438 = vunpack.c.0.s8 %v1437
    %v1439 = vlaneseq
    %v1440 = vshrl.u32 %v1439, 7
    %v1441 = vsub.s32 %v1438, %v1440
    %v1442 = vrot.slane %v1434, %v1441
    %v1443 = vcombine.high %v1442, %v1442
    %v1445 = vunpack.c.l.s4 1966171168
    %v1446 = vunpack.c.0.s8 %v1445
    %v1447 = vlaneseq
    %v1448 = vshrl.u32 %v1447, 7
    %v1449 = vsub.s32 %v1446, %v1448
    %v1450 = vrot.slane %v1442, %v1449
    %v1452 = vunpack.c.l.s4 1966171168
    %v1453 = vunpack.c.0.s8 %v1452
    %v1454 = vlaneseq
    %v1455 = vshrl.u32 %v1454, 7
    %v1456 = vsub.s32 %v1453, %v1455
    %v1457 = vrot.slane %v1443, %v1456
    %v1458 = vlaneseq
    %v1459 = vshrl.u32 %v1458, 7
    %v1460 = vsub.s32 0, %v1459
    %v1461 = vrot.slane %v1450, %v1460
    %v1462 = vlaneseq
    %v1463 = vshrl.u32 %v1462, 7
    %v1464 = vsub.s32 0, %v1463
    %v1465 = vrot.slane %v1457, %v1464
    %1466 = vrot.lane.b32.xlu0 %v1461, 32
    %v1467 = vpop.permute.xlu0 %1466
    %1468 = vrot.lane.b32.xlu0 %v1465, 32
    %v1469 = vpop.permute.xlu0 %1468
    %1472 = vst.msk [vmem:[#allocation2 + $0x7] sm:$0x1] %vm330, %v1467
    %1473 = vst.msk [vmem:[#allocation2 + $0xf] sm:$0x1] %vm330, %v1469
    %s1474 = scalar_lea.vmem [#allocation7], 32
    %v1475 = vld [vmem:[%s1474] sm:$0xff]
    %v1476 = vld [vmem:[%s1474 + $0x8] sm:$0xff]
    %v1477 = vld [vmem:[%s1474 + $0x10] sm:$0xff]
    %v1478 = vld [vmem:[%s1474 + $0x18] sm:$0xff]
    %s1479 = scalar_lea.vmem [#allocation9], 32
    %v1480 = vld [vmem:[%s1479] sm:$0xff]
    %v1481 = vld [vmem:[%s1479 + $0x8] sm:$0xff]
    %v1482 = vld [vmem:[%s1479 + $0x10] sm:$0xff]
    %v1483 = vld [vmem:[%s1479 + $0x18] sm:$0xff]
    %s1484 = scalar_lea.vmem %s3, 1
    %v1485 = vld [vmem:[%s1484] sm:$0x1]
    %v1486 = vld [vmem:[#allocation2] sm:$0xff]
    %v1487 = vld [vmem:[#allocation2 + $0x8] sm:$0xff]
    %v1489 = vlaneseq
    %v1490 = vshrl.u32 %v1489, 7
    %v1491 = vsub.s32 0, %v1490
    %v1492 = vrot.slane %v1485, %v1491
    %v1495 = vsel %vm61, %v1486, 0
    %v1498 = vsel %vm61, %v1487, 0
    %1500 = vmatprep.subr.mxu0 0.0
    %1501 = vmatpush1.msra.mxu0 %v1475
    %1502 = vmatprep.subr.mxu0 0.0
    %1503 = vmatpush1.msra.mxu0 %v1476
    %1504 = vmatprep.subr.mxu0 0.0
    %1505 = vmatpush1.msra.mxu0 %v1477
    %1506 = vmatprep.subr.mxu0 0.0
    %1507 = vmatpush1.msra.mxu0 %v1478
    %1508 = vmatprep.subr.mxu0 0.0
    %1509 = vmatpush1.msra.mxu0 0.0
    %1510 = vmatprep.subr.mxu0 0.0
    %1511 = vmatpush1.msra.mxu0 0.0
    %1512 = vmatprep.subr.mxu0 0.0
    %1513 = vmatpush1.msra.mxu0 0.0
    %1514 = vmatprep.subr.mxu0 0.0
    %1515 = vmatpush1.msra.mxu0 0.0
    %1516 = vmatprep.subr.mxu0 0.0
    %1517 = vmatpush1.msra.mxu0 0.0
    %1518 = vmatprep.subr.mxu0 0.0
    %1519 = vmatpush1.msra.mxu0 0.0
    %1520 = vmatprep.subr.mxu0 0.0
    %1521 = vmatpush1.msra.mxu0 0.0
    %1522 = vmatprep.subr.mxu0 0.0
    %1523 = vmatpush1.msra.mxu0 0.0
    %1524 = vmatprep.subr.mxu0 0.0
    %1525 = vmatpush1.msra.mxu0 0.0
    %1526 = vmatprep.subr.mxu0 0.0
    %1527 = vmatpush1.msra.mxu0 0.0
    %1528 = vmatprep.subr.mxu0 0.0
    %1529 = vmatpush1.msra.mxu0 0.0
    %1530 = vmatprep.subr.mxu0 0.0
    %1531 = vmatpush1.msra.mxu0 0.0
    %1532 = vmatprep.subr.mxu0 0.0
    %1533 = vmatpush1.msra.mxu0 0.0
    %1534 = vmatprep.subr.mxu0 0.0
    %1535 = vmatpush1.msra.mxu0 0.0
    %1536 = vmatprep.subr.mxu0 0.0
    %1537 = vmatpush1.msra.mxu0 0.0
    %1538 = vmatprep.subr.mxu0 0.0
    %1539 = vmatpush1.msra.mxu0 0.0
    %1540 = vmatprep.subr.mxu0 0.0
    %1541 = vmatpush1.msra.mxu0 0.0
    %1542 = vmatprep.subr.mxu0 0.0
    %1543 = vmatpush1.msra.mxu0 0.0
    %1544 = vmatprep.subr.mxu0 0.0
    %1545 = vmatpush1.msra.mxu0 0.0
    %1546 = vmatprep.subr.mxu0 0.0
    %1547 = vmatpush1.msra.mxu0 0.0
    %1548 = vmatprep.subr.mxu0 0.0
    %1549 = vmatpush1.msra.mxu0 0.0
    %1550 = vmatprep.subr.mxu0 0.0
    %1551 = vmatpush1.msra.mxu0 0.0
    %1552 = vmatprep.subr.mxu0 0.0
    %1553 = vmatpush1.msra.mxu0 0.0
    %1554 = vmatprep.subr.mxu0 0.0
    %1555 = vmatpush1.msra.mxu0 0.0
    %1556 = vmatprep.subr.mxu0 0.0
    %1557 = vmatpush1.msra.mxu0 0.0
    %1558 = vmatprep.subr.mxu0 0.0
    %1559 = vmatpush1.msra.mxu0 0.0
    %1560 = vmatprep.subr.mxu0 0.0
    %1561 = vmatpush1.msra.mxu0 0.0
    %1562 = vmatprep.subr.mxu0 0.0
    %1563 = vmatpush1.msra.mxu0 0.0
    %1564 = vmatprep.mubr.f32.mxu0 0.0
    %1565 = vmatmul.mubr.f32.gmra.mrb[0].mxu0 %v1495
    %v1566 = vpop.f32.mrb[0].mxu0
    %v1567 = vadd.f32 %v1492, %v1566
    %v1568 = vpop.f32.mrb[0].mxu0
    %1569 = vmatprep.mubr.f32.mxu0 0.0
    %1570 = vmatmul.mubr.f32.gmra.mrb[0].mxu0 %v1498
    %v1571 = vpop.f32.mrb[0].mxu0
    %v1572 = vadd.f32 %v1492, %v1571
    %v1573 = vpop.f32.mrb[0].mxu0
    %1574 = vdwg.mxu0
    %1575 = vst [vmem:[#allocation3] sm:$0xff] %v1567
    %1576 = vst [vmem:[#allocation3 + $0x8] sm:$0xff] %v1572
    %v1577 = vld [vmem:[#allocation3] sm:$0x1]
    %v1578 = vld [vmem:[#allocation3 + $0x8] sm:$0x1]
    %1579 = vmatprep.subr.mxu0 0.0
    %1580 = vmatpush1.msra.mxu0 %v1480
    %1581 = vmatprep.subr.mxu0 0.0
    %1582 = vmatpush1.msra.mxu0 %v1481
    %1583 = vmatprep.subr.mxu0 0.0
    %1584 = vmatpush1.msra.mxu0 %v1482
    %1585 = vmatprep.subr.mxu0 0.0
    %1586 = vmatpush1.msra.mxu0 %v1483
    %1587 = vmatprep.subr.mxu0 0.0
    %1588 = vmatpush1.msra.mxu0 0.0
    %1589 = vmatprep.subr.mxu0 0.0
    %1590 = vmatpush1.msra.mxu0 0.0
    %1591 = vmatprep.subr.mxu0 0.0
    %1592 = vmatpush1.msra.mxu0 0.0
    %1593 = vmatprep.subr.mxu0 0.0
    %1594 = vmatpush1.msra.mxu0 0.0
    %1595 = vmatprep.subr.mxu0 0.0
    %1596 = vmatpush1.msra.mxu0 0.0
    %1597 = vmatprep.subr.mxu0 0.0
    %1598 = vmatpush1.msra.mxu0 0.0
    %1599 = vmatprep.subr.mxu0 0.0
    %1600 = vmatpush1.msra.mxu0 0.0
    %1601 = vmatprep.subr.mxu0 0.0
    %1602 = vmatpush1.msra.mxu0 0.0
    %1603 = vmatprep.subr.mxu0 0.0
    %1604 = vmatpush1.msra.mxu0 0.0
    %1605 = vmatprep.subr.mxu0 0.0
    %1606 = vmatpush1.msra.mxu0 0.0
    %1607 = vmatprep.subr.mxu0 0.0
    %1608 = vmatpush1.msra.mxu0 0.0
    %1609 = vmatprep.subr.mxu0 0.0
    %1610 = vmatpush1.msra.mxu0 0.0
    %1611 = vmatprep.subr.mxu0 0.0
    %1612 = vmatpush1.msra.mxu0 0.0
    %1613 = vmatprep.subr.mxu0 0.0
    %1614 = vmatpush1.msra.mxu0 0.0
    %1615 = vmatprep.subr.mxu0 0.0
    %1616 = vmatpush1.msra.mxu0 0.0
    %1617 = vmatprep.subr.mxu0 0.0
    %1618 = vmatpush1.msra.mxu0 0.0
    %1619 = vmatprep.subr.mxu0 0.0
    %1620 = vmatpush1.msra.mxu0 0.0
    %1621 = vmatprep.subr.mxu0 0.0
    %1622 = vmatpush1.msra.mxu0 0.0
    %1623 = vmatprep.subr.mxu0 0.0
    %1624 = vmatpush1.msra.mxu0 0.0
    %1625 = vmatprep.subr.mxu0 0.0
    %1626 = vmatpush1.msra.mxu0 0.0
    %1627 = vmatprep.subr.mxu0 0.0
    %1628 = vmatpush1.msra.mxu0 0.0
    %1629 = vmatprep.subr.mxu0 0.0
    %1630 = vmatpush1.msra.mxu0 0.0
    %1631 = vmatprep.subr.mxu0 0.0
    %1632 = vmatpush1.msra.mxu0 0.0
    %1633 = vmatprep.subr.mxu0 0.0
    %1634 = vmatpush1.msra.mxu0 0.0
    %1635 = vmatprep.subr.mxu0 0.0
    %1636 = vmatpush1.msra.mxu0 0.0
    %1637 = vmatprep.subr.mxu0 0.0
    %1638 = vmatpush1.msra.mxu0 0.0
    %1639 = vmatprep.subr.mxu0 0.0
    %1640 = vmatpush1.msra.mxu0 0.0
    %1641 = vmatprep.subr.mxu0 0.0
    %1642 = vmatpush1.msra.mxu0 0.0
    %1643 = vmatprep.mubr.f32.mxu0 0.0
    %1644 = vmatmul.mubr.f32.gmra.mrb[0].mxu0 %v172
    %v1645 = vpop.f32.mrb[0].mxu0
    %v1646 = vadd.f32 0.0, %v1645
    %v1647 = vpop.f32.mrb[0].mxu0
    %1648 = vdwg.mxu0
    %v1650 = vrot.slane %v1646, 1
    %v1653 = vadd.f32 %v1577, %v1646
    %v1654 = vadd.f32 %v1578, %v1650
    %v1655 = vtanh.pop %v1653
    %v1656 = vtanh.pop %v1654
    %v1657 = vxor.u32 %v1653, 2147483648
    %v1658 = vxor.u32 %v1654, 2147483648
    %v1659 = vmul.f32 %v1657, 1.442695
    %v1660 = vpow.pop %v1659
    %v1661 = vmul.f32 %v1658, 1.442695
    %v1662 = vpow.pop %v1661
    %v1663 = vadd.f32 %v1660, 1.0
    %v1664 = vadd.f32 %v1662, 1.0
    %v1665 = vrcp.pop %v1663
    %v1666 = vmul.f32 1.0, %v1665
    %v1667 = vrcp.pop %v1664
    %v1668 = vmul.f32 1.0, %v1667
    %v1671 = vrot.slane %v1656, 7
    %v1672 = vsel %vm267, %v1671, %v1655
    %v1676 = vrot.slane %v1668, 7
    %v1677 = vsel %vm267, %v1676, %v1666
    %v1679 = vsel %vm68, %v1672, %v1677
    %v1680 = vmul.f32 %v1679, 0.0
    %1682 = vrot.lane.b32.xlu0 %v1679, 64
    %v1683 = vpop.permute.xlu0 %1682
    %v1685 = vmul.f32 %v1679, %v1683
    %1687 = vrot.lane.b32.xlu0 %v1685, 32
    %v1688 = vpop.permute.xlu0 %1687
    %v1690 = vadd.f32 %v1680, %v1688
    %v1691 = vtanh.pop %v1690
    %1693 = vrot.lane.b32.xlu0 %v1691, 64
    %v1694 = vpop.permute.xlu0 %1693
    %v1696 = vmul.f32 %v1679, %v1694
    %v1699 = vunpack.c.l.s4 1966171168
    %v1700 = vunpack.c.0.s8 %v1699
    %v1701 = vlaneseq
    %v1702 = vshrl.u32 %v1701, 7
    %v1703 = vsub.s32 %v1700, %v1702
    %v1704 = vrot.slane %v1696, %v1703
    %v1705 = vcombine.high %v1704, %v1704
    %v1707 = vunpack.c.l.s4 1966171168
    %v1708 = vunpack.c.0.s8 %v1707
    %v1709 = vlaneseq
    %v1710 = vshrl.u32 %v1709, 7
    %v1711 = vsub.s32 %v1708, %v1710
    %v1712 = vrot.slane %v1704, %v1711
    %v1714 = vunpack.c.l.s4 1966171168
    %v1715 = vunpack.c.0.s8 %v1714
    %v1716 = vlaneseq
    %v1717 = vshrl.u32 %v1716, 7
    %v1718 = vsub.s32 %v1715, %v1717
    %v1719 = vrot.slane %v1705, %v1718
    %v1720 = vlaneseq
    %v1721 = vshrl.u32 %v1720, 7
    %v1722 = vsub.s32 0, %v1721
    %v1723 = vrot.slane %v1712, %v1722
    %v1724 = vlaneseq
    %v1725 = vshrl.u32 %v1724, 7
    %v1726 = vsub.s32 0, %v1725
    %v1727 = vrot.slane %v1719, %v1726
    %1728 = vrot.lane.b32.xlu0 %v1723, 32
    %v1729 = vpop.permute.xlu0 %1728
    %1730 = vrot.lane.b32.xlu0 %v1727, 32
    %v1731 = vpop.permute.xlu0 %1730
    %1734 = vst.msk [vmem:[#allocation2] sm:$0x1] %vm330, %v1729
    %1735 = vst.msk [vmem:[#allocation2 + $0x8] sm:$0x1] %vm330, %v1731
    %v1736 = vld [vmem:[#allocation3 + $0x1] sm:$0x1]
    %v1737 = vld [vmem:[#allocation3 + $0x9] sm:$0x1]
    %1738 = vrot.lane.b32.xlu0 %v1696, 32
    %v1739 = vpop.permute.xlu0 %1738
    %v1740 = vsel %vm61, %v1739, 0
    %1742 = vmatprep.subr.mxu0 0.0
    %1743 = vmatpush1.msra.mxu0 %v1480
    %1744 = vmatprep.subr.mxu0 0.0
    %1745 = vmatpush1.msra.mxu0 %v1481
    %1746 = vmatprep.subr.mxu0 0.0
    %1747 = vmatpush1.msra.mxu0 %v1482
    %1748 = vmatprep.subr.mxu0 0.0
    %1749 = vmatpush1.msra.mxu0 %v1483
    %1750 = vmatprep.subr.mxu0 0.0
    %1751 = vmatpush1.msra.mxu0 0.0
    %1752 = vmatprep.subr.mxu0 0.0
    %1753 = vmatpush1.msra.mxu0 0.0
    %1754 = vmatprep.subr.mxu0 0.0
    %1755 = vmatpush1.msra.mxu0 0.0
    %1756 = vmatprep.subr.mxu0 0.0
    %1757 = vmatpush1.msra.mxu0 0.0
    %1758 = vmatprep.subr.mxu0 0.0
    %1759 = vmatpush1.msra.mxu0 0.0
    %1760 = vmatprep.subr.mxu0 0.0
    %1761 = vmatpush1.msra.mxu0 0.0
    %1762 = vmatprep.subr.mxu0 0.0
    %1763 = vmatpush1.msra.mxu0 0.0
    %1764 = vmatprep.subr.mxu0 0.0
    %1765 = vmatpush1.msra.mxu0 0.0
    %1766 = vmatprep.subr.mxu0 0.0
    %1767 = vmatpush1.msra.mxu0 0.0
    %1768 = vmatprep.subr.mxu0 0.0
    %1769 = vmatpush1.msra.mxu0 0.0
    %1770 = vmatprep.subr.mxu0 0.0
    %1771 = vmatpush1.msra.mxu0 0.0
    %1772 = vmatprep.subr.mxu0 0.0
    %1773 = vmatpush1.msra.mxu0 0.0
    %1774 = vmatprep.subr.mxu0 0.0
    %1775 = vmatpush1.msra.mxu0 0.0
    %1776 = vmatprep.subr.mxu0 0.0
    %1777 = vmatpush1.msra.mxu0 0.0
    %1778 = vmatprep.subr.mxu0 0.0
    %1779 = vmatpush1.msra.mxu0 0.0
    %1780 = vmatprep.subr.mxu0 0.0
    %1781 = vmatpush1.msra.mxu0 0.0
    %1782 = vmatprep.subr.mxu0 0.0
    %1783 = vmatpush1.msra.mxu0 0.0
    %1784 = vmatprep.subr.mxu0 0.0
    %1785 = vmatpush1.msra.mxu0 0.0
    %1786 = vmatprep.subr.mxu0 0.0
    %1787 = vmatpush1.msra.mxu0 0.0
    %1788 = vmatprep.subr.mxu0 0.0
    %1789 = vmatpush1.msra.mxu0 0.0
    %1790 = vmatprep.subr.mxu0 0.0
    %1791 = vmatpush1.msra.mxu0 0.0
    %1792 = vmatprep.subr.mxu0 0.0
    %1793 = vmatpush1.msra.mxu0 0.0
    %1794 = vmatprep.subr.mxu0 0.0
    %1795 = vmatpush1.msra.mxu0 0.0
    %1796 = vmatprep.subr.mxu0 0.0
    %1797 = vmatpush1.msra.mxu0 0.0
    %1798 = vmatprep.subr.mxu0 0.0
    %1799 = vmatpush1.msra.mxu0 0.0
    %1800 = vmatprep.subr.mxu0 0.0
    %1801 = vmatpush1.msra.mxu0 0.0
    %1802 = vmatprep.subr.mxu0 0.0
    %1803 = vmatpush1.msra.mxu0 0.0
    %1804 = vmatprep.subr.mxu0 0.0
    %1805 = vmatpush1.msra.mxu0 0.0
    %1806 = vmatprep.mubr.f32.mxu0 0.0
    %1807 = vmatmul.mubr.f32.gmra.mrb[0].mxu0 %v1740
    %v1808 = vpop.f32.mrb[0].mxu0
    %v1809 = vadd.f32 0.0, %v1808
    %v1810 = vpop.f32.mrb[0].mxu0
    %1811 = vdwg.mxu0
    %v1813 = vrot.slane %v1809, 1
    %v1816 = vadd.f32 %v1736, %v1809
    %v1817 = vadd.f32 %v1737, %v1813
    %v1818 = vtanh.pop %v1816
    %v1819 = vtanh.pop %v1817
    %v1820 = vxor.u32 %v1816, 2147483648
    %v1821 = vxor.u32 %v1817, 2147483648
    %v1822 = vmul.f32 %v1820, 1.442695
    %v1823 = vpow.pop %v1822
    %v1824 = vmul.f32 %v1821, 1.442695
    %v1825 = vpow.pop %v1824
    %v1826 = vadd.f32 %v1823, 1.0
    %v1827 = vadd.f32 %v1825, 1.0
    %v1828 = vrcp.pop %v1826
    %v1829 = vmul.f32 1.0, %v1828
    %v1830 = vrcp.pop %v1827
    %v1831 = vmul.f32 1.0, %v1830
    %v1834 = vrot.slane %v1819, 7
    %v1835 = vsel %vm267, %v1834, %v1818
    %v1839 = vrot.slane %v1831, 7
    %v1840 = vsel %vm267, %v1839, %v1829
    %v1842 = vsel %vm68, %v1835, %v1840
    %v1843 = vmul.f32 %v1842, %v1690
    %1845 = vrot.lane.b32.xlu0 %v1842, 64
    %v1846 = vpop.permute.xlu0 %1845
    %v1848 = vmul.f32 %v1842, %v1846
    %1850 = vrot.lane.b32.xlu0 %v1848, 32
    %v1851 = vpop.permute.xlu0 %1850
    %v1853 = vadd.f32 %v1843, %v1851
    %v1854 = vtanh.pop %v1853
    %1856 = vrot.lane.b32.xlu0 %v1854, 64
    %v1857 = vpop.permute.xlu0 %1856
    %v1859 = vmul.f32 %v1842, %v1857
    %v1862 = vunpack.c.l.s4 1966171168
    %v1863 = vunpack.c.0.s8 %v1862
    %v1864 = vlaneseq
    %v1865 = vshrl.u32 %v1864, 7
    %v1866 = vsub.s32 %v1863, %v1865
    %v1867 = vrot.slane %v1859, %v1866
    %v1868 = vcombine.high %v1867, %v1867
    %v1870 = vunpack.c.l.s4 1966171168
    %v1871 = vunpack.c.0.s8 %v1870
    %v1872 = vlaneseq
    %v1873 = vshrl.u32 %v1872, 7
    %v1874 = vsub.s32 %v1871, %v1873
    %v1875 = vrot.slane %v1867, %v1874
    %v1877 = vunpack.c.l.s4 1966171168
    %v1878 = vunpack.c.0.s8 %v1877
    %v1879 = vlaneseq
    %v1880 = vshrl.u32 %v1879, 7
    %v1881 = vsub.s32 %v1878, %v1880
    %v1882 = vrot.slane %v1868, %v1881
    %v1883 = vlaneseq
    %v1884 = vshrl.u32 %v1883, 7
    %v1885 = vsub.s32 0, %v1884
    %v1886 = vrot.slane %v1875, %v1885
    %v1887 = vlaneseq
    %v1888 = vshrl.u32 %v1887, 7
    %v1889 = vsub.s32 0, %v1888
    %v1890 = vrot.slane %v1882, %v1889
    %1891 = vrot.lane.b32.xlu0 %v1886, 32
    %v1892 = vpop.permute.xlu0 %1891
    %1893 = vrot.lane.b32.xlu0 %v1890, 32
    %v1894 = vpop.permute.xlu0 %1893
    %1897 = vst.msk [vmem:[#allocation2 + $0x1] sm:$0x1] %vm330, %v1892
    %1898 = vst.msk [vmem:[#allocation2 + $0x9] sm:$0x1] %vm330, %v1894
    %v1899 = vld [vmem:[#allocation3 + $0x2] sm:$0x1]
    %v1900 = vld [vmem:[#allocation3 + $0xa] sm:$0x1]
    %1901 = vrot.lane.b32.xlu0 %v1859, 32
    %v1902 = vpop.permute.xlu0 %1901
    %v1903 = vsel %vm61, %v1902, 0
    %1905 = vmatprep.subr.mxu0 0.0
    %1906 = vmatpush1.msra.mxu0 %v1480
    %1907 = vmatprep.subr.mxu0 0.0
    %1908 = vmatpush1.msra.mxu0 %v1481
    %1909 = vmatprep.subr.mxu0 0.0
    %1910 = vmatpush1.msra.mxu0 %v1482
    %1911 = vmatprep.subr.mxu0 0.0
    %1912 = vmatpush1.msra.mxu0 %v1483
    %1913 = vmatprep.subr.mxu0 0.0
    %1914 = vmatpush1.msra.mxu0 0.0
    %1915 = vmatprep.subr.mxu0 0.0
    %1916 = vmatpush1.msra.mxu0 0.0
    %1917 = vmatprep.subr.mxu0 0.0
    %1918 = vmatpush1.msra.mxu0 0.0
    %1919 = vmatprep.subr.mxu0 0.0
    %1920 = vmatpush1.msra.mxu0 0.0
    %1921 = vmatprep.subr.mxu0 0.0
    %1922 = vmatpush1.msra.mxu0 0.0
    %1923 = vmatprep.subr.mxu0 0.0
    %1924 = vmatpush1.msra.mxu0 0.0
    %1925 = vmatprep.subr.mxu0 0.0
    %1926 = vmatpush1.msra.mxu0 0.0
    %1927 = vmatprep.subr.mxu0 0.0
    %1928 = vmatpush1.msra.mxu0 0.0
    %1929 = vmatprep.subr.mxu0 0.0
    %1930 = vmatpush1.msra.mxu0 0.0
    %1931 = vmatprep.subr.mxu0 0.0
    %1932 = vmatpush1.msra.mxu0 0.0
    %1933 = vmatprep.subr.mxu0 0.0
    %1934 = vmatpush1.msra.mxu0 0.0
    %1935 = vmatprep.subr.mxu0 0.0
    %1936 = vmatpush1.msra.mxu0 0.0
    %1937 = vmatprep.subr.mxu0 0.0
    %1938 = vmatpush1.msra.mxu0 0.0
    %1939 = vmatprep.subr.mxu0 0.0
    %1940 = vmatpush1.msra.mxu0 0.0
    %1941 = vmatprep.subr.mxu0 0.0
    %1942 = vmatpush1.msra.mxu0 0.0
    %1943 = vmatprep.subr.mxu0 0.0
    %1944 = vmatpush1.msra.mxu0 0.0
    %1945 = vmatprep.subr.mxu0 0.0
    %1946 = vmatpush1.msra.mxu0 0.0
    %1947 = vmatprep.subr.mxu0 0.0
    %1948 = vmatpush1.msra.mxu0 0.0
    %1949 = vmatprep.subr.mxu0 0.0
    %1950 = vmatpush1.msra.mxu0 0.0
    %1951 = vmatprep.subr.mxu0 0.0
    %1952 = vmatpush1.msra.mxu0 0.0
    %1953 = vmatprep.subr.mxu0 0.0
    %1954 = vmatpush1.msra.mxu0 0.0
    %1955 = vmatprep.subr.mxu0 0.0
    %1956 = vmatpush1.msra.mxu0 0.0
    %1957 = vmatprep.subr.mxu0 0.0
    %1958 = vmatpush1.msra.mxu0 0.0
    %1959 = vmatprep.subr.mxu0 0.0
    %1960 = vmatpush1.msra.mxu0 0.0
    %1961 = vmatprep.subr.mxu0 0.0
    %1962 = vmatpush1.msra.mxu0 0.0
    %1963 = vmatprep.subr.mxu0 0.0
    %1964 = vmatpush1.msra.mxu0 0.0
    %1965 = vmatprep.subr.mxu0 0.0
    %1966 = vmatpush1.msra.mxu0 0.0
    %1967 = vmatprep.subr.mxu0 0.0
    %1968 = vmatpush1.msra.mxu0 0.0
    %1969 = vmatprep.mubr.f32.mxu0 0.0
    %1970 = vmatmul.mubr.f32.gmra.mrb[0].mxu0 %v1903
    %v1971 = vpop.f32.mrb[0].mxu0
    %v1972 = vadd.f32 0.0, %v1971
    %v1973 = vpop.f32.mrb[0].mxu0
    %1974 = vdwg.mxu0
    %v1976 = vrot.slane %v1972, 1
    %v1979 = vadd.f32 %v1899, %v1972
    %v1980 = vadd.f32 %v1900, %v1976
    %v1981 = vtanh.pop %v1979
    %v1982 = vtanh.pop %v1980
    %v1983 = vxor.u32 %v1979, 2147483648
    %v1984 = vxor.u32 %v1980, 2147483648
    %v1985 = vmul.f32 %v1983, 1.442695
    %v1986 = vpow.pop %v1985
    %v1987 = vmul.f32 %v1984, 1.442695
    %v1988 = vpow.pop %v1987
    %v1989 = vadd.f32 %v1986, 1.0
    %v1990 = vadd.f32 %v1988, 1.0
    %v1991 = vrcp.pop %v1989
    %v1992 = vmul.f32 1.0, %v1991
    %v1993 = vrcp.pop %v1990
    %v1994 = vmul.f32 1.0, %v1993
    %v1997 = vrot.slane %v1982, 7
    %v1998 = vsel %vm267, %v1997, %v1981
    %v2002 = vrot.slane %v1994, 7
    %v2003 = vsel %vm267, %v2002, %v1992
    %v2005 = vsel %vm68, %v1998, %v2003
    %v2006 = vmul.f32 %v2005, %v1853
    %2008 = vrot.lane.b32.xlu0 %v2005, 64
    %v2009 = vpop.permute.xlu0 %2008
    %v2011 = vmul.f32 %v2005, %v2009
    %2013 = vrot.lane.b32.xlu0 %v2011, 32
    %v2014 = vpop.permute.xlu0 %2013
    %v2016 = vadd.f32 %v2006, %v2014
    %v2017 = vtanh.pop %v2016
    %2019 = vrot.lane.b32.xlu0 %v2017, 64
    %v2020 = vpop.permute.xlu0 %2019
    %v2022 = vmul.f32 %v2005, %v2020
    %v2025 = vunpack.c.l.s4 1966171168
    %v2026 = vunpack.c.0.s8 %v2025
    %v2027 = vlaneseq
    %v2028 = vshrl.u32 %v2027, 7
    %v2029 = vsub.s32 %v2026, %v2028
    %v2030 = vrot.slane %v2022, %v2029
    %v2031 = vcombine.high %v2030, %v2030
    %v2033 = vunpack.c.l.s4 1966171168
    %v2034 = vunpack.c.0.s8 %v2033
    %v2035 = vlaneseq
    %v2036 = vshrl.u32 %v2035, 7
    %v2037 = vsub.s32 %v2034, %v2036
    %v2038 = vrot.slane %v2030, %v2037
    %v2040 = vunpack.c.l.s4 1966171168
    %v2041 = vunpack.c.0.s8 %v2040
    %v2042 = vlaneseq
    %v2043 = vshrl.u32 %v2042, 7
    %v2044 = vsub.s32 %v2041, %v2043
    %v2045 = vrot.slane %v2031, %v2044
    %v2046 = vlaneseq
    %v2047 = vshrl.u32 %v2046, 7
    %v2048 = vsub.s32 0, %v2047
    %v2049 = vrot.slane %v2038, %v2048
    %v2050 = vlaneseq
    %v2051 = vshrl.u32 %v2050, 7
    %v2052 = vsub.s32 0, %v2051
    %v2053 = vrot.slane %v2045, %v2052
    %2054 = vrot.lane.b32.xlu0 %v2049, 32
    %v2055 = vpop.permute.xlu0 %2054
    %2056 = vrot.lane.b32.xlu0 %v2053, 32
    %v2057 = vpop.permute.xlu0 %2056
    %2060 = vst.msk [vmem:[#allocation2 + $0x2] sm:$0x1] %vm330, %v2055
    %2061 = vst.msk [vmem:[#allocation2 + $0xa] sm:$0x1] %vm330, %v2057
    %v2062 = vld [vmem:[#allocation3 + $0x3] sm:$0x1]
    %v2063 = vld [vmem:[#allocation3 + $0xb] sm:$0x1]
    %2064 = vrot.lane.b32.xlu0 %v2022, 32
    %v2065 = vpop.permute.xlu0 %2064
    %v2066 = vsel %vm61, %v2065, 0
    %2068 = vmatprep.subr.mxu0 0.0
    %2069 = vmatpush1.msra.mxu0 %v1480
    %2070 = vmatprep.subr.mxu0 0.0
    %2071 = vmatpush1.msra.mxu0 %v1481
    %2072 = vmatprep.subr.mxu0 0.0
    %2073 = vmatpush1.msra.mxu0 %v1482
    %2074 = vmatprep.subr.mxu0 0.0
    %2075 = vmatpush1.msra.mxu0 %v1483
    %2076 = vmatprep.subr.mxu0 0.0
    %2077 = vmatpush1.msra.mxu0 0.0
    %2078 = vmatprep.subr.mxu0 0.0
    %2079 = vmatpush1.msra.mxu0 0.0
    %2080 = vmatprep.subr.mxu0 0.0
    %2081 = vmatpush1.msra.mxu0 0.0
    %2082 = vmatprep.subr.mxu0 0.0
    %2083 = vmatpush1.msra.mxu0 0.0
    %2084 = vmatprep.subr.mxu0 0.0
    %2085 = vmatpush1.msra.mxu0 0.0
    %2086 = vmatprep.subr.mxu0 0.0
    %2087 = vmatpush1.msra.mxu0 0.0
    %2088 = vmatprep.subr.mxu0 0.0
    %2089 = vmatpush1.msra.mxu0 0.0
    %2090 = vmatprep.subr.mxu0 0.0
    %2091 = vmatpush1.msra.mxu0 0.0
    %2092 = vmatprep.subr.mxu0 0.0
    %2093 = vmatpush1.msra.mxu0 0.0
    %2094 = vmatprep.subr.mxu0 0.0
    %2095 = vmatpush1.msra.mxu0 0.0
    %2096 = vmatprep.subr.mxu0 0.0
    %2097 = vmatpush1.msra.mxu0 0.0
    %2098 = vmatprep.subr.mxu0 0.0
    %2099 = vmatpush1.msra.mxu0 0.0
    %2100 = vmatprep.subr.mxu0 0.0
    %2101 = vmatpush1.msra.mxu0 0.0
    %2102 = vmatprep.subr.mxu0 0.0
    %2103 = vmatpush1.msra.mxu0 0.0
    %2104 = vmatprep.subr.mxu0 0.0
    %2105 = vmatpush1.msra.mxu0 0.0
    %2106 = vmatprep.subr.mxu0 0.0
    %2107 = vmatpush1.msra.mxu0 0.0
    %2108 = vmatprep.subr.mxu0 0.0
    %2109 = vmatpush1.msra.mxu0 0.0
    %2110 = vmatprep.subr.mxu0 0.0
    %2111 = vmatpush1.msra.mxu0 0.0
    %2112 = vmatprep.subr.mxu0 0.0
    %2113 = vmatpush1.msra.mxu0 0.0
    %2114 = vmatprep.subr.mxu0 0.0
    %2115 = vmatpush1.msra.mxu0 0.0
    %2116 = vmatprep.subr.mxu0 0.0
    %2117 = vmatpush1.msra.mxu0 0.0
    %2118 = vmatprep.subr.mxu0 0.0
    %2119 = vmatpush1.msra.mxu0 0.0
    %2120 = vmatprep.subr.mxu0 0.0
    %2121 = vmatpush1.msra.mxu0 0.0
    %2122 = vmatprep.subr.mxu0 0.0
    %2123 = vmatpush1.msra.mxu0 0.0
    %2124 = vmatprep.subr.mxu0 0.0
    %2125 = vmatpush1.msra.mxu0 0.0
    %2126 = vmatprep.subr.mxu0 0.0
    %2127 = vmatpush1.msra.mxu0 0.0
    %2128 = vmatprep.subr.mxu0 0.0
    %2129 = vmatpush1.msra.mxu0 0.0
    %2130 = vmatprep.subr.mxu0 0.0
    %2131 = vmatpush1.msra.mxu0 0.0
    %2132 = vmatprep.mubr.f32.mxu0 0.0
    %2133 = vmatmul.mubr.f32.gmra.mrb[0].mxu0 %v2066
    %v2134 = vpop.f32.mrb[0].mxu0
    %v2135 = vadd.f32 0.0, %v2134
    %v2136 = vpop.f32.mrb[0].mxu0
    %2137 = vdwg.mxu0
    %v2139 = vrot.slane %v2135, 1
    %v2142 = vadd.f32 %v2062, %v2135
    %v2143 = vadd.f32 %v2063, %v2139
    %v2144 = vtanh.pop %v2142
    %v2145 = vtanh.pop %v2143
    %v2146 = vxor.u32 %v2142, 2147483648
    %v2147 = vxor.u32 %v2143, 2147483648
    %v2148 = vmul.f32 %v2146, 1.442695
    %v2149 = vpow.pop %v2148
    %v2150 = vmul.f32 %v2147, 1.442695
    %v2151 = vpow.pop %v2150
    %v2152 = vadd.f32 %v2149, 1.0
    %v2153 = vadd.f32 %v2151, 1.0
    %v2154 = vrcp.pop %v2152
    %v2155 = vmul.f32 1.0, %v2154
    %v2156 = vrcp.pop %v2153
    %v2157 = vmul.f32 1.0, %v2156
    %v2160 = vrot.slane %v2145, 7
    %v2161 = vsel %vm267, %v2160, %v2144
    %v2165 = vrot.slane %v2157, 7
    %v2166 = vsel %vm267, %v2165, %v2155
    %v2168 = vsel %vm68, %v2161, %v2166
    %v2169 = vmul.f32 %v2168, %v2016
    %2171 = vrot.lane.b32.xlu0 %v2168, 64
    %v2172 = vpop.permute.xlu0 %2171
    %v2174 = vmul.f32 %v2168, %v2172
    %2176 = vrot.lane.b32.xlu0 %v2174, 32
    %v2177 = vpop.permute.xlu0 %2176
    %v2179 = vadd.f32 %v2169, %v2177
    %v2180 = vtanh.pop %v2179
    %2182 = vrot.lane.b32.xlu0 %v2180, 64
    %v2183 = vpop.permute.xlu0 %2182
    %v2185 = vmul.f32 %v2168, %v2183
    %v2188 = vunpack.c.l.s4 1966171168
    %v2189 = vunpack.c.0.s8 %v2188
    %v2190 = vlaneseq
    %v2191 = vshrl.u32 %v2190, 7
    %v2192 = vsub.s32 %v2189, %v2191
    %v2193 = vrot.slane %v2185, %v2192
    %v2194 = vcombine.high %v2193, %v2193
    %v2196 = vunpack.c.l.s4 1966171168
    %v2197 = vunpack.c.0.s8 %v2196
    %v2198 = vlaneseq
    %v2199 = vshrl.u32 %v2198, 7
    %v2200 = vsub.s32 %v2197, %v2199
    %v2201 = vrot.slane %v2193, %v2200
    %v2203 = vunpack.c.l.s4 1966171168
    %v2204 = vunpack.c.0.s8 %v2203
    %v2205 = vlaneseq
    %v2206 = vshrl.u32 %v2205, 7
    %v2207 = vsub.s32 %v2204, %v2206
    %v2208 = vrot.slane %v2194, %v2207
    %v2209 = vlaneseq
    %v2210 = vshrl.u32 %v2209, 7
    %v2211 = vsub.s32 0, %v2210
    %v2212 = vrot.slane %v2201, %v2211
    %v2213 = vlaneseq
    %v2214 = vshrl.u32 %v2213, 7
    %v2215 = vsub.s32 0, %v2214
    %v2216 = vrot.slane %v2208, %v2215
    %2217 = vrot.lane.b32.xlu0 %v2212, 32
    %v2218 = vpop.permute.xlu0 %2217
    %2219 = vrot.lane.b32.xlu0 %v2216, 32
    %v2220 = vpop.permute.xlu0 %2219
    %2223 = vst.msk [vmem:[#allocation2 + $0x3] sm:$0x1] %vm330, %v2218
    %2224 = vst.msk [vmem:[#allocation2 + $0xb] sm:$0x1] %vm330, %v2220
    %v2225 = vld [vmem:[#allocation3 + $0x4] sm:$0x1]
    %v2226 = vld [vmem:[#allocation3 + $0xc] sm:$0x1]
    %2227 = vrot.lane.b32.xlu0 %v2185, 32
    %v2228 = vpop.permute.xlu0 %2227
    %v2229 = vsel %vm61, %v2228, 0
    %2231 = vmatprep.subr.mxu0 0.0
    %2232 = vmatpush1.msra.mxu0 %v1480
    %2233 = vmatprep.subr.mxu0 0.0
    %2234 = vmatpush1.msra.mxu0 %v1481
    %2235 = vmatprep.subr.mxu0 0.0
    %2236 = vmatpush1.msra.mxu0 %v1482
    %2237 = vmatprep.subr.mxu0 0.0
    %2238 = vmatpush1.msra.mxu0 %v1483
    %2239 = vmatprep.subr.mxu0 0.0
    %2240 = vmatpush1.msra.mxu0 0.0
    %2241 = vmatprep.subr.mxu0 0.0
    %2242 = vmatpush1.msra.mxu0 0.0
    %2243 = vmatprep.subr.mxu0 0.0
    %2244 = vmatpush1.msra.mxu0 0.0
    %2245 = vmatprep.subr.mxu0 0.0
    %2246 = vmatpush1.msra.mxu0 0.0
    %2247 = vmatprep.subr.mxu0 0.0
    %2248 = vmatpush1.msra.mxu0 0.0
    %2249 = vmatprep.subr.mxu0 0.0
    %2250 = vmatpush1.msra.mxu0 0.0
    %2251 = vmatprep.subr.mxu0 0.0
    %2252 = vmatpush1.msra.mxu0 0.0
    %2253 = vmatprep.subr.mxu0 0.0
    %2254 = vmatpush1.msra.mxu0 0.0
    %2255 = vmatprep.subr.mxu0 0.0
    %2256 = vmatpush1.msra.mxu0 0.0
    %2257 = vmatprep.subr.mxu0 0.0
    %2258 = vmatpush1.msra.mxu0 0.0
    %2259 = vmatprep.subr.mxu0 0.0
    %2260 = vmatpush1.msra.mxu0 0.0
    %2261 = vmatprep.subr.mxu0 0.0
    %2262 = vmatpush1.msra.mxu0 0.0
    %2263 = vmatprep.subr.mxu0 0.0
    %2264 = vmatpush1.msra.mxu0 0.0
    %2265 = vmatprep.subr.mxu0 0.0
    %2266 = vmatpush1.msra.mxu0 0.0
    %2267 = vmatprep.subr.mxu0 0.0
    %2268 = vmatpush1.msra.mxu0 0.0
    %2269 = vmatprep.subr.mxu0 0.0
    %2270 = vmatpush1.msra.mxu0 0.0
    %2271 = vmatprep.subr.mxu0 0.0
    %2272 = vmatpush1.msra.mxu0 0.0
    %2273 = vmatprep.subr.mxu0 0.0
    %2274 = vmatpush1.msra.mxu0 0.0
    %2275 = vmatprep.subr.mxu0 0.0
    %2276 = vmatpush1.msra.mxu0 0.0
    %2277 = vmatprep.subr.mxu0 0.0
    %2278 = vmatpush1.msra.mxu0 0.0
    %2279 = vmatprep.subr.mxu0 0.0
    %2280 = vmatpush1.msra.mxu0 0.0
    %2281 = vmatprep.subr.mxu0 0.0
    %2282 = vmatpush1.msra.mxu0 0.0
    %2283 = vmatprep.subr.mxu0 0.0
    %2284 = vmatpush1.msra.mxu0 0.0
    %2285 = vmatprep.subr.mxu0 0.0
    %2286 = vmatpush1.msra.mxu0 0.0
    %2287 = vmatprep.subr.mxu0 0.0
    %2288 = vmatpush1.msra.mxu0 0.0
    %2289 = vmatprep.subr.mxu0 0.0
    %2290 = vmatpush1.msra.mxu0 0.0
    %2291 = vmatprep.subr.mxu0 0.0
    %2292 = vmatpush1.msra.mxu0 0.0
    %2293 = vmatprep.subr.mxu0 0.0
    %2294 = vmatpush1.msra.mxu0 0.0
    %2295 = vmatprep.mubr.f32.mxu0 0.0
    %2296 = vmatmul.mubr.f32.gmra.mrb[0].mxu0 %v2229
    %v2297 = vpop.f32.mrb[0].mxu0
    %v2298 = vadd.f32 0.0, %v2297
    %v2299 = vpop.f32.mrb[0].mxu0
    %2300 = vdwg.mxu0
    %v2302 = vrot.slane %v2298, 1
    %v2305 = vadd.f32 %v2225, %v2298
    %v2306 = vadd.f32 %v2226, %v2302
    %v2307 = vtanh.pop %v2305
    %v2308 = vtanh.pop %v2306
    %v2309 = vxor.u32 %v2305, 2147483648
    %v2310 = vxor.u32 %v2306, 2147483648
    %v2311 = vmul.f32 %v2309, 1.442695
    %v2312 = vpow.pop %v2311
    %v2313 = vmul.f32 %v2310, 1.442695
    %v2314 = vpow.pop %v2313
    %v2315 = vadd.f32 %v2312, 1.0
    %v2316 = vadd.f32 %v2314, 1.0
    %v2317 = vrcp.pop %v2315
    %v2318 = vmul.f32 1.0, %v2317
    %v2319 = vrcp.pop %v2316
    %v2320 = vmul.f32 1.0, %v2319
    %v2323 = vrot.slane %v2308, 7
    %v2324 = vsel %vm267, %v2323, %v2307
    %v2328 = vrot.slane %v2320, 7
    %v2329 = vsel %vm267, %v2328, %v2318
    %v2331 = vsel %vm68, %v2324, %v2329
    %v2332 = vmul.f32 %v2331, %v2179
    %2334 = vrot.lane.b32.xlu0 %v2331, 64
    %v2335 = vpop.permute.xlu0 %2334
    %v2337 = vmul.f32 %v2331, %v2335
    %2339 = vrot.lane.b32.xlu0 %v2337, 32
    %v2340 = vpop.permute.xlu0 %2339
    %v2342 = vadd.f32 %v2332, %v2340
    %v2343 = vtanh.pop %v2342
    %2345 = vrot.lane.b32.xlu0 %v2343, 64
    %v2346 = vpop.permute.xlu0 %2345
    %v2348 = vmul.f32 %v2331, %v2346
    %v2351 = vunpack.c.l.s4 1966171168
    %v2352 = vunpack.c.0.s8 %v2351
    %v2353 = vlaneseq
    %v2354 = vshrl.u32 %v2353, 7
    %v2355 = vsub.s32 %v2352, %v2354
    %v2356 = vrot.slane %v2348, %v2355
    %v2357 = vcombine.high %v2356, %v2356
    %v2359 = vunpack.c.l.s4 1966171168
    %v2360 = vunpack.c.0.s8 %v2359
    %v2361 = vlaneseq
    %v2362 = vshrl.u32 %v2361, 7
    %v2363 = vsub.s32 %v2360, %v2362
    %v2364 = vrot.slane %v2356, %v2363
    %v2366 = vunpack.c.l.s4 1966171168
    %v2367 = vunpack.c.0.s8 %v2366
    %v2368 = vlaneseq
    %v2369 = vshrl.u32 %v2368, 7
    %v2370 = vsub.s32 %v2367, %v2369
    %v2371 = vrot.slane %v2357, %v2370
    %v2372 = vlaneseq
    %v2373 = vshrl.u32 %v2372, 7
    %v2374 = vsub.s32 0, %v2373
    %v2375 = vrot.slane %v2364, %v2374
    %v2376 = vlaneseq
    %v2377 = vshrl.u32 %v2376, 7
    %v2378 = vsub.s32 0, %v2377
    %v2379 = vrot.slane %v2371, %v2378
    %2380 = vrot.lane.b32.xlu0 %v2375, 32
    %v2381 = vpop.permute.xlu0 %2380
    %2382 = vrot.lane.b32.xlu0 %v2379, 32
    %v2383 = vpop.permute.xlu0 %2382
    %2386 = vst.msk [vmem:[#allocation2 + $0x4] sm:$0x1] %vm330, %v2381
    %2387 = vst.msk [vmem:[#allocation2 + $0xc] sm:$0x1] %vm330, %v2383
    %v2388 = vld [vmem:[#allocation3 + $0x5] sm:$0x1]
    %v2389 = vld [vmem:[#allocation3 + $0xd] sm:$0x1]
    %2390 = vrot.lane.b32.xlu0 %v2348, 32
    %v2391 = vpop.permute.xlu0 %2390
    %v2392 = vsel %vm61, %v2391, 0
    %2394 = vmatprep.subr.mxu0 0.0
    %2395 = vmatpush1.msra.mxu0 %v1480
    %2396 = vmatprep.subr.mxu0 0.0
    %2397 = vmatpush1.msra.mxu0 %v1481
    %2398 = vmatprep.subr.mxu0 0.0
    %2399 = vmatpush1.msra.mxu0 %v1482
    %2400 = vmatprep.subr.mxu0 0.0
    %2401 = vmatpush1.msra.mxu0 %v1483
    %2402 = vmatprep.subr.mxu0 0.0
    %2403 = vmatpush1.msra.mxu0 0.0
    %2404 = vmatprep.subr.mxu0 0.0
    %2405 = vmatpush1.msra.mxu0 0.0
    %2406 = vmatprep.subr.mxu0 0.0
    %2407 = vmatpush1.msra.mxu0 0.0
    %2408 = vmatprep.subr.mxu0 0.0
    %2409 = vmatpush1.msra.mxu0 0.0
    %2410 = vmatprep.subr.mxu0 0.0
    %2411 = vmatpush1.msra.mxu0 0.0
    %2412 = vmatprep.subr.mxu0 0.0
    %2413 = vmatpush1.msra.mxu0 0.0
    %2414 = vmatprep.subr.mxu0 0.0
    %2415 = vmatpush1.msra.mxu0 0.0
    %2416 = vmatprep.subr.mxu0 0.0
    %2417 = vmatpush1.msra.mxu0 0.0
    %2418 = vmatprep.subr.mxu0 0.0
    %2419 = vmatpush1.msra.mxu0 0.0
    %2420 = vmatprep.subr.mxu0 0.0
    %2421 = vmatpush1.msra.mxu0 0.0
    %2422 = vmatprep.subr.mxu0 0.0
    %2423 = vmatpush1.msra.mxu0 0.0
    %2424 = vmatprep.subr.mxu0 0.0
    %2425 = vmatpush1.msra.mxu0 0.0
    %2426 = vmatprep.subr.mxu0 0.0
    %2427 = vmatpush1.msra.mxu0 0.0
    %2428 = vmatprep.subr.mxu0 0.0
    %2429 = vmatpush1.msra.mxu0 0.0
    %2430 = vmatprep.subr.mxu0 0.0
    %2431 = vmatpush1.msra.mxu0 0.0
    %2432 = vmatprep.subr.mxu0 0.0
    %2433 = vmatpush1.msra.mxu0 0.0
    %2434 = vmatprep.subr.mxu0 0.0
    %2435 = vmatpush1.msra.mxu0 0.0
    %2436 = vmatprep.subr.mxu0 0.0
    %2437 = vmatpush1.msra.mxu0 0.0
    %2438 = vmatprep.subr.mxu0 0.0
    %2439 = vmatpush1.msra.mxu0 0.0
    %2440 = vmatprep.subr.mxu0 0.0
    %2441 = vmatpush1.msra.mxu0 0.0
    %2442 = vmatprep.subr.mxu0 0.0
    %2443 = vmatpush1.msra.mxu0 0.0
    %2444 = vmatprep.subr.mxu0 0.0
    %2445 = vmatpush1.msra.mxu0 0.0
    %2446 = vmatprep.subr.mxu0 0.0
    %2447 = vmatpush1.msra.mxu0 0.0
    %2448 = vmatprep.subr.mxu0 0.0
    %2449 = vmatpush1.msra.mxu0 0.0
    %2450 = vmatprep.subr.mxu0 0.0
    %2451 = vmatpush1.msra.mxu0 0.0
    %2452 = vmatprep.subr.mxu0 0.0
    %2453 = vmatpush1.msra.mxu0 0.0
    %2454 = vmatprep.subr.mxu0 0.0
    %2455 = vmatpush1.msra.mxu0 0.0
    %2456 = vmatprep.subr.mxu0 0.0
    %2457 = vmatpush1.msra.mxu0 0.0
    %2458 = vmatprep.mubr.f32.mxu0 0.0
    %2459 = vmatmul.mubr.f32.gmra.mrb[0].mxu0 %v2392
    %v2460 = vpop.f32.mrb[0].mxu0
    %v2461 = vadd.f32 0.0, %v2460
    %v2462 = vpop.f32.mrb[0].mxu0
    %2463 = vdwg.mxu0
    %v2465 = vrot.slane %v2461, 1
    %v2468 = vadd.f32 %v2388, %v2461
    %v2469 = vadd.f32 %v2389, %v2465
    %v2470 = vtanh.pop %v2468
    %v2471 = vtanh.pop %v2469
    %v2472 = vxor.u32 %v2468, 2147483648
    %v2473 = vxor.u32 %v2469, 2147483648
    %v2474 = vmul.f32 %v2472, 1.442695
    %v2475 = vpow.pop %v2474
    %v2476 = vmul.f32 %v2473, 1.442695
    %v2477 = vpow.pop %v2476
    %v2478 = vadd.f32 %v2475, 1.0
    %v2479 = vadd.f32 %v2477, 1.0
    %v2480 = vrcp.pop %v2478
    %v2481 = vmul.f32 1.0, %v2480
    %v2482 = vrcp.pop %v2479
    %v2483 = vmul.f32 1.0, %v2482
    %v2486 = vrot.slane %v2471, 7
    %v2487 = vsel %vm267, %v2486, %v2470
    %v2491 = vrot.slane %v2483, 7
    %v2492 = vsel %vm267, %v2491, %v2481
    %v2494 = vsel %vm68, %v2487, %v2492
    %v2495 = vmul.f32 %v2494, %v2342
    %2497 = vrot.lane.b32.xlu0 %v2494, 64
    %v2498 = vpop.permute.xlu0 %2497
    %v2500 = vmul.f32 %v2494, %v2498
    %2502 = vrot.lane.b32.xlu0 %v2500, 32
    %v2503 = vpop.permute.xlu0 %2502
    %v2505 = vadd.f32 %v2495, %v2503
    %v2506 = vtanh.pop %v2505
    %2508 = vrot.lane.b32.xlu0 %v2506, 64
    %v2509 = vpop.permute.xlu0 %2508
    %v2511 = vmul.f32 %v2494, %v2509
    %v2514 = vunpack.c.l.s4 1966171168
    %v2515 = vunpack.c.0.s8 %v2514
    %v2516 = vlaneseq
    %v2517 = vshrl.u32 %v2516, 7
    %v2518 = vsub.s32 %v2515, %v2517
    %v2519 = vrot.slane %v2511, %v2518
    %v2520 = vcombine.high %v2519, %v2519
    %v2522 = vunpack.c.l.s4 1966171168
    %v2523 = vunpack.c.0.s8 %v2522
    %v2524 = vlaneseq
    %v2525 = vshrl.u32 %v2524, 7
    %v2526 = vsub.s32 %v2523, %v2525
    %v2527 = vrot.slane %v2519, %v2526
    %v2529 = vunpack.c.l.s4 1966171168
    %v2530 = vunpack.c.0.s8 %v2529
    %v2531 = vlaneseq
    %v2532 = vshrl.u32 %v2531, 7
    %v2533 = vsub.s32 %v2530, %v2532
    %v2534 = vrot.slane %v2520, %v2533
    %v2535 = vlaneseq
    %v2536 = vshrl.u32 %v2535, 7
    %v2537 = vsub.s32 0, %v2536
    %v2538 = vrot.slane %v2527, %v2537
    %v2539 = vlaneseq
    %v2540 = vshrl.u32 %v2539, 7
    %v2541 = vsub.s32 0, %v2540
    %v2542 = vrot.slane %v2534, %v2541
    %2543 = vrot.lane.b32.xlu0 %v2538, 32
    %v2544 = vpop.permute.xlu0 %2543
    %2545 = vrot.lane.b32.xlu0 %v2542, 32
    %v2546 = vpop.permute.xlu0 %2545
    %2549 = vst.msk [vmem:[#allocation2 + $0x5] sm:$0x1] %vm330, %v2544
    %2550 = vst.msk [vmem:[#allocation2 + $0xd] sm:$0x1] %vm330, %v2546
    %v2551 = vld [vmem:[#allocation3 + $0x6] sm:$0x1]
    %v2552 = vld [vmem:[#allocation3 + $0xe] sm:$0x1]
    %2553 = vrot.lane.b32.xlu0 %v2511, 32
    %v2554 = vpop.permute.xlu0 %2553
    %v2555 = vsel %vm61, %v2554, 0
    %2557 = vmatprep.subr.mxu0 0.0
    %2558 = vmatpush1.msra.mxu0 %v1480
    %2559 = vmatprep.subr.mxu0 0.0
    %2560 = vmatpush1.msra.mxu0 %v1481
    %2561 = vmatprep.subr.mxu0 0.0
    %2562 = vmatpush1.msra.mxu0 %v1482
    %2563 = vmatprep.subr.mxu0 0.0
    %2564 = vmatpush1.msra.mxu0 %v1483
    %2565 = vmatprep.subr.mxu0 0.0
    %2566 = vmatpush1.msra.mxu0 0.0
    %2567 = vmatprep.subr.mxu0 0.0
    %2568 = vmatpush1.msra.mxu0 0.0
    %2569 = vmatprep.subr.mxu0 0.0
    %2570 = vmatpush1.msra.mxu0 0.0
    %2571 = vmatprep.subr.mxu0 0.0
    %2572 = vmatpush1.msra.mxu0 0.0
    %2573 = vmatprep.subr.mxu0 0.0
    %2574 = vmatpush1.msra.mxu0 0.0
    %2575 = vmatprep.subr.mxu0 0.0
    %2576 = vmatpush1.msra.mxu0 0.0
    %2577 = vmatprep.subr.mxu0 0.0
    %2578 = vmatpush1.msra.mxu0 0.0
    %2579 = vmatprep.subr.mxu0 0.0
    %2580 = vmatpush1.msra.mxu0 0.0
    %2581 = vmatprep.subr.mxu0 0.0
    %2582 = vmatpush1.msra.mxu0 0.0
    %2583 = vmatprep.subr.mxu0 0.0
    %2584 = vmatpush1.msra.mxu0 0.0
    %2585 = vmatprep.subr.mxu0 0.0
    %2586 = vmatpush1.msra.mxu0 0.0
    %2587 = vmatprep.subr.mxu0 0.0
    %2588 = vmatpush1.msra.mxu0 0.0
    %2589 = vmatprep.subr.mxu0 0.0
    %2590 = vmatpush1.msra.mxu0 0.0
    %2591 = vmatprep.subr.mxu0 0.0
    %2592 = vmatpush1.msra.mxu0 0.0
    %2593 = vmatprep.subr.mxu0 0.0
    %2594 = vmatpush1.msra.mxu0 0.0
    %2595 = vmatprep.subr.mxu0 0.0
    %2596 = vmatpush1.msra.mxu0 0.0
    %2597 = vmatprep.subr.mxu0 0.0
    %2598 = vmatpush1.msra.mxu0 0.0
    %2599 = vmatprep.subr.mxu0 0.0
    %2600 = vmatpush1.msra.mxu0 0.0
    %2601 = vmatprep.subr.mxu0 0.0
    %2602 = vmatpush1.msra.mxu0 0.0
    %2603 = vmatprep.subr.mxu0 0.0
    %2604 = vmatpush1.msra.mxu0 0.0
    %2605 = vmatprep.subr.mxu0 0.0
    %2606 = vmatpush1.msra.mxu0 0.0
    %2607 = vmatprep.subr.mxu0 0.0
    %2608 = vmatpush1.msra.mxu0 0.0
    %2609 = vmatprep.subr.mxu0 0.0
    %2610 = vmatpush1.msra.mxu0 0.0
    %2611 = vmatprep.subr.mxu0 0.0
    %2612 = vmatpush1.msra.mxu0 0.0
    %2613 = vmatprep.subr.mxu0 0.0
    %2614 = vmatpush1.msra.mxu0 0.0
    %2615 = vmatprep.subr.mxu0 0.0
    %2616 = vmatpush1.msra.mxu0 0.0
    %2617 = vmatprep.subr.mxu0 0.0
    %2618 = vmatpush1.msra.mxu0 0.0
    %2619 = vmatprep.subr.mxu0 0.0
    %2620 = vmatpush1.msra.mxu0 0.0
    %2621 = vmatprep.mubr.f32.mxu0 0.0
    %2622 = vmatmul.mubr.f32.gmra.mrb[0].mxu0 %v2555
    %v2623 = vpop.f32.mrb[0].mxu0
    %v2624 = vadd.f32 0.0, %v2623
    %v2625 = vpop.f32.mrb[0].mxu0
    %2626 = vdwg.mxu0
    %v2628 = vrot.slane %v2624, 1
    %v2631 = vadd.f32 %v2551, %v2624
    %v2632 = vadd.f32 %v2552, %v2628
    %v2633 = vtanh.pop %v2631
    %v2634 = vtanh.pop %v2632
    %v2635 = vxor.u32 %v2631, 2147483648
    %v2636 = vxor.u32 %v2632, 2147483648
    %v2637 = vmul.f32 %v2635, 1.442695
    %v2638 = vpow.pop %v2637
    %v2639 = vmul.f32 %v2636, 1.442695
    %v2640 = vpow.pop %v2639
    %v2641 = vadd.f32 %v2638, 1.0
    %v2642 = vadd.f32 %v2640, 1.0
    %v2643 = vrcp.pop %v2641
    %v2644 = vmul.f32 1.0, %v2643
    %v2645 = vrcp.pop %v2642
    %v2646 = vmul.f32 1.0, %v2645
    %v2649 = vrot.slane %v2634, 7
    %v2650 = vsel %vm267, %v2649, %v2633
    %v2654 = vrot.slane %v2646, 7
    %v2655 = vsel %vm267, %v2654, %v2644
    %v2657 = vsel %vm68, %v2650, %v2655
    %v2658 = vmul.f32 %v2657, %v2505
    %2660 = vrot.lane.b32.xlu0 %v2657, 64
    %v2661 = vpop.permute.xlu0 %2660
    %v2663 = vmul.f32 %v2657, %v2661
    %2665 = vrot.lane.b32.xlu0 %v2663, 32
    %v2666 = vpop.permute.xlu0 %2665
    %v2668 = vadd.f32 %v2658, %v2666
    %v2669 = vtanh.pop %v2668
    %2671 = vrot.lane.b32.xlu0 %v2669, 64
    %v2672 = vpop.permute.xlu0 %2671
    %v2674 = vmul.f32 %v2657, %v2672
    %v2677 = vunpack.c.l.s4 1966171168
    %v2678 = vunpack.c.0.s8 %v2677
    %v2679 = vlaneseq
    %v2680 = vshrl.u32 %v2679, 7
    %v2681 = vsub.s32 %v2678, %v2680
    %v2682 = vrot.slane %v2674, %v2681
    %v2683 = vcombine.high %v2682, %v2682
    %v2685 = vunpack.c.l.s4 1966171168
    %v2686 = vunpack.c.0.s8 %v2685
    %v2687 = vlaneseq
    %v2688 = vshrl.u32 %v2687, 7
    %v2689 = vsub.s32 %v2686, %v2688
    %v2690 = vrot.slane %v2682, %v2689
    %v2692 = vunpack.c.l.s4 1966171168
    %v2693 = vunpack.c.0.s8 %v2692
    %v2694 = vlaneseq
    %v2695 = vshrl.u32 %v2694, 7
    %v2696 = vsub.s32 %v2693, %v2695
    %v2697 = vrot.slane %v2683, %v2696
    %v2698 = vlaneseq
    %v2699 = vshrl.u32 %v2698, 7
    %v2700 = vsub.s32 0, %v2699
    %v2701 = vrot.slane %v2690, %v2700
    %v2702 = vlaneseq
    %v2703 = vshrl.u32 %v2702, 7
    %v2704 = vsub.s32 0, %v2703
    %v2705 = vrot.slane %v2697, %v2704
    %2706 = vrot.lane.b32.xlu0 %v2701, 32
    %v2707 = vpop.permute.xlu0 %2706
    %2708 = vrot.lane.b32.xlu0 %v2705, 32
    %v2709 = vpop.permute.xlu0 %2708
    %2712 = vst.msk [vmem:[#allocation2 + $0x6] sm:$0x1] %vm330, %v2707
    %2713 = vst.msk [vmem:[#allocation2 + $0xe] sm:$0x1] %vm330, %v2709
    %v2714 = vld [vmem:[#allocation3 + $0x7] sm:$0x1]
    %v2715 = vld [vmem:[#allocation3 + $0xf] sm:$0x1]
    %2716 = vrot.lane.b32.xlu0 %v2674, 32
    %v2717 = vpop.permute.xlu0 %2716
    %v2718 = vsel %vm61, %v2717, 0
    %2720 = vmatprep.subr.mxu0 0.0
    %2721 = vmatpush1.msra.mxu0 %v1480
    %2722 = vmatprep.subr.mxu0 0.0
    %2723 = vmatpush1.msra.mxu0 %v1481
    %2724 = vmatprep.subr.mxu0 0.0
    %2725 = vmatpush1.msra.mxu0 %v1482
    %2726 = vmatprep.subr.mxu0 0.0
    %2727 = vmatpush1.msra.mxu0 %v1483
    %2728 = vmatprep.subr.mxu0 0.0
    %2729 = vmatpush1.msra.mxu0 0.0
    %2730 = vmatprep.subr.mxu0 0.0
    %2731 = vmatpush1.msra.mxu0 0.0
    %2732 = vmatprep.subr.mxu0 0.0
    %2733 = vmatpush1.msra.mxu0 0.0
    %2734 = vmatprep.subr.mxu0 0.0
    %2735 = vmatpush1.msra.mxu0 0.0
    %2736 = vmatprep.subr.mxu0 0.0
    %2737 = vmatpush1.msra.mxu0 0.0
    %2738 = vmatprep.subr.mxu0 0.0
    %2739 = vmatpush1.msra.mxu0 0.0
    %2740 = vmatprep.subr.mxu0 0.0
    %2741 = vmatpush1.msra.mxu0 0.0
    %2742 = vmatprep.subr.mxu0 0.0
    %2743 = vmatpush1.msra.mxu0 0.0
    %2744 = vmatprep.subr.mxu0 0.0
    %2745 = vmatpush1.msra.mxu0 0.0
    %2746 = vmatprep.subr.mxu0 0.0
    %2747 = vmatpush1.msra.mxu0 0.0
    %2748 = vmatprep.subr.mxu0 0.0
    %2749 = vmatpush1.msra.mxu0 0.0
    %2750 = vmatprep.subr.mxu0 0.0
    %2751 = vmatpush1.msra.mxu0 0.0
    %2752 = vmatprep.subr.mxu0 0.0
    %2753 = vmatpush1.msra.mxu0 0.0
    %2754 = vmatprep.subr.mxu0 0.0
    %2755 = vmatpush1.msra.mxu0 0.0
    %2756 = vmatprep.subr.mxu0 0.0
    %2757 = vmatpush1.msra.mxu0 0.0
    %2758 = vmatprep.subr.mxu0 0.0
    %2759 = vmatpush1.msra.mxu0 0.0
    %2760 = vmatprep.subr.mxu0 0.0
    %2761 = vmatpush1.msra.mxu0 0.0
    %2762 = vmatprep.subr.mxu0 0.0
    %2763 = vmatpush1.msra.mxu0 0.0
    %2764 = vmatprep.subr.mxu0 0.0
    %2765 = vmatpush1.msra.mxu0 0.0
    %2766 = vmatprep.subr.mxu0 0.0
    %2767 = vmatpush1.msra.mxu0 0.0
    %2768 = vmatprep.subr.mxu0 0.0
    %2769 = vmatpush1.msra.mxu0 0.0
    %2770 = vmatprep.subr.mxu0 0.0
    %2771 = vmatpush1.msra.mxu0 0.0
    %2772 = vmatprep.subr.mxu0 0.0
    %2773 = vmatpush1.msra.mxu0 0.0
    %2774 = vmatprep.subr.mxu0 0.0
    %2775 = vmatpush1.msra.mxu0 0.0
    %2776 = vmatprep.subr.mxu0 0.0
    %2777 = vmatpush1.msra.mxu0 0.0
    %2778 = vmatprep.subr.mxu0 0.0
    %2779 = vmatpush1.msra.mxu0 0.0
    %2780 = vmatprep.subr.mxu0 0.0
    %2781 = vmatpush1.msra.mxu0 0.0
    %2782 = vmatprep.subr.mxu0 0.0
    %2783 = vmatpush1.msra.mxu0 0.0
    %2784 = vmatprep.mubr.f32.mxu0 0.0
    %2785 = vmatmul.mubr.f32.gmra.mrb[0].mxu0 %v2718
    %v2786 = vpop.f32.mrb[0].mxu0
    %v2787 = vadd.f32 0.0, %v2786
    %v2788 = vpop.f32.mrb[0].mxu0
    %2789 = vdwg.mxu0
    %v2791 = vrot.slane %v2787, 1
    %v2794 = vadd.f32 %v2714, %v2787
    %v2795 = vadd.f32 %v2715, %v2791
    %v2796 = vtanh.pop %v2794
    %v2797 = vtanh.pop %v2795
    %v2798 = vxor.u32 %v2794, 2147483648
    %v2799 = vxor.u32 %v2795, 2147483648
    %v2800 = vmul.f32 %v2798, 1.442695
    %v2801 = vpow.pop %v2800
    %v2802 = vmul.f32 %v2799, 1.442695
    %v2803 = vpow.pop %v2802
    %v2804 = vadd.f32 %v2801, 1.0
    %v2805 = vadd.f32 %v2803, 1.0
    %v2806 = vrcp.pop %v2804
    %v2807 = vmul.f32 1.0, %v2806
    %v2808 = vrcp.pop %v2805
    %v2809 = vmul.f32 1.0, %v2808
    %v2812 = vrot.slane %v2797, 7
    %v2813 = vsel %vm267, %v2812, %v2796
    %v2817 = vrot.slane %v2809, 7
    %v2818 = vsel %vm267, %v2817, %v2807
    %v2820 = vsel %vm68, %v2813, %v2818
    %v2821 = vmul.f32 %v2820, %v2668
    %2823 = vrot.lane.b32.xlu0 %v2820, 64
    %v2824 = vpop.permute.xlu0 %2823
    %v2826 = vmul.f32 %v2820, %v2824
    %2828 = vrot.lane.b32.xlu0 %v2826, 32
    %v2829 = vpop.permute.xlu0 %2828
    %v2831 = vadd.f32 %v2821, %v2829
    %v2832 = vtanh.pop %v2831
    %2834 = vrot.lane.b32.xlu0 %v2832, 64
    %v2835 = vpop.permute.xlu0 %2834
    %v2837 = vmul.f32 %v2820, %v2835
    %v2840 = vunpack.c.l.s4 1966171168
    %v2841 = vunpack.c.0.s8 %v2840
    %v2842 = vlaneseq
    %v2843 = vshrl.u32 %v2842, 7
    %v2844 = vsub.s32 %v2841, %v2843
    %v2845 = vrot.slane %v2837, %v2844
    %v2846 = vcombine.high %v2845, %v2845
    %v2848 = vunpack.c.l.s4 1966171168
    %v2849 = vunpack.c.0.s8 %v2848
    %v2850 = vlaneseq
    %v2851 = vshrl.u32 %v2850, 7
    %v2852 = vsub.s32 %v2849, %v2851
    %v2853 = vrot.slane %v2845, %v2852
    %v2855 = vunpack.c.l.s4 1966171168
    %v2856 = vunpack.c.0.s8 %v2855
    %v2857 = vlaneseq
    %v2858 = vshrl.u32 %v2857, 7
    %v2859 = vsub.s32 %v2856, %v2858
    %v2860 = vrot.slane %v2846, %v2859
    %v2861 = vlaneseq
    %v2862 = vshrl.u32 %v2861, 7
    %v2863 = vsub.s32 0, %v2862
    %v2864 = vrot.slane %v2853, %v2863
    %v2865 = vlaneseq
    %v2866 = vshrl.u32 %v2865, 7
    %v2867 = vsub.s32 0, %v2866
    %v2868 = vrot.slane %v2860, %v2867
    %2869 = vrot.lane.b32.xlu0 %v2864, 32
    %v2870 = vpop.permute.xlu0 %2869
    %2871 = vrot.lane.b32.xlu0 %v2868, 32
    %v2872 = vpop.permute.xlu0 %2871
    %2875 = vst.msk [vmem:[#allocation2 + $0x7] sm:$0x1] %vm330, %v2870
    %2876 = vst.msk [vmem:[#allocation2 + $0xf] sm:$0x1] %vm330, %v2872
    %v2877 = vld [vmem:[#allocation2] sm:$0xff]
    %v2878 = vld [vmem:[#allocation2 + $0x8] sm:$0xff]
    %2879 = vst.msk [vmem:[#allocation10] sm:$0xff] %vm61, %v2877
    %2880 = vst.msk [vmem:[#allocation10 + $0x8] sm:$0xff] %vm61, %v2878
    // Predicated region
    $region30: #{tpu_custom_call.1} parent=1 // pred_check
      _
    $region31: #{tpu_custom_call.1} parent=1 // pred_check_branch
      %2882 = sbr.rel (0) target = $region33
    $region32: #{tpu_custom_call.1} parent=1 // pred_region
      %s2884 = ssub.s32 256, 256
      %2885 = vsyncadd [#allocation6], %s2884
      %s2886 = sshll.u32 [#allocation10], 4
      %s2887 = int_to_ptr.vmem [resolvable:$true] %s2886
      %2892 = dma.vmem_to_hbm [thread:$0]  %s2887, 256, %s4, [#allocation6], 128, 128, 8
    $region33: #{tpu_custom_call.1} parent=1 // pred_fallthru
      _
    // Predicated region
    $region34: #{tpu_custom_call.1} parent=1 // pred_check
      _
    $region35: #{tpu_custom_call.1} parent=1 // pred_check_branch
      %2894 = sbr.rel (0) target = $region37
    $region36: #{tpu_custom_call.1} parent=1 // pred_region
      %2895 = dma.done [#allocation6], 256
    $region37: #{tpu_custom_call.1} parent=1 // pred_fallthru
      _
    %2896 = vsyncpa [#allocation5], 1
    %2897 = vsyncpa [#allocation8], 1
    %2898 = vsyncpa [#allocation6], 1

</llo_original>
